<compile_context>
chip_gen: v6e
topology: v6e:2x2x1
jax: 0.10.0
libtpu: 0.0.40
codegen_flags: <defaults>
</compile_context>

<pallas_src>
import functools

import jax
import jax.numpy as jnp
from jax.experimental import pallas as pl
from jax.experimental.pallas import tpu as pltpu

EPS = 1e-5

# MXU operand dtype (f32 accumulation via preferred_element_type).
MXU_DTYPE = jnp.bfloat16
# HBM dtype of the inter-phase activations (conv outputs, pre-BN).
ACT_DTYPE = jnp.bfloat16


# ----------------------------------------------------------------------------------
# shared in-kernel helpers (value ops only, no refs)
# ----------------------------------------------------------------------------------
def _im2col_3x3(x):
    """(1, H, W, C) -> (H*W, 9*C) patch slab for a 3x3 / padding=1 convolution."""
    _, H, W, C = x.shape
    zr = jnp.zeros((1, 1, W, C), x.dtype)
    xp = jnp.concatenate([zr, x, zr], axis=1)           # (1, H+2, W,   C)
    zc = jnp.zeros((1, H + 2, 1, C), x.dtype)
    xp = jnp.concatenate([zc, xp, zc], axis=2)          # (1, H+2, W+2, C)
    taps = [xp[:, dy:dy + H, dx:dx + W, :] for dy in range(3) for dx in range(3)]
    return jnp.concatenate(taps, axis=-1).reshape(H * W, 9 * C)
    # TODO(synk): for C >= ~64 switch to shift-and-accumulate (nine K=C matmuls into a
    # single f32 accumulator) so the 9x patch slab never materializes in VMEM.


def _col_stats(y):
    """Per-channel [sum ; sum-of-squares] of a (rows, C) f32 matrix -> (2, C)."""
    return jnp.concatenate(
        [jnp.sum(y, axis=0, keepdims=True),
         jnp.sum(y * y, axis=0, keepdims=True)], axis=0)


# ----------------------------------------------------------------------------------
# phase 1: maxpool(2) + conv1 (single im2col matmul) -> dense bf16 act + f32 stats
# ----------------------------------------------------------------------------------
def _pool_conv1_kernel(x_ref, w_ref, h1_ref, s1_ref, *, Cout):
    _, H, W, Cin = x_ref.shape
    H2, W2 = H // 2, W // 2
    x = x_ref[...]                                              # native dtype
    x = jnp.max(x.reshape(1, H, W2, 2, Cin), axis=3)
    pooled = jnp.max(x.reshape(1, H2, 2, W2, Cin), axis=2)      # (1, H2, W2, Cin)
    mat = _im2col_3x3(pooled).astype(MXU_DTYPE)                 # (P, 9*Cin) bf16
    y = jnp.dot(mat, w_ref[...], preferred_element_type=jnp.float32)   # (P, Cp) f32
    s1_ref[0] = _col_stats(y)                                   # f32 partial stats
    # Dense (un-padded) writeback in the NHWC layout phase 2 consumes directly.
    h1_ref[0] = y[:, :Cout].reshape(H2, W2, Cout).astype(h1_ref.dtype)


# ----------------------------------------------------------------------------------
# phase 2: BN1 (precomputed scale/shift) + ReLU + conv2 -> dense bf16 act + f32 stats
# ----------------------------------------------------------------------------------
def _bn1_conv2_kernel(h1_ref, aff1_ref, w_ref, y2_ref, s2_ref, *, Cout):
    _, H2, W2, _ = h1_ref.shape
    scale = aff1_ref[0:1, :]                                    # (1, Cout) f32
    shift = aff1_ref[1:2, :]
    h = jnp.maximum(h1_ref[0].astype(jnp.float32) * scale + shift, 0.0)
    mat = _im2col_3x3(h[None]).astype(MXU_DTYPE)                # (P, 9*Cout) bf16
    y = jnp.dot(mat, w_ref[...], preferred_element_type=jnp.float32)   # (P, Cp) f32
    s2_ref[0] = _col_stats(y)
    y2_ref[0] = y[:, :Cout].astype(y2_ref.dtype)                # dense (P, Cout)


# ----------------------------------------------------------------------------------
# wrapper-side BN affine (hoisted out of the grid; tiny XLA reduce + rsqrt)
# ----------------------------------------------------------------------------------
def _bn_scale_shift(stats, gamma, beta, count, Cout):
    s = jnp.sum(stats, axis=0)[:, :Cout]                        # (2, Cout) f32
    mean = s[0] * (1.0 / count)
    var = jnp.maximum(s[1] * (1.0 / count) - mean * mean, 0.0)  # clamp >= 0
    scale = gamma.astype(jnp.float32) * jax.lax.rsqrt(var + EPS)
    shift = beta.astype(jnp.float32) - mean * scale
    return scale, shift


# ----------------------------------------------------------------------------------
# wrapper: PyTorch-style NCHW in / NCHW out
# ----------------------------------------------------------------------------------
@jax.jit
def down_pallas(x_nchw, w1, b1, g1, be1, w2, b2, g2, be2):
    N, Cin, H, W = x_nchw.shape
    # TODO(synk): odd spatial sizes (PyTorch MaxPool2d(2) floors) are not handled.
    assert H % 2 == 0 and W % 2 == 0, "H and W must be even"
    Cout = w1.shape[0]
    H2, W2 = H // 2, W // 2
    P = H2 * W2
    Cp = ((Cout + 127) // 128) * 128        # MXU output width padded to 128 lanes
    count = float(N * P)                    # BN reduction count over (N, H2, W2)

    # Conv biases are a per-channel constant added immediately before training-mode
    # BatchNorm -> exactly cancelled by the mean subtraction.  (Re-add them if this
    # block is ever run in eval mode with running statistics.)
    del b1, b2

    # glue: NCHW -> NHWC (keep incoming dtype; no forced f32 upcast before the DMA).
    # TODO(synk): in a full UNet keep activations NHWC end-to-end to drop both transposes.
    x_nhwc = jnp.transpose(x_nchw, (0, 2, 3, 1))

    # OIHW -> (9*Cin, Cp) bf16 im2col weight matrices, column-padded to Cp lanes
    # (padded columns are zero, so padded MXU output channels and their stats are zero).
    w1p = jnp.zeros((9 * Cin, Cp), MXU_DTYPE).at[:, :Cout].set(
        jnp.transpose(w1, (2, 3, 1, 0)).reshape(9 * Cin, Cout).astype(MXU_DTYPE))
    w2p = jnp.zeros((9 * Cout, Cp), MXU_DTYPE).at[:, :Cout].set(
        jnp.transpose(w2, (2, 3, 1, 0)).reshape(9 * Cout, Cout).astype(MXU_DTYPE))

    # TODO(synk): at production shapes add a spatial ("arbitrary") grid axis with a
    #   one-pooled-row halo for phases 1/2 so per-step VMEM stays bounded on v7x
    #   (64 MiB), and set vmem_limit_bytes explicitly (v5e scoped default is 16 MiB).
    par = pltpu.CompilerParams(dimension_semantics=("parallel",))

    def resident(shape):
        # whole array resident every grid step (weights, scale/shift vectors)
        return pl.BlockSpec(shape, lambda n: (0,) * len(shape))

    # --- phase 1: maxpool + conv1 ---------------------------------------------------
    h1, s1 = pl.pallas_call(
        functools.partial(_pool_conv1_kernel, Cout=Cout),
        grid=(N,),
        in_specs=[pl.BlockSpec((1, H, W, Cin), lambda n: (n, 0, 0, 0)),
                  resident((9 * Cin, Cp))],
        out_specs=[pl.BlockSpec((1, H2, W2, Cout), lambda n: (n, 0, 0, 0)),
                   pl.BlockSpec((1, 2, Cp), lambda n: (n, 0, 0))],
        out_shape=[jax.ShapeDtypeStruct((N, H2, W2, Cout), ACT_DTYPE),
                   jax.ShapeDtypeStruct((N, 2, Cp), jnp.float32)],
        compiler_params=par,
    )(x_nhwc, w1p)

    # BN1 affine hoisted out of the grid: one tiny reduce over N, then a (2, Cout)
    # scale/shift vector is passed to phase 2 instead of the full stats slab.
    scale1, shift1 = _bn_scale_shift(s1, g1, be1, count, Cout)
    aff1 = jnp.stack([scale1, shift1], axis=0)                  # (2, Cout) f32

    # --- phase 2: BN1 + ReLU + conv2 ------------------------------------------------
    y2, s2 = pl.pallas_call(
        functools.partial(_bn1_conv2_kernel, Cout=Cout),
        grid=(N,),
        in_specs=[pl.BlockSpec((1, H2, W2, Cout), lambda n: (n, 0, 0, 0)),
                  resident((2, Cout)),
                  resident((9 * Cout, Cp))],
        out_specs=[pl.BlockSpec((1, P, Cout), lambda n: (n, 0, 0)),
                   pl.BlockSpec((1, 2, Cp), lambda n: (n, 0, 0))],
        out_shape=[jax.ShapeDtypeStruct((N, P, Cout), ACT_DTYPE),
                   jax.ShapeDtypeStruct((N, 2, Cp), jnp.float32)],
        compiler_params=par,
    )(h1, aff1, w2p)

    # --- epilogue (former phase 3), fused by XLA: BN2 + ReLU + reshape + transpose ---
    scale2, shift2 = _bn_scale_shift(s2, g2, be2, count, Cout)
    out = jnp.maximum(y2.astype(jnp.float32) * scale2 + shift2, 0.0)    # (N, P, Cout)
    out = out.reshape(N, H2, W2, Cout)
    return jnp.transpose(out, (0, 3, 1, 2)).astype(x_nchw.dtype)


# ----------------------------------------------------------------------------------
# pure-JAX reference (NCHW, f32), mirrors PyTorch Down.forward in training mode
# ----------------------------------------------------------------------------------
def ref_down(x, w1, b1, g1, be1, w2, b2, g2, be2):
    N, C, H, W = x.shape
    xp = x.reshape(N, C, H // 2, 2, W // 2, 2).max(axis=(3, 5))

    def block(y, w, b, g, be):
        y = jax.lax.conv_general_dilated(
            y, w, window_strides=(1, 1), padding=((1, 1), (1, 1)),
            dimension_numbers=("NCHW", "OIHW", "NCHW"))
        y = y + b[None, :, None, None]
        mean = y.mean(axis=(0, 2, 3), keepdims=True)
        var = ((y - mean) ** 2).mean(axis=(0, 2, 3), keepdims=True)
        y = (y - mean) * jax.lax.rsqrt(var + EPS)
        y = y * g[None, :, None, None] + be[None, :, None, None]
        return jnp.maximum(y, 0.0)

    return block(block(xp, w1, b1, g1, be1), w2, b2, g2, be2)


if __name__ == "__main__":
    N, Cin, Cout, S = 2, 4, 8, 16

    key = jax.random.PRNGKey(0)
    kx, kw1, kb1, kw2, kb2 = jax.random.split(key, 5)
    x = jax.random.normal(kx, (N, Cin, S, S), jnp.float32)

    # deterministic synthetic parameters (shapes from the module __init__)
    w1 = 0.2 * jax.random.normal(kw1, (Cout, Cin, 3, 3), jnp.float32)
    b1 = 0.1 * jax.random.normal(kb1, (Cout,), jnp.float32)
    g1 = jnp.ones((Cout,), jnp.float32)     # BatchNorm2d default gamma
    be1 = jnp.zeros((Cout,), jnp.float32)   # BatchNorm2d default beta
    w2 = 0.2 * jax.random.normal(kw2, (Cout, Cout, 3, 3), jnp.float32)
    b2 = 0.1 * jax.random.normal(kb2, (Cout,), jnp.float32)
    g2 = jnp.ones((Cout,), jnp.float32)
    be2 = jnp.zeros((Cout,), jnp.float32)

    out = down_pallas(x, w1, b1, g1, be1, w2, b2, g2, be2)
    out = jax.block_until_ready(out)

    ref = jax.block_until_ready(ref_down(x, w1, b1, g1, be1, w2, b2, g2, be2))
    assert out.shape == (N, Cout, S // 2, S // 2), out.shape
    # Tolerance sized for the bf16 MXU-operand + bf16 inter-phase activation path
    # (two chained 3x3 convs); typical |err| is a few 1e-3 after BN normalization.
    assert bool(jnp.allclose(out, ref, rtol=1e-2, atol=3e-2)), "mismatch vs reference"

    print("KERNEL_OK")
</pallas_src>

<mosaic_0001>
module attributes {stable_mosaic.version = 11 : i64} {
  func.func @_pool_conv1_kernel(%arg0: i32, %arg1: memref<1x16x16x4xf32, #tpu.memory_space<vmem>>, %arg2: memref<36x128xbf16, #tpu.memory_space<vmem>>, %arg3: memref<1x8x8x8xbf16, #tpu.memory_space<vmem>>, %arg4: memref<1x2x128xf32, #tpu.memory_space<vmem>>) attributes {dimension_semantics = [#tpu.dimension_semantics<parallel>], iteration_bounds = array<i64: 2>, scalar_prefetch = 0 : i64, scratch_operands = 0 : i64, tpu.core_type = #tpu.core_type<tc>, window_params = [{transform_indices = @transform_0, window_bounds = array<i64: 1, 16, 16, 4>}, {pipeline_mode = #tpu.pipeline_mode<synchronous>, transform_indices = @transform_1, window_bounds = array<i64: 36, 128>}, {transform_indices = @transform_2, window_bounds = array<i64: 1, 8, 8, 8>}, {transform_indices = @transform_3, window_bounds = array<i64: 1, 2, 128>}]} {
    %c0 = arith.constant 0 : index
    %c0_0 = arith.constant 0 : index
    %c0_1 = arith.constant 0 : index
    %c0_2 = arith.constant 0 : index
    %0 = vector.load %arg1[%c0, %c0_0, %c0_1, %c0_2] : memref<1x16x16x4xf32, #tpu.memory_space<vmem>>, vector<1x16x16x4xf32>
    %1 = vector.shape_cast %0 : vector<1x16x16x4xf32> to vector<1x16x8x2x4xf32>
    %cst = arith.constant dense<0xFF800000> : vector<1x16x8x4xf32>
    %2 = vector.multi_reduction <maximumf>, %1, %cst [3] : vector<1x16x8x2x4xf32> to vector<1x16x8x4xf32>
    %3 = vector.shape_cast %2 : vector<1x16x8x4xf32> to vector<1x8x2x8x4xf32>
    %cst_3 = arith.constant dense<0xFF800000> : vector<1x8x8x4xf32>
    %4 = vector.multi_reduction <maximumf>, %3, %cst_3 [2] : vector<1x8x2x8x4xf32> to vector<1x8x8x4xf32>
    %cst_4 = arith.constant 0.000000e+00 : f32
    %5 = vector.broadcast %cst_4 : f32 to vector<1x1x8x4xf32>
    %6 = tpu.concatenate %5, %4, %5 in 1 : vector<1x1x8x4xf32>, vector<1x8x8x4xf32>, vector<1x1x8x4xf32> -> vector<1x10x8x4xf32>
    %cst_5 = arith.constant 0.000000e+00 : f32
    %7 = vector.broadcast %cst_5 : f32 to vector<1x10x1x4xf32>
    %8 = tpu.concatenate %7, %6, %7 in 2 : vector<1x10x1x4xf32>, vector<1x10x8x4xf32>, vector<1x10x1x4xf32> -> vector<1x10x10x4xf32>
    %9 = vector.extract_strided_slice %8 {offsets = [0, 0, 0, 0], sizes = [1, 8, 8, 4], strides = [1, 1, 1, 1]} : vector<1x10x10x4xf32> to vector<1x8x8x4xf32>
    %10 = vector.extract_strided_slice %8 {offsets = [0, 0, 1, 0], sizes = [1, 8, 8, 4], strides = [1, 1, 1, 1]} : vector<1x10x10x4xf32> to vector<1x8x8x4xf32>
    %11 = vector.extract_strided_slice %8 {offsets = [0, 0, 2, 0], sizes = [1, 8, 8, 4], strides = [1, 1, 1, 1]} : vector<1x10x10x4xf32> to vector<1x8x8x4xf32>
    %12 = vector.extract_strided_slice %8 {offsets = [0, 1, 0, 0], sizes = [1, 8, 8, 4], strides = [1, 1, 1, 1]} : vector<1x10x10x4xf32> to vector<1x8x8x4xf32>
    %13 = vector.extract_strided_slice %8 {offsets = [0, 1, 1, 0], sizes = [1, 8, 8, 4], strides = [1, 1, 1, 1]} : vector<1x10x10x4xf32> to vector<1x8x8x4xf32>
    %14 = vector.extract_strided_slice %8 {offsets = [0, 1, 2, 0], sizes = [1, 8, 8, 4], strides = [1, 1, 1, 1]} : vector<1x10x10x4xf32> to vector<1x8x8x4xf32>
    %15 = vector.extract_strided_slice %8 {offsets = [0, 2, 0, 0], sizes = [1, 8, 8, 4], strides = [1, 1, 1, 1]} : vector<1x10x10x4xf32> to vector<1x8x8x4xf32>
    %16 = vector.extract_strided_slice %8 {offsets = [0, 2, 1, 0], sizes = [1, 8, 8, 4], strides = [1, 1, 1, 1]} : vector<1x10x10x4xf32> to vector<1x8x8x4xf32>
    %17 = vector.extract_strided_slice %8 {offsets = [0, 2, 2, 0], sizes = [1, 8, 8, 4], strides = [1, 1, 1, 1]} : vector<1x10x10x4xf32> to vector<1x8x8x4xf32>
    %18 = tpu.concatenate %9, %10, %11, %12, %13, %14, %15, %16, %17 in 3 : vector<1x8x8x4xf32>, vector<1x8x8x4xf32>, vector<1x8x8x4xf32>, vector<1x8x8x4xf32>, vector<1x8x8x4xf32>, vector<1x8x8x4xf32>, vector<1x8x8x4xf32>, vector<1x8x8x4xf32>, vector<1x8x8x4xf32> -> vector<1x8x8x36xf32>
    %19 = vector.shape_cast %18 : vector<1x8x8x36xf32> to vector<64x36xf32>
    %20 = arith.truncf %19 : vector<64x36xf32> to vector<64x36xbf16>
    %c0_6 = arith.constant 0 : index
    %c0_7 = arith.constant 0 : index
    %21 = vector.load %arg2[%c0_6, %c0_7] : memref<36x128xbf16, #tpu.memory_space<vmem>>, vector<36x128xbf16>
    %cst_8 = arith.constant dense<0.000000e+00> : vector<64x128xf32>
    %22 = tpu.matmul %20, %21, %cst_8 {dimension_numbers = #tpu.dot_dimension_numbers<[1], [0], [0], [1], [0, 0, 1, 1], [], []>} : vector<64x36xbf16>, vector<36x128xbf16>, vector<64x128xf32> -> vector<64x128xf32>
    %cst_9 = arith.constant dense<0.000000e+00> : vector<128xf32>
    %23 = vector.multi_reduction <add>, %22, %cst_9 [0] : vector<64x128xf32> to vector<128xf32>
    %24 = vector.shape_cast %23 : vector<128xf32> to vector<1x128xf32>
    %25 = arith.mulf %22, %22 : vector<64x128xf32>
    %cst_10 = arith.constant dense<0.000000e+00> : vector<128xf32>
    %26 = vector.multi_reduction <add>, %25, %cst_10 [0] : vector<64x128xf32> to vector<128xf32>
    %27 = vector.shape_cast %26 : vector<128xf32> to vector<1x128xf32>
    %28 = tpu.concatenate %24, %27 in 0 : vector<1x128xf32>, vector<1x128xf32> -> vector<2x128xf32>
    %c0_11 = arith.constant 0 : index
    %c0_12 = arith.constant 0 : index
    %c0_13 = arith.constant 0 : index
    %29 = vector.load %arg4[%c0_11, %c0_12, %c0_13] : memref<1x2x128xf32, #tpu.memory_space<vmem>>, vector<1x2x128xf32>
    %30 = vector.shape_cast %29 : vector<1x2x128xf32> to vector<2x128xf32>
    %31 = vector.shape_cast %28 : vector<2x128xf32> to vector<1x2x128xf32>
    tpu.vector_store %arg4[%c0_11, %c0_12, %c0_13], %31 {strides = array<i32>} : memref<1x2x128xf32, #tpu.memory_space<vmem>>, vector<1x2x128xf32>,
    %32 = vector.extract_strided_slice %22 {offsets = [0, 0], sizes = [64, 8], strides = [1, 1]} : vector<64x128xf32> to vector<64x8xf32>
    %33 = vector.shape_cast %32 : vector<64x8xf32> to vector<8x8x8xf32>
    %34 = arith.truncf %33 : vector<8x8x8xf32> to vector<8x8x8xbf16>
    %c0_14 = arith.constant 0 : index
    %c0_15 = arith.constant 0 : index
    %c0_16 = arith.constant 0 : index
    %c0_17 = arith.constant 0 : index
    %35 = vector.load %arg3[%c0_14, %c0_15, %c0_16, %c0_17] : memref<1x8x8x8xbf16, #tpu.memory_space<vmem>>, vector<1x8x8x8xbf16>
    %36 = vector.shape_cast %35 : vector<1x8x8x8xbf16> to vector<8x8x8xbf16>
    %37 = vector.shape_cast %34 : vector<8x8x8xbf16> to vector<1x8x8x8xbf16>
    tpu.vector_store %arg3[%c0_14, %c0_15, %c0_16, %c0_17], %37 {strides = array<i32>} : memref<1x8x8x8xbf16, #tpu.memory_space<vmem>>, vector<1x8x8x8xbf16>,
    return
  }
  func.func @transform_0(%arg0: i32) -> (i32, i32, i32, i32) {
    %c0_i32 = arith.constant 0 : i32
    %c0_i32_0 = arith.constant 0 : i32
    %c0_i32_1 = arith.constant 0 : i32
    %c0_i32_2 = arith.constant 0 : i32
    return %arg0, %c0_i32, %c0_i32_0, %c0_i32_1 : i32, i32, i32, i32
  }
  func.func @transform_1(%arg0: i32) -> (i32, i32) {
    %c0_i32 = arith.constant 0 : i32
    %c0_i32_0 = arith.constant 0 : i32
    %c0_i32_1 = arith.constant 0 : i32
    return %c0_i32, %c0_i32_0 : i32, i32
  }
  func.func @transform_2(%arg0: i32) -> (i32, i32, i32, i32) {
    %c0_i32 = arith.constant 0 : i32
    %c0_i32_0 = arith.constant 0 : i32
    %c0_i32_1 = arith.constant 0 : i32
    %c0_i32_2 = arith.constant 0 : i32
    return %arg0, %c0_i32, %c0_i32_0, %c0_i32_1 : i32, i32, i32, i32
  }
  func.func @transform_3(%arg0: i32) -> (i32, i32, i32) {
    %c0_i32 = arith.constant 0 : i32
    %c0_i32_0 = arith.constant 0 : i32
    %c0_i32_1 = arith.constant 0 : i32
    return %arg0, %c0_i32, %c0_i32_0 : i32, i32, i32
  }
}

module attributes {stable_mosaic.version = 11 : i64} {
  func.func @_bn1_conv2_kernel(%arg0: i32, %arg1: memref<1x8x8x8xbf16, #tpu.memory_space<vmem>>, %arg2: memref<2x8xf32, #tpu.memory_space<vmem>>, %arg3: memref<72x128xbf16, #tpu.memory_space<vmem>>, %arg4: memref<1x64x8xbf16, #tpu.memory_space<vmem>>, %arg5: memref<1x2x128xf32, #tpu.memory_space<vmem>>) attributes {dimension_semantics = [#tpu.dimension_semantics<parallel>], iteration_bounds = array<i64: 2>, scalar_prefetch = 0 : i64, scratch_operands = 0 : i64, tpu.core_type = #tpu.core_type<tc>, window_params = [{transform_indices = @transform_0, window_bounds = array<i64: 1, 8, 8, 8>}, {pipeline_mode = #tpu.pipeline_mode<synchronous>, transform_indices = @transform_1, window_bounds = array<i64: 2, 8>}, {pipeline_mode = #tpu.pipeline_mode<synchronous>, transform_indices = @transform_2, window_bounds = array<i64: 72, 128>}, {transform_indices = @transform_3, window_bounds = array<i64: 1, 64, 8>}, {transform_indices = @transform_4, window_bounds = array<i64: 1, 2, 128>}]} {
    %c0 = arith.constant 0 : index
    %c0_0 = arith.constant 0 : index
    %0 = vector.load %arg2[%c0, %c0_0] : memref<2x8xf32, #tpu.memory_space<vmem>>, vector<1x8xf32>
    %c1 = arith.constant 1 : index
    %c0_1 = arith.constant 0 : index
    %1 = vector.load %arg2[%c1, %c0_1] : memref<2x8xf32, #tpu.memory_space<vmem>>, vector<1x8xf32>
    %c0_2 = arith.constant 0 : index
    %c0_3 = arith.constant 0 : index
    %c0_4 = arith.constant 0 : index
    %c0_5 = arith.constant 0 : index
    %2 = vector.load %arg1[%c0_2, %c0_3, %c0_4, %c0_5] : memref<1x8x8x8xbf16, #tpu.memory_space<vmem>>, vector<1x8x8x8xbf16>
    %3 = vector.shape_cast %2 : vector<1x8x8x8xbf16> to vector<8x8x8xbf16>
    %4 = arith.extf %3 : vector<8x8x8xbf16> to vector<8x8x8xf32>
    %5 = vector.shape_cast %0 : vector<1x8xf32> to vector<1x1x8xf32>
    %6 = vector.broadcast %5 : vector<1x1x8xf32> to vector<8x8x8xf32>
    %7 = arith.mulf %4, %6 : vector<8x8x8xf32>
    %8 = vector.shape_cast %1 : vector<1x8xf32> to vector<1x1x8xf32>
    %9 = vector.broadcast %8 : vector<1x1x8xf32> to vector<8x8x8xf32>
    %10 = arith.addf %7, %9 : vector<8x8x8xf32>
    %cst = arith.constant 0.000000e+00 : f32
    %11 = vector.broadcast %cst : f32 to vector<8x8x8xf32>
    %12 = arith.maximumf %10, %11 : vector<8x8x8xf32>
    %13 = vector.shape_cast %12 : vector<8x8x8xf32> to vector<1x8x8x8xf32>
    %cst_6 = arith.constant 0.000000e+00 : f32
    %14 = vector.broadcast %cst_6 : f32 to vector<1x1x8x8xf32>
    %15 = tpu.concatenate %14, %13, %14 in 1 : vector<1x1x8x8xf32>, vector<1x8x8x8xf32>, vector<1x1x8x8xf32> -> vector<1x10x8x8xf32>
    %cst_7 = arith.constant 0.000000e+00 : f32
    %16 = vector.broadcast %cst_7 : f32 to vector<1x10x1x8xf32>
    %17 = tpu.concatenate %16, %15, %16 in 2 : vector<1x10x1x8xf32>, vector<1x10x8x8xf32>, vector<1x10x1x8xf32> -> vector<1x10x10x8xf32>
    %18 = vector.extract_strided_slice %17 {offsets = [0, 0, 0, 0], sizes = [1, 8, 8, 8], strides = [1, 1, 1, 1]} : vector<1x10x10x8xf32> to vector<1x8x8x8xf32>
    %19 = vector.extract_strided_slice %17 {offsets = [0, 0, 1, 0], sizes = [1, 8, 8, 8], strides = [1, 1, 1, 1]} : vector<1x10x10x8xf32> to vector<1x8x8x8xf32>
    %20 = vector.extract_strided_slice %17 {offsets = [0, 0, 2, 0], sizes = [1, 8, 8, 8], strides = [1, 1, 1, 1]} : vector<1x10x10x8xf32> to vector<1x8x8x8xf32>
    %21 = vector.extract_strided_slice %17 {offsets = [0, 1, 0, 0], sizes = [1, 8, 8, 8], strides = [1, 1, 1, 1]} : vector<1x10x10x8xf32> to vector<1x8x8x8xf32>
    %22 = vector.extract_strided_slice %17 {offsets = [0, 1, 1, 0], sizes = [1, 8, 8, 8], strides = [1, 1, 1, 1]} : vector<1x10x10x8xf32> to vector<1x8x8x8xf32>
    %23 = vector.extract_strided_slice %17 {offsets = [0, 1, 2, 0], sizes = [1, 8, 8, 8], strides = [1, 1, 1, 1]} : vector<1x10x10x8xf32> to vector<1x8x8x8xf32>
    %24 = vector.extract_strided_slice %17 {offsets = [0, 2, 0, 0], sizes = [1, 8, 8, 8], strides = [1, 1, 1, 1]} : vector<1x10x10x8xf32> to vector<1x8x8x8xf32>
    %25 = vector.extract_strided_slice %17 {offsets = [0, 2, 1, 0], sizes = [1, 8, 8, 8], strides = [1, 1, 1, 1]} : vector<1x10x10x8xf32> to vector<1x8x8x8xf32>
    %26 = vector.extract_strided_slice %17 {offsets = [0, 2, 2, 0], sizes = [1, 8, 8, 8], strides = [1, 1, 1, 1]} : vector<1x10x10x8xf32> to vector<1x8x8x8xf32>
    %27 = tpu.concatenate %18, %19, %20, %21, %22, %23, %24, %25, %26 in 3 : vector<1x8x8x8xf32>, vector<1x8x8x8xf32>, vector<1x8x8x8xf32>, vector<1x8x8x8xf32>, vector<1x8x8x8xf32>, vector<1x8x8x8xf32>, vector<1x8x8x8xf32>, vector<1x8x8x8xf32>, vector<1x8x8x8xf32> -> vector<1x8x8x72xf32>
    %28 = vector.shape_cast %27 : vector<1x8x8x72xf32> to vector<64x72xf32>
    %29 = arith.truncf %28 : vector<64x72xf32> to vector<64x72xbf16>
    %c0_8 = arith.constant 0 : index
    %c0_9 = arith.constant 0 : index
    %30 = vector.load %arg3[%c0_8, %c0_9] : memref<72x128xbf16, #tpu.memory_space<vmem>>, vector<72x128xbf16>
    %cst_10 = arith.constant dense<0.000000e+00> : vector<64x128xf32>
    %31 = tpu.matmul %29, %30, %cst_10 {dimension_numbers = #tpu.dot_dimension_numbers<[1], [0], [0], [1], [0, 0, 1, 1], [], []>} : vector<64x72xbf16>, vector<72x128xbf16>, vector<64x128xf32> -> vector<64x128xf32>
    %cst_11 = arith.constant dense<0.000000e+00> : vector<128xf32>
    %32 = vector.multi_reduction <add>, %31, %cst_11 [0] : vector<64x128xf32> to vector<128xf32>
    %33 = vector.shape_cast %32 : vector<128xf32> to vector<1x128xf32>
    %34 = arith.mulf %31, %31 : vector<64x128xf32>
    %cst_12 = arith.constant dense<0.000000e+00> : vector<128xf32>
    %35 = vector.multi_reduction <add>, %34, %cst_12 [0] : vector<64x128xf32> to vector<128xf32>
    %36 = vector.shape_cast %35 : vector<128xf32> to vector<1x128xf32>
    %37 = tpu.concatenate %33, %36 in 0 : vector<1x128xf32>, vector<1x128xf32> -> vector<2x128xf32>
    %c0_13 = arith.constant 0 : index
    %c0_14 = arith.constant 0 : index
    %c0_15 = arith.constant 0 : index
    %38 = vector.load %arg5[%c0_13, %c0_14, %c0_15] : memref<1x2x128xf32, #tpu.memory_space<vmem>>, vector<1x2x128xf32>
    %39 = vector.shape_cast %38 : vector<1x2x128xf32> to vector<2x128xf32>
    %40 = vector.shape_cast %37 : vector<2x128xf32> to vector<1x2x128xf32>
    tpu.vector_store %arg5[%c0_13, %c0_14, %c0_15], %40 {strides = array<i32>} : memref<1x2x128xf32, #tpu.memory_space<vmem>>, vector<1x2x128xf32>,
    %41 = vector.extract_strided_slice %31 {offsets = [0, 0], sizes = [64, 8], strides = [1, 1]} : vector<64x128xf32> to vector<64x8xf32>
    %42 = arith.truncf %41 : vector<64x8xf32> to vector<64x8xbf16>
    %c0_16 = arith.constant 0 : index
    %c0_17 = arith.constant 0 : index
    %c0_18 = arith.constant 0 : index
    %43 = vector.load %arg4[%c0_16, %c0_17, %c0_18] : memref<1x64x8xbf16, #tpu.memory_space<vmem>>, vector<1x64x8xbf16>
    %44 = vector.shape_cast %43 : vector<1x64x8xbf16> to vector<64x8xbf16>
    %45 = vector.shape_cast %42 : vector<64x8xbf16> to vector<1x64x8xbf16>
    tpu.vector_store %arg4[%c0_16, %c0_17, %c0_18], %45 {strides = array<i32>} : memref<1x64x8xbf16, #tpu.memory_space<vmem>>, vector<1x64x8xbf16>,
    return
  }
  func.func @transform_0(%arg0: i32) -> (i32, i32, i32, i32) {
    %c0_i32 = arith.constant 0 : i32
    %c0_i32_0 = arith.constant 0 : i32
    %c0_i32_1 = arith.constant 0 : i32
    %c0_i32_2 = arith.constant 0 : i32
    return %arg0, %c0_i32, %c0_i32_0, %c0_i32_1 : i32, i32, i32, i32
  }
  func.func @transform_1(%arg0: i32) -> (i32, i32) {
    %c0_i32 = arith.constant 0 : i32
    %c0_i32_0 = arith.constant 0 : i32
    %c0_i32_1 = arith.constant 0 : i32
    return %c0_i32, %c0_i32_0 : i32, i32
  }
  func.func @transform_2(%arg0: i32) -> (i32, i32) {
    %c0_i32 = arith.constant 0 : i32
    %c0_i32_0 = arith.constant 0 : i32
    %c0_i32_1 = arith.constant 0 : i32
    return %c0_i32, %c0_i32_0 : i32, i32
  }
  func.func @transform_3(%arg0: i32) -> (i32, i32, i32) {
    %c0_i32 = arith.constant 0 : i32
    %c0_i32_0 = arith.constant 0 : i32
    %c0_i32_1 = arith.constant 0 : i32
    return %arg0, %c0_i32, %c0_i32_0 : i32, i32, i32
  }
  func.func @transform_4(%arg0: i32) -> (i32, i32, i32) {
    %c0_i32 = arith.constant 0 : i32
    %c0_i32_0 = arith.constant 0 : i32
    %c0_i32_1 = arith.constant 0 : i32
    return %arg0, %c0_i32, %c0_i32_0 : i32, i32, i32
  }
}

</mosaic_0001>

<llo_original>
// kernel: down_pallas.3
$region0: #{down_pallas.3}
  #allocation0 [shape = 'u32[]', space=smem, size = 0x4, offset = 0x4, fixed_abs, tag = 'smem constant byte address 0x4 - core index']
  #allocation1 [shape = 'u32[144,128]{1,0:T(1,128)}', space=vmem, size = 0x12000, scoped, tag = 'internal scratch']
  %s0 = inlined_call_operand.vmem [shape: bf16[2,8,8,8], index: 0, kind: input, shape index: {}]
  %s1 = inlined_call_operand.vmem [shape: f32[2,8], index: 1, kind: input, shape index: {}]
  %s2 = inlined_call_operand.vmem [shape: bf16[72,128], index: 2, kind: input, shape index: {}]
  %s3 = inlined_call_operand.vmem [shape: bf16[2,64,8], index: 3, kind: output, shape index: {0}]
  %s4 = inlined_call_operand.vmem [shape: f32[2,2,128], index: 4, kind: output, shape index: {1}]
  %5 = xla_tuple %s3, %s4
  %s6 = sld [smem:[#allocation0]]
  $region53: #{down_pallas.3} parent=0
    _
  %s8 = ssub.s32 1, %s6
  %s9 = scalar_select 0, %s8, %s6
  loop: start=0, step=1, limit=4
  $region2: #{down_pallas.3} parent=0 // loop_pre_header
    _
  $region3: #{down_pallas.3} parent=0 // loop_header
    %s11 = sphi 0, %s15
    %p12 = scmp.ge.s32.totalorder %s11, 4
    %s21 = sphi 0, %s23
    %s24 = sphi 0, %s21
    %s25 = sphi 0, %s24
    %s41 = sphi 0, %s25
    %s45 = sphi 0, %s45
    %s47 = sphi 0, %s45
    %s48 = sphi 0, %s47
    %s62 = sphi 0, %s48
    %s66 = sphi 0, %s66
    %s68 = sphi 0, %s66
    %s69 = sphi 0, %s68
    %s83 = sphi 0, %s69
    %s89 = sphi 0, %s91
    %s92 = sphi 0, %s89
    %s93 = sphi 0, %s92
    %s109 = sphi 0, %s93
    %s115 = sphi 0, %s117
    %s118 = sphi 0, %s115
    %s119 = sphi 0, %s118
    %s135 = sphi 0, %s119
  $region4: #{down_pallas.3} parent=0 // loop_header_branch
    %14 = sbr.rel (%p12) target = $region8
  $region5: #{down_pallas.3} parent=0 // loop_body
    %s16 = ssub.s32 %s11, 1
    %s17 = ssub.s32 %s11, 2
    %s18 = sadd.s32 %s11, 1
    %s19 = ssub.s32 %s11, %s18
    %p20 = scmp.eq.s32.totalorder %s19, 0
    %s22 = sadd.s32 %s21, 1
    %s23 = scalar_select %p20, %s21, %s22
    %p26 = pneg %p20
    %p27 = scmp.eq.s32.totalorder %s11, 1
    %p28 = por %p26, %p27
    %p29 = scmp.ne.s32.totalorder %s21, %s24
    %p30 = scmp.eq.s32.totalorder %s11, 0
    %p31 = por %p29, %p30
    %p32 = scmp.ne.s32.totalorder %s21, %s24
    %p33 = scmp.eq.s32.totalorder %s16, 1
    %p34 = por %p32, %p33
    %p35 = scmp.ne.s32.totalorder %s24, %s25
    %p36 = scmp.eq.s32.totalorder %s16, 0
    %p37 = por %p35, %p36
    %p38 = scmp.ne.s32.totalorder %s24, %s25
    %p39 = scmp.eq.s32.totalorder %s17, 1
    %p40 = por %p38, %p39
    %p42 = scmp.ne.s32.totalorder %s25, %s41
    %p43 = scmp.eq.s32.totalorder %s17, 0
    %p44 = por %p42, %p43
    %s46 = sadd.s32 %s45, 1
    %p49 = scmp.eq.s32.totalorder %s11, 1
    %p50 = scmp.ne.s32.totalorder %s45, %s47
    %p51 = scmp.eq.s32.totalorder %s11, 0
    %p52 = por %p50, %p51
    %p53 = scmp.ne.s32.totalorder %s45, %s47
    %p54 = scmp.eq.s32.totalorder %s16, 1
    %p55 = por %p53, %p54
    %p56 = scmp.ne.s32.totalorder %s47, %s48
    %p57 = scmp.eq.s32.totalorder %s16, 0
    %p58 = por %p56, %p57
    %p59 = scmp.ne.s32.totalorder %s47, %s48
    %p60 = scmp.eq.s32.totalorder %s17, 1
    %p61 = por %p59, %p60
    %p63 = scmp.ne.s32.totalorder %s48, %s62
    %p64 = scmp.eq.s32.totalorder %s17, 0
    %p65 = por %p63, %p64
    %s67 = sadd.s32 %s66, 1
    %p70 = scmp.eq.s32.totalorder %s11, 1
    %p71 = scmp.ne.s32.totalorder %s66, %s68
    %p72 = scmp.eq.s32.totalorder %s11, 0
    %p73 = por %p71, %p72
    %p74 = scmp.ne.s32.totalorder %s66, %s68
    %p75 = scmp.eq.s32.totalorder %s16, 1
    %p76 = por %p74, %p75
    %p77 = scmp.ne.s32.totalorder %s68, %s69
    %p78 = scmp.eq.s32.totalorder %s16, 0
    %p79 = por %p77, %p78
    %p80 = scmp.ne.s32.totalorder %s68, %s69
    %p81 = scmp.eq.s32.totalorder %s17, 1
    %p82 = por %p80, %p81
    %p84 = scmp.ne.s32.totalorder %s69, %s83
    %p85 = scmp.eq.s32.totalorder %s17, 0
    %p86 = por %p84, %p85
    %s87 = ssub.s32 %s11, %s18
    %p88 = scmp.eq.s32.totalorder %s87, 0
    %s90 = sadd.s32 %s89, 1
    %s91 = scalar_select %p88, %s89, %s90
    %p94 = pneg %p88
    %p95 = scmp.eq.s32.totalorder %s11, 1
    %p96 = por %p94, %p95
    %p97 = scmp.ne.s32.totalorder %s89, %s92
    %p98 = scmp.eq.s32.totalorder %s11, 0
    %p99 = por %p97, %p98
    %p100 = scmp.ne.s32.totalorder %s89, %s92
    %p101 = scmp.eq.s32.totalorder %s16, 1
    %p102 = por %p100, %p101
    %p103 = scmp.ne.s32.totalorder %s92, %s93
    %p104 = scmp.eq.s32.totalorder %s16, 0
    %p105 = por %p103, %p104
    %p106 = scmp.ne.s32.totalorder %s92, %s93
    %p107 = scmp.eq.s32.totalorder %s17, 1
    %p108 = por %p106, %p107
    %p110 = scmp.ne.s32.totalorder %s93, %s109
    %p111 = scmp.eq.s32.totalorder %s17, 0
    %p112 = por %p110, %p111
    %s113 = ssub.s32 %s11, %s18
    %p114 = scmp.eq.s32.totalorder %s113, 0
    %s116 = sadd.s32 %s115, 1
    %s117 = scalar_select %p114, %s115, %s116
    %p120 = pneg %p114
    %p121 = scmp.eq.s32.totalorder %s11, 1
    %p122 = por %p120, %p121
    %p123 = scmp.ne.s32.totalorder %s115, %s118
    %p124 = scmp.eq.s32.totalorder %s11, 0
    %p125 = por %p123, %p124
    %p126 = scmp.ne.s32.totalorder %s115, %s118
    %p127 = scmp.eq.s32.totalorder %s16, 1
    %p128 = por %p126, %p127
    %p129 = scmp.ne.s32.totalorder %s118, %s119
    %p130 = scmp.eq.s32.totalorder %s16, 0
    %p131 = por %p129, %p130
    %p132 = scmp.ne.s32.totalorder %s118, %s119
    %p133 = scmp.eq.s32.totalorder %s17, 1
    %p134 = por %p132, %p133
    %p136 = scmp.ne.s32.totalorder %s119, %s135
    %p137 = scmp.eq.s32.totalorder %s17, 0
    %p138 = por %p136, %p137
    %p139 = scmp.le.s32.totalorder 1, %s11
    %p140 = scmp.lt.s32.totalorder %s11, 3
    %p141 = pnand %p139, %p140
    %p142 = pneg %p141
    // Predicated region
    $region9: #{down_pallas.3} parent=5 // pred_check
      _
    $region10: #{down_pallas.3} parent=5 // pred_check_branch
      %144 = sbr.rel (%p141) target = $region12
    $region11: #{down_pallas.3} parent=5 // pred_region
      %s145 = ssub.s32 %s11, 1
      // Predicated region
      $region13: #{down_pallas.3} parent=11 // pred_check
        %p146 = pneg %p58
      $region14: #{down_pallas.3} parent=11 // pred_check_branch
        %148 = sbr.rel (%p146) target = $region16
      $region15: #{down_pallas.3} parent=11 // pred_region
        _
      $region16: #{down_pallas.3} parent=11 // pred_fallthru
        _
      // Predicated region
      $region17: #{down_pallas.3} parent=11 // pred_check
        %p149 = pneg %p79
      $region18: #{down_pallas.3} parent=11 // pred_check_branch
        %151 = sbr.rel (%p149) target = $region20
      $region19: #{down_pallas.3} parent=11 // pred_region
        _
      $region20: #{down_pallas.3} parent=11 // pred_fallthru
        _
    $region12: #{down_pallas.3} parent=5 // pred_fallthru
      _
    %p152 = scmp.lt.s32.totalorder %s11, 2
    // Predicated region
    $region21: #{down_pallas.3} parent=5 // pred_check
      %p153 = pneg %p152
    $region22: #{down_pallas.3} parent=5 // pred_check_branch
      %155 = sbr.rel (%p153) target = $region24
    $region23: #{down_pallas.3} parent=5 // pred_region
      // Predicated region
      $region25: #{down_pallas.3} parent=23 // pred_check
        %p156 = pneg %p31
      $region26: #{down_pallas.3} parent=23 // pred_check_branch
        %158 = sbr.rel (%p156) target = $region28
      $region27: #{down_pallas.3} parent=23 // pred_region
        %p159 = scmp.lt.s32.totalorder %s11, 1
        %s160 = scalar_select %p159, %s11, 1
        %s161 = smul.addr %s160, 8
        %s162 = smul.addr %s161, 4
        %s163 = scalar_lea.vmem %s0, %s162
      $region28: #{down_pallas.3} parent=23 // pred_fallthru
        _
    $region24: #{down_pallas.3} parent=5 // pred_fallthru
      _
    %p164 = scmp.le.s32.totalorder 1, %s11
    %p165 = scmp.lt.s32.totalorder %s11, 3
    %p166 = pnand %p164, %p165
    %p167 = pneg %p166
    // Predicated region
    $region29: #{down_pallas.3} parent=5 // pred_check
      _
    $region30: #{down_pallas.3} parent=5 // pred_check_branch
      %169 = sbr.rel (%p166) target = $region32
    $region31: #{down_pallas.3} parent=5 // pred_region
      %s170 = ssub.s32 %s11, 1
      %p171 = scmp.lt.s32.totalorder %s16, 1
      %s172 = scalar_select %p171, %s16, 1
      %s173 = smul.addr %s172, 8
      %s174 = smul.addr %s173, 4
      %s175 = scalar_lea.vmem %s0, %s174
      %p176 = pneg %p37
      %p177 = pneg %p34
      %p178 = pneg %p58
      %p179 = pneg %p55
      %p180 = pneg %p79
      %p181 = pneg %p76
      %p182 = pneg %p105
      %p183 = pneg %p102
      %p184 = scmp.lt.s32.totalorder %s16, 1
      %s185 = scalar_select %p184, %s16, 1
      %s186 = smul.addr %s185, 8
      %s187 = smul.addr %s186, 4
      %s188 = scalar_lea.vmem %s3, %s187
      %p189 = pneg %p131
      %p190 = pneg %p128
      %p191 = scmp.lt.s32.totalorder %s16, 1
      %s192 = scalar_select %p191, %s16, 1
      %s193 = smul.addr %s192, 2
      %s194 = scalar_lea.vmem %s4, %s193
      %p195 = scmp.lt.s32.totalorder %s16, 1
      %s196 = scalar_select %p195, %s16, 1
      %s197 = smul.addr %s196, 8
      %s198 = smul.addr %s197, 4
      %s199 = scalar_lea.vmem %s0, %s198
      %p200 = scmp.lt.s32.totalorder %s16, 1
      %s201 = scalar_select %p200, %s16, 1
      %s202 = smul.addr %s201, 8
      %s203 = smul.addr %s202, 4
      %s204 = scalar_lea.vmem %s3, %s203
      %p205 = scmp.lt.s32.totalorder %s16, 1
      %s206 = scalar_select %p205, %s16, 1
      %s207 = smul.addr %s206, 2
      %s208 = scalar_lea.vmem %s4, %s207
      %v210 = vld [vmem:[%s1] sm:$0x1]
      %v211 = vld [vmem:[%s1 + $0x1] sm:$0x1]
      %v212 = vld [vmem:[%s199] sm:$0xf]
      %v213 = vld [vmem:[%s199 + $0x4] sm:$0xf]
      %v214 = vld [vmem:[%s199 + $0x8] sm:$0xf]
      %v215 = vld [vmem:[%s199 + $0xc] sm:$0xf]
      %v216 = vld [vmem:[%s199 + $0x10] sm:$0xf]
      %v217 = vld [vmem:[%s199 + $0x14] sm:$0xf]
      %v218 = vld [vmem:[%s199 + $0x18] sm:$0xf]
      %v219 = vld [vmem:[%s199 + $0x1c] sm:$0xf]
      %v220 = vunpack.c.l.bf16 %v212
      %v221 = vunpack.c.l.bf16 %v213
      %v222 = vunpack.c.l.bf16 %v214
      %v223 = vunpack.c.l.bf16 %v215
      %v224 = vunpack.c.l.bf16 %v216
      %v225 = vunpack.c.l.bf16 %v217
      %v226 = vunpack.c.l.bf16 %v218
      %v227 = vunpack.c.l.bf16 %v219
      %v228 = vlaneseq
      %v229 = vshrl.u32 %v228, 7
      %v230 = vsub.s32 0, %v229
      %v231 = vrot.slane %v210, %v230
      %v232 = vmul.f32 %v220, %v231
      %v233 = vmul.f32 %v221, %v231
      %v234 = vmul.f32 %v222, %v231
      %v235 = vmul.f32 %v223, %v231
      %v236 = vmul.f32 %v224, %v231
      %v237 = vmul.f32 %v225, %v231
      %v238 = vmul.f32 %v226, %v231
      %v239 = vmul.f32 %v227, %v231
      %v240 = vlaneseq
      %v241 = vshrl.u32 %v240, 7
      %v242 = vsub.s32 0, %v241
      %v243 = vrot.slane %v211, %v242
      %v244 = vadd.f32 %v232, %v243
      %v245 = vadd.f32 %v233, %v243
      %v246 = vadd.f32 %v234, %v243
      %v247 = vadd.f32 %v235, %v243
      %v248 = vadd.f32 %v236, %v243
      %v249 = vadd.f32 %v237, %v243
      %v250 = vadd.f32 %v238, %v243
      %v251 = vadd.f32 %v239, %v243
      %v252 = vmax.f32 %v244, 0.0
      %v253 = vmax.f32 %v245, 0.0
      %v254 = vmax.f32 %v246, 0.0
      %v255 = vmax.f32 %v247, 0.0
      %v256 = vmax.f32 %v248, 0.0
      %v257 = vmax.f32 %v249, 0.0
      %v258 = vmax.f32 %v250, 0.0
      %v259 = vmax.f32 %v251, 0.0
      %v269 = vrot.slane 0.0, 7
      %v270 = vrot.slane %v252, 7
      %v271 = vrot.slane %v253, 7
      %v272 = vrot.slane %v254, 7
      %v273 = vrot.slane %v255, 7
      %v274 = vrot.slane %v256, 7
      %v275 = vrot.slane %v257, 7
      %v276 = vrot.slane %v258, 7
      %v277 = vrot.slane %v259, 7
      %vm287 = vcmask 1040384
      %v288 = vsel %vm287, 0.0, %v269
      %v289 = vsel %vm287, 0.0, %v270
      %v290 = vsel %vm287, 0.0, %v271
      %v291 = vsel %vm287, 0.0, %v272
      %v292 = vsel %vm287, 0.0, %v273
      %v293 = vsel %vm287, 0.0, %v274
      %v294 = vsel %vm287, 0.0, %v275
      %v295 = vsel %vm287, 0.0, %v276
      %v296 = vsel %vm287, 0.0, %v277
      %v297 = vsel %vm287, %v269, 0.0
      %v298 = vsel %vm287, %v270, 0.0
      %v299 = vsel %vm287, %v271, 0.0
      %v300 = vsel %vm287, %v272, 0.0
      %v301 = vsel %vm287, %v273, 0.0
      %v302 = vsel %vm287, %v274, 0.0
      %v303 = vsel %vm287, %v275, 0.0
      %v304 = vsel %vm287, %v276, 0.0
      %v305 = vsel %vm287, %v277, 0.0
      %vm322 = vcmask 1046528
      %v323 = vrot.slane %v288, 1
      %v324 = vrot.slane %v297, 1
      %v325 = vsel %vm322, %v323, %v324
      %v326 = vrot.slane %v289, 1
      %v327 = vrot.slane %v298, 1
      %v328 = vsel %vm322, %v326, %v327
      %v329 = vrot.slane %v290, 1
      %v330 = vrot.slane %v299, 1
      %v331 = vsel %vm322, %v329, %v330
      %v332 = vrot.slane %v291, 1
      %v333 = vrot.slane %v300, 1
      %v334 = vsel %vm322, %v332, %v333
      %v335 = vrot.slane %v292, 1
      %v336 = vrot.slane %v301, 1
      %v337 = vsel %vm322, %v335, %v336
      %v338 = vrot.slane %v293, 1
      %v339 = vrot.slane %v302, 1
      %v340 = vsel %vm322, %v338, %v339
      %v341 = vrot.slane %v294, 1
      %v342 = vrot.slane %v303, 1
      %v343 = vsel %vm322, %v341, %v342
      %v344 = vrot.slane %v295, 1
      %v345 = vrot.slane %v304, 1
      %v346 = vsel %vm322, %v344, %v345
      %347 = vrot.lane.b32.xlu0 %v325, 8
      %v348 = vpop.permute.xlu0 %347
      %349 = vrot.lane.b32.xlu0 %v328, 8
      %v350 = vpop.permute.xlu0 %349
      %351 = vrot.lane.b32.xlu0 %v331, 8
      %v352 = vpop.permute.xlu0 %351
      %353 = vrot.lane.b32.xlu0 %v334, 8
      %v354 = vpop.permute.xlu0 %353
      %355 = vrot.lane.b32.xlu0 %v337, 8
      %v356 = vpop.permute.xlu0 %355
      %357 = vrot.lane.b32.xlu0 %v340, 8
      %v358 = vpop.permute.xlu0 %357
      %359 = vrot.lane.b32.xlu0 %v343, 8
      %v360 = vpop.permute.xlu0 %359
      %361 = vrot.lane.b32.xlu0 %v346, 8
      %v362 = vpop.permute.xlu0 %361
      %vm371 = vcmask 1045504
      %v372 = vrot.slane %v288, 2
      %v373 = vrot.slane %v297, 2
      %v374 = vsel %vm371, %v372, %v373
      %v375 = vrot.slane %v289, 2
      %v376 = vrot.slane %v298, 2
      %v377 = vsel %vm371, %v375, %v376
      %v378 = vrot.slane %v290, 2
      %v379 = vrot.slane %v299, 2
      %v380 = vsel %vm371, %v378, %v379
      %v381 = vrot.slane %v291, 2
      %v382 = vrot.slane %v300, 2
      %v383 = vsel %vm371, %v381, %v382
      %v384 = vrot.slane %v292, 2
      %v385 = vrot.slane %v301, 2
      %v386 = vsel %vm371, %v384, %v385
      %v387 = vrot.slane %v293, 2
      %v388 = vrot.slane %v302, 2
      %v389 = vsel %vm371, %v387, %v388
      %v390 = vrot.slane %v294, 2
      %v391 = vrot.slane %v303, 2
      %v392 = vsel %vm371, %v390, %v391
      %v393 = vrot.slane %v295, 2
      %v394 = vrot.slane %v304, 2
      %v395 = vsel %vm371, %v393, %v394
      %396 = vrot.lane.b32.xlu0 %v374, 16
      %v397 = vpop.permute.xlu0 %396
      %398 = vrot.lane.b32.xlu0 %v377, 16
      %v399 = vpop.permute.xlu0 %398
      %400 = vrot.lane.b32.xlu0 %v380, 16
      %v401 = vpop.permute.xlu0 %400
      %402 = vrot.lane.b32.xlu0 %v383, 16
      %v403 = vpop.permute.xlu0 %402
      %404 = vrot.lane.b32.xlu0 %v386, 16
      %v405 = vpop.permute.xlu0 %404
      %406 = vrot.lane.b32.xlu0 %v389, 16
      %v407 = vpop.permute.xlu0 %406
      %408 = vrot.lane.b32.xlu0 %v392, 16
      %v409 = vpop.permute.xlu0 %408
      %410 = vrot.lane.b32.xlu0 %v395, 16
      %v411 = vpop.permute.xlu0 %410
      %421 = vrot.lane.b32.xlu0 %v289, 24
      %v422 = vpop.permute.xlu0 %421
      %423 = vrot.lane.b32.xlu0 %v290, 24
      %v424 = vpop.permute.xlu0 %423
      %425 = vrot.lane.b32.xlu0 %v291, 24
      %v426 = vpop.permute.xlu0 %425
      %427 = vrot.lane.b32.xlu0 %v292, 24
      %v428 = vpop.permute.xlu0 %427
      %429 = vrot.lane.b32.xlu0 %v293, 24
      %v430 = vpop.permute.xlu0 %429
      %431 = vrot.lane.b32.xlu0 %v294, 24
      %v432 = vpop.permute.xlu0 %431
      %433 = vrot.lane.b32.xlu0 %v295, 24
      %v434 = vpop.permute.xlu0 %433
      %435 = vrot.lane.b32.xlu0 %v296, 24
      %v436 = vpop.permute.xlu0 %435
      %v446 = vrot.slane %v296, 1
      %v447 = vrot.slane %v305, 1
      %v448 = vsel %vm322, %v446, %v447
      %449 = vrot.lane.b32.xlu0 %v328, 32
      %v450 = vpop.permute.xlu0 %449
      %451 = vrot.lane.b32.xlu0 %v331, 32
      %v452 = vpop.permute.xlu0 %451
      %453 = vrot.lane.b32.xlu0 %v334, 32
      %v454 = vpop.permute.xlu0 %453
      %455 = vrot.lane.b32.xlu0 %v337, 32
      %v456 = vpop.permute.xlu0 %455
      %457 = vrot.lane.b32.xlu0 %v340, 32
      %v458 = vpop.permute.xlu0 %457
      %459 = vrot.lane.b32.xlu0 %v343, 32
      %v460 = vpop.permute.xlu0 %459
      %461 = vrot.lane.b32.xlu0 %v346, 32
      %v462 = vpop.permute.xlu0 %461
      %463 = vrot.lane.b32.xlu0 %v448, 32
      %v464 = vpop.permute.xlu0 %463
      %v473 = vrot.slane %v296, 2
      %v474 = vrot.slane %v305, 2
      %v475 = vsel %vm371, %v473, %v474
      %476 = vrot.lane.b32.xlu0 %v377, 40
      %v477 = vpop.permute.xlu0 %476
      %478 = vrot.lane.b32.xlu0 %v380, 40
      %v479 = vpop.permute.xlu0 %478
      %480 = vrot.lane.b32.xlu0 %v383, 40
      %v481 = vpop.permute.xlu0 %480
      %482 = vrot.lane.b32.xlu0 %v386, 40
      %v483 = vpop.permute.xlu0 %482
      %484 = vrot.lane.b32.xlu0 %v389, 40
      %v485 = vpop.permute.xlu0 %484
      %486 = vrot.lane.b32.xlu0 %v392, 40
      %v487 = vpop.permute.xlu0 %486
      %488 = vrot.lane.b32.xlu0 %v395, 40
      %v489 = vpop.permute.xlu0 %488
      %490 = vrot.lane.b32.xlu0 %v475, 40
      %v491 = vpop.permute.xlu0 %490
      %500 = vrot.lane.b32.xlu0 %v290, 48
      %v501 = vpop.permute.xlu0 %500
      %502 = vrot.lane.b32.xlu0 %v291, 48
      %v503 = vpop.permute.xlu0 %502
      %504 = vrot.lane.b32.xlu0 %v292, 48
      %v505 = vpop.permute.xlu0 %504
      %506 = vrot.lane.b32.xlu0 %v293, 48
      %v507 = vpop.permute.xlu0 %506
      %508 = vrot.lane.b32.xlu0 %v294, 48
      %v509 = vpop.permute.xlu0 %508
      %510 = vrot.lane.b32.xlu0 %v295, 48
      %v511 = vpop.permute.xlu0 %510
      %512 = vrot.lane.b32.xlu0 %v296, 48
      %v513 = vpop.permute.xlu0 %512
      %514 = vrot.lane.b32.xlu0 %v288, 48
      %v515 = vpop.permute.xlu0 %514
      %524 = vrot.lane.b32.xlu0 %v331, 56
      %v525 = vpop.permute.xlu0 %524
      %526 = vrot.lane.b32.xlu0 %v334, 56
      %v527 = vpop.permute.xlu0 %526
      %528 = vrot.lane.b32.xlu0 %v337, 56
      %v529 = vpop.permute.xlu0 %528
      %530 = vrot.lane.b32.xlu0 %v340, 56
      %v531 = vpop.permute.xlu0 %530
      %532 = vrot.lane.b32.xlu0 %v343, 56
      %v533 = vpop.permute.xlu0 %532
      %534 = vrot.lane.b32.xlu0 %v346, 56
      %v535 = vpop.permute.xlu0 %534
      %536 = vrot.lane.b32.xlu0 %v448, 56
      %v537 = vpop.permute.xlu0 %536
      %538 = vrot.lane.b32.xlu0 %v325, 56
      %v539 = vpop.permute.xlu0 %538
      %548 = vrot.lane.b32.xlu0 %v380, 64
      %v549 = vpop.permute.xlu0 %548
      %550 = vrot.lane.b32.xlu0 %v383, 64
      %v551 = vpop.permute.xlu0 %550
      %552 = vrot.lane.b32.xlu0 %v386, 64
      %v553 = vpop.permute.xlu0 %552
      %554 = vrot.lane.b32.xlu0 %v389, 64
      %v555 = vpop.permute.xlu0 %554
      %556 = vrot.lane.b32.xlu0 %v392, 64
      %v557 = vpop.permute.xlu0 %556
      %558 = vrot.lane.b32.xlu0 %v395, 64
      %v559 = vpop.permute.xlu0 %558
      %560 = vrot.lane.b32.xlu0 %v475, 64
      %v561 = vpop.permute.xlu0 %560
      %562 = vrot.lane.b32.xlu0 %v374, 64
      %v563 = vpop.permute.xlu0 %562
      %vm572 = vcmask 64512
      %v573 = vsel %vm572, %v288, %v348
      %v574 = vsel %vm572, %v289, %v350
      %v575 = vsel %vm572, %v290, %v352
      %v576 = vsel %vm572, %v291, %v354
      %v577 = vsel %vm572, %v292, %v356
      %v578 = vsel %vm572, %v293, %v358
      %v579 = vsel %vm572, %v294, %v360
      %v580 = vsel %vm572, %v295, %v362
      %vm581 = vcmask 130048
      %v582 = vsel %vm581, %v573, %v397
      %v583 = vsel %vm581, %v574, %v399
      %v584 = vsel %vm581, %v575, %v401
      %v585 = vsel %vm581, %v576, %v403
      %v586 = vsel %vm581, %v577, %v405
      %v587 = vsel %vm581, %v578, %v407
      %v588 = vsel %vm581, %v579, %v409
      %v589 = vsel %vm581, %v580, %v411
      %vm590 = vcmask 195584
      %v591 = vsel %vm590, %v582, %v422
      %v592 = vsel %vm590, %v583, %v424
      %v593 = vsel %vm590, %v584, %v426
      %v594 = vsel %vm590, %v585, %v428
      %v595 = vsel %vm590, %v586, %v430
      %v596 = vsel %vm590, %v587, %v432
      %v597 = vsel %vm590, %v588, %v434
      %v598 = vsel %vm590, %v589, %v436
      %vm599 = vcmask 261120
      %v600 = vsel %vm599, %v591, %v450
      %v601 = vsel %vm599, %v592, %v452
      %v602 = vsel %vm599, %v593, %v454
      %v603 = vsel %vm599, %v594, %v456
      %v604 = vsel %vm599, %v595, %v458
      %v605 = vsel %vm599, %v596, %v460
      %v606 = vsel %vm599, %v597, %v462
      %v607 = vsel %vm599, %v598, %v464
      %vm608 = vcmask 326656
      %v609 = vsel %vm608, %v600, %v477
      %v610 = vsel %vm608, %v601, %v479
      %v611 = vsel %vm608, %v602, %v481
      %v612 = vsel %vm608, %v603, %v483
      %v613 = vsel %vm608, %v604, %v485
      %v614 = vsel %vm608, %v605, %v487
      %v615 = vsel %vm608, %v606, %v489
      %v616 = vsel %vm608, %v607, %v491
      %vm617 = vcmask 392192
      %v618 = vsel %vm617, %v609, %v501
      %v619 = vsel %vm617, %v610, %v503
      %v620 = vsel %vm617, %v611, %v505
      %v621 = vsel %vm617, %v612, %v507
      %v622 = vsel %vm617, %v613, %v509
      %v623 = vsel %vm617, %v614, %v511
      %v624 = vsel %vm617, %v615, %v513
      %v625 = vsel %vm617, %v616, %v515
      %vm626 = vcmask 457728
      %v627 = vsel %vm626, %v618, %v525
      %v628 = vsel %vm626, %v619, %v527
      %v629 = vsel %vm626, %v620, %v529
      %v630 = vsel %vm626, %v621, %v531
      %v631 = vsel %vm626, %v622, %v533
      %v632 = vsel %vm626, %v623, %v535
      %v633 = vsel %vm626, %v624, %v537
      %v634 = vsel %vm626, %v625, %v539
      %vm635 = vcmask 523264
      %v636 = vsel %vm635, %v627, %v549
      %v637 = vsel %vm635, %v628, %v551
      %v638 = vsel %vm635, %v629, %v553
      %v639 = vsel %vm635, %v630, %v555
      %v640 = vsel %vm635, %v631, %v557
      %v641 = vsel %vm635, %v632, %v559
      %v642 = vsel %vm635, %v633, %v561
      %v643 = vsel %vm635, %v634, %v563
      %v644 = vpack.c.bf16 %v637, %v636
      %v645 = vpack.c.bf16 %v639, %v638
      %v646 = vpack.c.bf16 %v641, %v640
      %v647 = vpack.c.bf16 %v643, %v642
      %v648 = vld [vmem:[%s2] sm:$0xf]
      %v649 = vld [vmem:[%s2 + $0x4] sm:$0xf]
      %v650 = vld [vmem:[%s2 + $0x8] sm:$0xf]
      %v651 = vld [vmem:[%s2 + $0xc] sm:$0xf]
      %v652 = vld [vmem:[%s2 + $0x10] sm:$0xf]
      %v653 = vld [vmem:[%s2 + $0x14] sm:$0xf]
      %v654 = vld [vmem:[%s2 + $0x18] sm:$0xf]
      %v655 = vld [vmem:[%s2 + $0x1c] sm:$0xf]
      %v656 = vld [vmem:[%s2 + $0x20] sm:$0xf]
      %v666 = vunpack.c.l.b16 %v648
      %v667 = vunpack.c.l.b16 %v649
      %v668 = vunpack.c.l.b16 %v650
      %v669 = vunpack.c.l.b16 %v651
      %v670 = vunpack.c.l.b16 %v652
      %v671 = vunpack.c.l.b16 %v653
      %v672 = vunpack.c.l.b16 %v654
      %v673 = vunpack.c.l.b16 %v655
      %v674 = vunpack.c.l.b16 %v656
      %v675 = vpack.c.b16 %v667, %v666
      %v676 = vpack.c.b16 %v669, %v668
      %v677 = vpack.c.b16 %v671, %v670
      %v678 = vpack.c.b16 %v673, %v672
      %v679 = vpack.c.b16 %v674, %v674
      %vm684 = vcmask 588800
      %v686 = vsel %vm684, %v644, 0
      %v689 = vsel %vm684, %v645, 0
      %v692 = vsel %vm684, %v646, 0
      %v695 = vsel %vm684, %v647, 0
      %vm697 = vcmask 1043456
      %v699 = vsel %vm697, %v679, 0
      %701 = vmatprep.subr.bf16.mxu0 0
      %702 = vmatpush1.bf16.msra.mxu0 0
      %703 = vmatprep.subr.bf16.mxu0 0
      %704 = vmatpush1.bf16.msra.mxu0 0
      %705 = vmatprep.subr.bf16.mxu0 0
      %706 = vmatpush1.bf16.msra.mxu0 0
      %707 = vmatprep.subr.bf16.mxu0 0
      %708 = vmatpush1.bf16.msra.mxu0 %v699
      %709 = vmatprep.subr.bf16.mxu0 0
      %710 = vmatpush1.bf16.msra.mxu0 %v678
      %711 = vmatprep.subr.bf16.mxu0 0
      %712 = vmatpush1.bf16.msra.mxu0 %v677
      %713 = vmatprep.subr.bf16.mxu0 0
      %714 = vmatpush1.bf16.msra.mxu0 %v676
      %715 = vmatprep.subr.bf16.mxu0 0
      %716 = vmatpush1.bf16.msra.mxu0 %v675
      %717 = vmatprep.subr.bf16.mxu0 0
      %718 = vmatpush2.bf16.msra.mxu0 0
      %719 = vmatprep.subr.bf16.mxu0 0
      %720 = vmatpush2.bf16.msra.mxu0 0
      %721 = vmatprep.subr.bf16.mxu0 0
      %722 = vmatpush2.bf16.msra.mxu0 0
      %723 = vmatprep.subr.bf16.mxu0 0
      %724 = vmatpush2.bf16.msra.mxu0 0
      %725 = vmatprep.subr.bf16.mxu0 0
      %726 = vmatpush2.bf16.msra.mxu0 0
      %727 = vmatprep.subr.bf16.mxu0 0
      %728 = vmatpush2.bf16.msra.mxu0 0
      %729 = vmatprep.subr.bf16.mxu0 0
      %730 = vmatpush2.bf16.msra.mxu0 0
      %731 = vmatprep.subr.bf16.mxu0 0
      %732 = vmatpush2.bf16.msra.mxu0 0
      %733 = vmatprep.mubr.bf16.mxu0 0
      %734 = vmatmul.mubr.bf16.gmra.mxu0 %v686
      %v735 = vpop.f32.mrf.mxu0
      %v736 = vadd.f32 0.0, %v735
      %v737 = vpop.f32.mrf.mxu0
      %v738 = vpop.f32.mrf.mxu0
      %v739 = vadd.f32 0.0, %v738
      %v740 = vpop.f32.mrf.mxu0
      %741 = vmatprep.mubr.bf16.mxu0 0
      %742 = vmatmul.mubr.bf16.gmra.mxu0 %v689
      %v743 = vpop.f32.mrf.mxu0
      %v744 = vadd.f32 0.0, %v743
      %v745 = vpop.f32.mrf.mxu0
      %v746 = vpop.f32.mrf.mxu0
      %v747 = vadd.f32 0.0, %v746
      %v748 = vpop.f32.mrf.mxu0
      %749 = vmatprep.mubr.bf16.mxu0 0
      %750 = vmatmul.mubr.bf16.gmra.mxu0 %v692
      %v751 = vpop.f32.mrf.mxu0
      %v752 = vadd.f32 0.0, %v751
      %v753 = vpop.f32.mrf.mxu0
      %v754 = vpop.f32.mrf.mxu0
      %v755 = vadd.f32 0.0, %v754
      %v756 = vpop.f32.mrf.mxu0
      %757 = vmatprep.mubr.bf16.mxu0 0
      %758 = vmatmul.mubr.bf16.gmra.mxu0 %v695
      %v759 = vpop.f32.mrf.mxu0
      %v760 = vadd.f32 0.0, %v759
      %v761 = vpop.f32.mrf.mxu0
      %v762 = vpop.f32.mrf.mxu0
      %v763 = vadd.f32 0.0, %v762
      %v764 = vpop.f32.mrf.mxu0
      %765 = vdwg.mxu0
      %v766 = vadd.f32 %v736, %v739
      %v767 = vadd.f32 %v766, %v744
      %v768 = vadd.f32 %v767, %v747
      %v769 = vadd.f32 %v768, %v752
      %v770 = vadd.f32 %v769, %v755
      %v771 = vadd.f32 %v770, %v760
      %v772 = vadd.f32 %v771, %v763
      %v773 = vrot.slane %v772, 4
      %v774 = vadd.f32 %v772, %v773
      %v775 = vrot.slane %v774, 2
      %v776 = vadd.f32 %v774, %v775
      %v777 = vrot.slane %v776, 1
      %v778 = vadd.f32 %v776, %v777
      %v779 = vmul.f32 %v736, %v736
      %v780 = vmul.f32 %v739, %v739
      %v781 = vmul.f32 %v744, %v744
      %v782 = vmul.f32 %v747, %v747
      %v783 = vmul.f32 %v752, %v752
      %v784 = vmul.f32 %v755, %v755
      %v785 = vmul.f32 %v760, %v760
      %v786 = vmul.f32 %v763, %v763
      %v787 = vadd.f32 %v779, %v780
      %v788 = vadd.f32 %v787, %v781
      %v789 = vadd.f32 %v788, %v782
      %v790 = vadd.f32 %v789, %v783
      %v791 = vadd.f32 %v790, %v784
      %v792 = vadd.f32 %v791, %v785
      %v793 = vadd.f32 %v792, %v786
      %v794 = vrot.slane %v793, 4
      %v795 = vadd.f32 %v793, %v794
      %v796 = vrot.slane %v795, 2
      %v797 = vadd.f32 %v795, %v796
      %v798 = vrot.slane %v797, 1
      %v799 = vadd.f32 %v797, %v798
      %v800 = vsel %vm287, %v778, %v799
      %801 = vst [vmem:[%s208] sm:$0x3] %v800
      %v802 = vpack.c.bf16 %v739, %v736
      %v803 = vpack.c.bf16 %v747, %v744
      %v804 = vpack.c.bf16 %v755, %v752
      %v805 = vpack.c.bf16 %v763, %v760
      %v810 = vunpack.c.l.b16 %v802
      %v811 = vunpack.c.h.b16 %v802
      %v812 = vunpack.c.l.b16 %v803
      %v813 = vunpack.c.h.b16 %v803
      %v814 = vunpack.c.l.b16 %v804
      %v815 = vunpack.c.h.b16 %v804
      %v816 = vunpack.c.l.b16 %v805
      %v817 = vunpack.c.h.b16 %v805
      %v818 = vpack.c.b16 %v810, %v810
      %v819 = vpack.c.b16 %v811, %v811
      %v820 = vpack.c.b16 %v812, %v812
      %v821 = vpack.c.b16 %v813, %v813
      %v822 = vpack.c.b16 %v814, %v814
      %v823 = vpack.c.b16 %v815, %v815
      %v824 = vpack.c.b16 %v816, %v816
      %v825 = vpack.c.b16 %v817, %v817
      %vm834 = vcmask 60416
      %835 = vst.msk [vmem:[%s204] sm:$0xf] %vm834, %v818
      %836 = vst.msk [vmem:[%s204 + $0x4] sm:$0xf] %vm834, %v819
      %837 = vst.msk [vmem:[%s204 + $0x8] sm:$0xf] %vm834, %v820
      %838 = vst.msk [vmem:[%s204 + $0xc] sm:$0xf] %vm834, %v821
      %839 = vst.msk [vmem:[%s204 + $0x10] sm:$0xf] %vm834, %v822
      %840 = vst.msk [vmem:[%s204 + $0x14] sm:$0xf] %vm834, %v823
      %841 = vst.msk [vmem:[%s204 + $0x18] sm:$0xf] %vm834, %v824
      %842 = vst.msk [vmem:[%s204 + $0x1c] sm:$0xf] %vm834, %v825
      %p843 = scmp.lt.s32.totalorder %s16, 1
      %s844 = scalar_select %p843, %s16, 1
      %s845 = smul.addr %s844, 8
      %s846 = smul.addr %s845, 4
      %s847 = scalar_lea.vmem %s3, %s846
      %p848 = scmp.lt.s32.totalorder %s16, 1
      %s849 = scalar_select %p848, %s16, 1
      %s850 = smul.addr %s849, 2
      %s851 = scalar_lea.vmem %s4, %s850
      // Predicated region
      $region33: #{down_pallas.3} parent=31 // pred_check
        %p852 = pneg %p102
      $region34: #{down_pallas.3} parent=31 // pred_check_branch
        %854 = sbr.rel (%p852) target = $region36
      $region35: #{down_pallas.3} parent=31 // pred_region
        _
      $region36: #{down_pallas.3} parent=31 // pred_fallthru
        _
      // Predicated region
      $region37: #{down_pallas.3} parent=31 // pred_check
        %p855 = pneg %p128
      $region38: #{down_pallas.3} parent=31 // pred_check_branch
        %857 = sbr.rel (%p855) target = $region40
      $region39: #{down_pallas.3} parent=31 // pred_region
        _
      $region40: #{down_pallas.3} parent=31 // pred_fallthru
        _
    $region32: #{down_pallas.3} parent=5 // pred_fallthru
      _
    %p858 = scmp.le.s32.totalorder 2, %s11
    // Predicated region
    $region41: #{down_pallas.3} parent=5 // pred_check
      %p859 = pneg %p858
    $region42: #{down_pallas.3} parent=5 // pred_check_branch
      %861 = sbr.rel (%p859) target = $region44
    $region43: #{down_pallas.3} parent=5 // pred_region
      %s862 = ssub.s32 %s11, 2
      // Predicated region
      $region45: #{down_pallas.3} parent=43 // pred_check
        %p863 = pneg %p108
      $region46: #{down_pallas.3} parent=43 // pred_check_branch
        %865 = sbr.rel (%p863) target = $region48
      $region47: #{down_pallas.3} parent=43 // pred_region
        %p866 = scmp.lt.s32.totalorder %s17, 1
        %s867 = scalar_select %p866, %s17, 1
        %s868 = smul.addr %s867, 8
        %s869 = smul.addr %s868, 4
        %s870 = scalar_lea.vmem %s3, %s869
      $region48: #{down_pallas.3} parent=43 // pred_fallthru
        _
      // Predicated region
      $region49: #{down_pallas.3} parent=43 // pred_check
        %p871 = pneg %p134
      $region50: #{down_pallas.3} parent=43 // pred_check_branch
        %873 = sbr.rel (%p871) target = $region52
      $region51: #{down_pallas.3} parent=43 // pred_region
        %p874 = scmp.lt.s32.totalorder %s17, 1
        %s875 = scalar_select %p874, %s17, 1
        %s876 = smul.addr %s875, 2
        %s877 = scalar_lea.vmem %s4, %s876
      $region52: #{down_pallas.3} parent=43 // pred_fallthru
        _
    $region44: #{down_pallas.3} parent=5 // pred_fallthru
      _
  $region6: #{down_pallas.3} parent=0 // loop_footer
    %s15 = sadd.s32 1, %s11
  $region7: #{down_pallas.3} parent=0 // loop_footer_branch
    %10 = sbr.rel target = $region3
  $region8: #{down_pallas.3} parent=0 // loop_exit
    _

// kernel: down_pallas.2
$region0: #{down_pallas.2}
  #allocation0 [shape = 'u32[]', space=smem, size = 0x4, offset = 0x4, fixed_abs, tag = 'smem constant byte address 0x4 - core index']
  #allocation1 [shape = 'u32[144,128]{1,0:T(1,128)}', space=vmem, size = 0x12000, scoped, tag = 'internal scratch']
  %s0 = inlined_call_operand.vmem [shape: f32[2,16,16,4], index: 0, kind: input, shape index: {}]
  %s1 = inlined_call_operand.vmem [shape: bf16[36,128], index: 1, kind: input, shape index: {}]
  %s2 = inlined_call_operand.vmem [shape: bf16[2,8,8,8], index: 2, kind: output, shape index: {0}]
  %s3 = inlined_call_operand.vmem [shape: f32[2,2,128], index: 3, kind: output, shape index: {1}]
  %4 = xla_tuple %s2, %s3
  %s5 = sld [smem:[#allocation0]]
  $region49: #{down_pallas.2} parent=0
    _
  %s7 = ssub.s32 1, %s5
  %s8 = scalar_select 0, %s7, %s5
  loop: start=0, step=1, limit=4
  $region2: #{down_pallas.2} parent=0 // loop_pre_header
    _
  $region3: #{down_pallas.2} parent=0 // loop_header
    %s10 = sphi 0, %s14
    %p11 = scmp.ge.s32.totalorder %s10, 4
    %s20 = sphi 0, %s22
    %s23 = sphi 0, %s20
    %s24 = sphi 0, %s23
    %s40 = sphi 0, %s24
    %s44 = sphi 0, %s44
    %s46 = sphi 0, %s44
    %s47 = sphi 0, %s46
    %s61 = sphi 0, %s47
    %s67 = sphi 0, %s69
    %s70 = sphi 0, %s67
    %s71 = sphi 0, %s70
    %s87 = sphi 0, %s71
    %s93 = sphi 0, %s95
    %s96 = sphi 0, %s93
    %s97 = sphi 0, %s96
    %s113 = sphi 0, %s97
  $region4: #{down_pallas.2} parent=0 // loop_header_branch
    %13 = sbr.rel (%p11) target = $region8
  $region5: #{down_pallas.2} parent=0 // loop_body
    %s15 = ssub.s32 %s10, 1
    %s16 = ssub.s32 %s10, 2
    %s17 = sadd.s32 %s10, 1
    %s18 = ssub.s32 %s10, %s17
    %p19 = scmp.eq.s32.totalorder %s18, 0
    %s21 = sadd.s32 %s20, 1
    %s22 = scalar_select %p19, %s20, %s21
    %p25 = pneg %p19
    %p26 = scmp.eq.s32.totalorder %s10, 1
    %p27 = por %p25, %p26
    %p28 = scmp.ne.s32.totalorder %s20, %s23
    %p29 = scmp.eq.s32.totalorder %s10, 0
    %p30 = por %p28, %p29
    %p31 = scmp.ne.s32.totalorder %s20, %s23
    %p32 = scmp.eq.s32.totalorder %s15, 1
    %p33 = por %p31, %p32
    %p34 = scmp.ne.s32.totalorder %s23, %s24
    %p35 = scmp.eq.s32.totalorder %s15, 0
    %p36 = por %p34, %p35
    %p37 = scmp.ne.s32.totalorder %s23, %s24
    %p38 = scmp.eq.s32.totalorder %s16, 1
    %p39 = por %p37, %p38
    %p41 = scmp.ne.s32.totalorder %s24, %s40
    %p42 = scmp.eq.s32.totalorder %s16, 0
    %p43 = por %p41, %p42
    %s45 = sadd.s32 %s44, 1
    %p48 = scmp.eq.s32.totalorder %s10, 1
    %p49 = scmp.ne.s32.totalorder %s44, %s46
    %p50 = scmp.eq.s32.totalorder %s10, 0
    %p51 = por %p49, %p50
    %p52 = scmp.ne.s32.totalorder %s44, %s46
    %p53 = scmp.eq.s32.totalorder %s15, 1
    %p54 = por %p52, %p53
    %p55 = scmp.ne.s32.totalorder %s46, %s47
    %p56 = scmp.eq.s32.totalorder %s15, 0
    %p57 = por %p55, %p56
    %p58 = scmp.ne.s32.totalorder %s46, %s47
    %p59 = scmp.eq.s32.totalorder %s16, 1
    %p60 = por %p58, %p59
    %p62 = scmp.ne.s32.totalorder %s47, %s61
    %p63 = scmp.eq.s32.totalorder %s16, 0
    %p64 = por %p62, %p63
    %s65 = ssub.s32 %s10, %s17
    %p66 = scmp.eq.s32.totalorder %s65, 0
    %s68 = sadd.s32 %s67, 1
    %s69 = scalar_select %p66, %s67, %s68
    %p72 = pneg %p66
    %p73 = scmp.eq.s32.totalorder %s10, 1
    %p74 = por %p72, %p73
    %p75 = scmp.ne.s32.totalorder %s67, %s70
    %p76 = scmp.eq.s32.totalorder %s10, 0
    %p77 = por %p75, %p76
    %p78 = scmp.ne.s32.totalorder %s67, %s70
    %p79 = scmp.eq.s32.totalorder %s15, 1
    %p80 = por %p78, %p79
    %p81 = scmp.ne.s32.totalorder %s70, %s71
    %p82 = scmp.eq.s32.totalorder %s15, 0
    %p83 = por %p81, %p82
    %p84 = scmp.ne.s32.totalorder %s70, %s71
    %p85 = scmp.eq.s32.totalorder %s16, 1
    %p86 = por %p84, %p85
    %p88 = scmp.ne.s32.totalorder %s71, %s87
    %p89 = scmp.eq.s32.totalorder %s16, 0
    %p90 = por %p88, %p89
    %s91 = ssub.s32 %s10, %s17
    %p92 = scmp.eq.s32.totalorder %s91, 0
    %s94 = sadd.s32 %s93, 1
    %s95 = scalar_select %p92, %s93, %s94
    %p98 = pneg %p92
    %p99 = scmp.eq.s32.totalorder %s10, 1
    %p100 = por %p98, %p99
    %p101 = scmp.ne.s32.totalorder %s93, %s96
    %p102 = scmp.eq.s32.totalorder %s10, 0
    %p103 = por %p101, %p102
    %p104 = scmp.ne.s32.totalorder %s93, %s96
    %p105 = scmp.eq.s32.totalorder %s15, 1
    %p106 = por %p104, %p105
    %p107 = scmp.ne.s32.totalorder %s96, %s97
    %p108 = scmp.eq.s32.totalorder %s15, 0
    %p109 = por %p107, %p108
    %p110 = scmp.ne.s32.totalorder %s96, %s97
    %p111 = scmp.eq.s32.totalorder %s16, 1
    %p112 = por %p110, %p111
    %p114 = scmp.ne.s32.totalorder %s97, %s113
    %p115 = scmp.eq.s32.totalorder %s16, 0
    %p116 = por %p114, %p115
    %p117 = scmp.le.s32.totalorder 1, %s10
    %p118 = scmp.lt.s32.totalorder %s10, 3
    %p119 = pnand %p117, %p118
    %p120 = pneg %p119
    // Predicated region
    $region9: #{down_pallas.2} parent=5 // pred_check
      _
    $region10: #{down_pallas.2} parent=5 // pred_check_branch
      %122 = sbr.rel (%p119) target = $region12
    $region11: #{down_pallas.2} parent=5 // pred_region
      %s123 = ssub.s32 %s10, 1
      // Predicated region
      $region13: #{down_pallas.2} parent=11 // pred_check
        %p124 = pneg %p57
      $region14: #{down_pallas.2} parent=11 // pred_check_branch
        %126 = sbr.rel (%p124) target = $region16
      $region15: #{down_pallas.2} parent=11 // pred_region
        _
      $region16: #{down_pallas.2} parent=11 // pred_fallthru
        _
    $region12: #{down_pallas.2} parent=5 // pred_fallthru
      _
    %p127 = scmp.lt.s32.totalorder %s10, 2
    // Predicated region
    $region17: #{down_pallas.2} parent=5 // pred_check
      %p128 = pneg %p127
    $region18: #{down_pallas.2} parent=5 // pred_check_branch
      %130 = sbr.rel (%p128) target = $region20
    $region19: #{down_pallas.2} parent=5 // pred_region
      // Predicated region
      $region21: #{down_pallas.2} parent=19 // pred_check
        %p131 = pneg %p30
      $region22: #{down_pallas.2} parent=19 // pred_check_branch
        %133 = sbr.rel (%p131) target = $region24
      $region23: #{down_pallas.2} parent=19 // pred_region
        %p134 = scmp.lt.s32.totalorder %s10, 1
        %s135 = scalar_select %p134, %s10, 1
        %s136 = smul.addr %s135, 32
        %s137 = smul.addr %s136, 8
        %s138 = scalar_lea.vmem %s0, %s137
      $region24: #{down_pallas.2} parent=19 // pred_fallthru
        _
    $region20: #{down_pallas.2} parent=5 // pred_fallthru
      _
    %p139 = scmp.le.s32.totalorder 1, %s10
    %p140 = scmp.lt.s32.totalorder %s10, 3
    %p141 = pnand %p139, %p140
    %p142 = pneg %p141
    // Predicated region
    $region25: #{down_pallas.2} parent=5 // pred_check
      _
    $region26: #{down_pallas.2} parent=5 // pred_check_branch
      %144 = sbr.rel (%p141) target = $region28
    $region27: #{down_pallas.2} parent=5 // pred_region
      %s145 = ssub.s32 %s10, 1
      %p146 = scmp.lt.s32.totalorder %s15, 1
      %s147 = scalar_select %p146, %s15, 1
      %s148 = smul.addr %s147, 32
      %s149 = smul.addr %s148, 8
      %s150 = scalar_lea.vmem %s0, %s149
      %p151 = pneg %p36
      %p152 = pneg %p33
      %p153 = pneg %p57
      %p154 = pneg %p54
      %p155 = pneg %p83
      %p156 = pneg %p80
      %p157 = scmp.lt.s32.totalorder %s15, 1
      %s158 = scalar_select %p157, %s15, 1
      %s159 = smul.addr %s158, 8
      %s160 = smul.addr %s159, 4
      %s161 = scalar_lea.vmem %s2, %s160
      %p162 = pneg %p109
      %p163 = pneg %p106
      %p164 = scmp.lt.s32.totalorder %s15, 1
      %s165 = scalar_select %p164, %s15, 1
      %s166 = smul.addr %s165, 2
      %s167 = scalar_lea.vmem %s3, %s166
      %p168 = scmp.lt.s32.totalorder %s15, 1
      %s169 = scalar_select %p168, %s15, 1
      %s170 = smul.addr %s169, 32
      %s171 = smul.addr %s170, 8
      %s172 = scalar_lea.vmem %s0, %s171
      %p173 = scmp.lt.s32.totalorder %s15, 1
      %s174 = scalar_select %p173, %s15, 1
      %s175 = smul.addr %s174, 8
      %s176 = smul.addr %s175, 4
      %s177 = scalar_lea.vmem %s2, %s176
      %p178 = scmp.lt.s32.totalorder %s15, 1
      %s179 = scalar_select %p178, %s15, 1
      %s180 = smul.addr %s179, 2
      %s181 = scalar_lea.vmem %s3, %s180
      %v183 = vld [vmem:[%s172] sm:$0xff]
      %v184 = vld [vmem:[%s172 + $0x8] sm:$0xff]
      %v185 = vld [vmem:[%s172 + $0x10] sm:$0xff]
      %v186 = vld [vmem:[%s172 + $0x18] sm:$0xff]
      %v187 = vld [vmem:[%s172 + $0x20] sm:$0xff]
      %v188 = vld [vmem:[%s172 + $0x28] sm:$0xff]
      %v189 = vld [vmem:[%s172 + $0x30] sm:$0xff]
      %v190 = vld [vmem:[%s172 + $0x38] sm:$0xff]
      %v191 = vld [vmem:[%s172 + $0x40] sm:$0xff]
      %v192 = vld [vmem:[%s172 + $0x48] sm:$0xff]
      %v193 = vld [vmem:[%s172 + $0x50] sm:$0xff]
      %v194 = vld [vmem:[%s172 + $0x58] sm:$0xff]
      %v195 = vld [vmem:[%s172 + $0x60] sm:$0xff]
      %v196 = vld [vmem:[%s172 + $0x68] sm:$0xff]
      %v197 = vld [vmem:[%s172 + $0x70] sm:$0xff]
      %v198 = vld [vmem:[%s172 + $0x78] sm:$0xff]
      %v199 = vld [vmem:[%s172 + $0x80] sm:$0xff]
      %v200 = vld [vmem:[%s172 + $0x88] sm:$0xff]
      %v201 = vld [vmem:[%s172 + $0x90] sm:$0xff]
      %v202 = vld [vmem:[%s172 + $0x98] sm:$0xff]
      %v203 = vld [vmem:[%s172 + $0xa0] sm:$0xff]
      %v204 = vld [vmem:[%s172 + $0xa8] sm:$0xff]
      %v205 = vld [vmem:[%s172 + $0xb0] sm:$0xff]
      %v206 = vld [vmem:[%s172 + $0xb8] sm:$0xff]
      %v207 = vld [vmem:[%s172 + $0xc0] sm:$0xff]
      %v208 = vld [vmem:[%s172 + $0xc8] sm:$0xff]
      %v209 = vld [vmem:[%s172 + $0xd0] sm:$0xff]
      %v210 = vld [vmem:[%s172 + $0xd8] sm:$0xff]
      %v211 = vld [vmem:[%s172 + $0xe0] sm:$0xff]
      %v212 = vld [vmem:[%s172 + $0xe8] sm:$0xff]
      %v213 = vld [vmem:[%s172 + $0xf0] sm:$0xff]
      %v214 = vld [vmem:[%s172 + $0xf8] sm:$0xff]
      %v247 = vcombine.high %v183, %v183
      %v249 = vunpack.c.l.s4 1983009808
      %v250 = vunpack.c.0.s8 %v249
      %v251 = vlaneseq
      %v252 = vshrl.u32 %v251, 7
      %v253 = vsub.s32 %v250, %v252
      %v254 = vrot.slane %v183, %v253
      %v256 = vunpack.c.l.s4 1983009808
      %v257 = vunpack.c.0.s8 %v256
      %v258 = vlaneseq
      %v259 = vshrl.u32 %v258, 7
      %v260 = vsub.s32 %v257, %v259
      %v261 = vrot.slane %v247, %v260
      %v262 = vcombine.high %v254, %v254
      %v263 = vcombine.high %v261, %v261
      %v264 = vcombine.high %v184, %v184
      %v266 = vunpack.c.l.s4 1983009808
      %v267 = vunpack.c.0.s8 %v266
      %v268 = vlaneseq
      %v269 = vshrl.u32 %v268, 7
      %v270 = vsub.s32 %v267, %v269
      %v271 = vrot.slane %v184, %v270
      %v273 = vunpack.c.l.s4 1983009808
      %v274 = vunpack.c.0.s8 %v273
      %v275 = vlaneseq
      %v276 = vshrl.u32 %v275, 7
      %v277 = vsub.s32 %v274, %v276
      %v278 = vrot.slane %v264, %v277
      %v279 = vcombine.high %v271, %v271
      %v280 = vcombine.high %v278, %v278
      %v281 = vcombine.high %v185, %v185
      %v283 = vunpack.c.l.s4 1983009808
      %v284 = vunpack.c.0.s8 %v283
      %v285 = vlaneseq
      %v286 = vshrl.u32 %v285, 7
      %v287 = vsub.s32 %v284, %v286
      %v288 = vrot.slane %v185, %v287
      %v290 = vunpack.c.l.s4 1983009808
      %v291 = vunpack.c.0.s8 %v290
      %v292 = vlaneseq
      %v293 = vshrl.u32 %v292, 7
      %v294 = vsub.s32 %v291, %v293
      %v295 = vrot.slane %v281, %v294
      %v296 = vcombine.high %v288, %v288
      %v297 = vcombine.high %v295, %v295
      %v298 = vcombine.high %v186, %v186
      %v300 = vunpack.c.l.s4 1983009808
      %v301 = vunpack.c.0.s8 %v300
      %v302 = vlaneseq
      %v303 = vshrl.u32 %v302, 7
      %v304 = vsub.s32 %v301, %v303
      %v305 = vrot.slane %v186, %v304
      %v307 = vunpack.c.l.s4 1983009808
      %v308 = vunpack.c.0.s8 %v307
      %v309 = vlaneseq
      %v310 = vshrl.u32 %v309, 7
      %v311 = vsub.s32 %v308, %v310
      %v312 = vrot.slane %v298, %v311
      %v313 = vcombine.high %v305, %v305
      %v314 = vcombine.high %v312, %v312
      %v315 = vcombine.high %v187, %v187
      %v317 = vunpack.c.l.s4 1983009808
      %v318 = vunpack.c.0.s8 %v317
      %v319 = vlaneseq
      %v320 = vshrl.u32 %v319, 7
      %v321 = vsub.s32 %v318, %v320
      %v322 = vrot.slane %v187, %v321
      %v324 = vunpack.c.l.s4 1983009808
      %v325 = vunpack.c.0.s8 %v324
      %v326 = vlaneseq
      %v327 = vshrl.u32 %v326, 7
      %v328 = vsub.s32 %v325, %v327
      %v329 = vrot.slane %v315, %v328
      %v330 = vcombine.high %v322, %v322
      %v331 = vcombine.high %v329, %v329
      %v332 = vcombine.high %v188, %v188
      %v334 = vunpack.c.l.s4 1983009808
      %v335 = vunpack.c.0.s8 %v334
      %v336 = vlaneseq
      %v337 = vshrl.u32 %v336, 7
      %v338 = vsub.s32 %v335, %v337
      %v339 = vrot.slane %v188, %v338
      %v341 = vunpack.c.l.s4 1983009808
      %v342 = vunpack.c.0.s8 %v341
      %v343 = vlaneseq
      %v344 = vshrl.u32 %v343, 7
      %v345 = vsub.s32 %v342, %v344
      %v346 = vrot.slane %v332, %v345
      %v347 = vcombine.high %v339, %v339
      %v348 = vcombine.high %v346, %v346
      %v349 = vcombine.high %v189, %v189
      %v351 = vunpack.c.l.s4 1983009808
      %v352 = vunpack.c.0.s8 %v351
      %v353 = vlaneseq
      %v354 = vshrl.u32 %v353, 7
      %v355 = vsub.s32 %v352, %v354
      %v356 = vrot.slane %v189, %v355
      %v358 = vunpack.c.l.s4 1983009808
      %v359 = vunpack.c.0.s8 %v358
      %v360 = vlaneseq
      %v361 = vshrl.u32 %v360, 7
      %v362 = vsub.s32 %v359, %v361
      %v363 = vrot.slane %v349, %v362
      %v364 = vcombine.high %v356, %v356
      %v365 = vcombine.high %v363, %v363
      %v366 = vcombine.high %v190, %v190
      %v368 = vunpack.c.l.s4 1983009808
      %v369 = vunpack.c.0.s8 %v368
      %v370 = vlaneseq
      %v371 = vshrl.u32 %v370, 7
      %v372 = vsub.s32 %v369, %v371
      %v373 = vrot.slane %v190, %v372
      %v375 = vunpack.c.l.s4 1983009808
      %v376 = vunpack.c.0.s8 %v375
      %v377 = vlaneseq
      %v378 = vshrl.u32 %v377, 7
      %v379 = vsub.s32 %v376, %v378
      %v380 = vrot.slane %v366, %v379
      %v381 = vcombine.high %v373, %v373
      %v382 = vcombine.high %v380, %v380
      %v383 = vcombine.high %v191, %v191
      %v385 = vunpack.c.l.s4 1983009808
      %v386 = vunpack.c.0.s8 %v385
      %v387 = vlaneseq
      %v388 = vshrl.u32 %v387, 7
      %v389 = vsub.s32 %v386, %v388
      %v390 = vrot.slane %v191, %v389
      %v392 = vunpack.c.l.s4 1983009808
      %v393 = vunpack.c.0.s8 %v392
      %v394 = vlaneseq
      %v395 = vshrl.u32 %v394, 7
      %v396 = vsub.s32 %v393, %v395
      %v397 = vrot.slane %v383, %v396
      %v398 = vcombine.high %v390, %v390
      %v399 = vcombine.high %v397, %v397
      %v400 = vcombine.high %v192, %v192
      %v402 = vunpack.c.l.s4 1983009808
      %v403 = vunpack.c.0.s8 %v402
      %v404 = vlaneseq
      %v405 = vshrl.u32 %v404, 7
      %v406 = vsub.s32 %v403, %v405
      %v407 = vrot.slane %v192, %v406
      %v409 = vunpack.c.l.s4 1983009808
      %v410 = vunpack.c.0.s8 %v409
      %v411 = vlaneseq
      %v412 = vshrl.u32 %v411, 7
      %v413 = vsub.s32 %v410, %v412
      %v414 = vrot.slane %v400, %v413
      %v415 = vcombine.high %v407, %v407
      %v416 = vcombine.high %v414, %v414
      %v417 = vcombine.high %v193, %v193
      %v419 = vunpack.c.l.s4 1983009808
      %v420 = vunpack.c.0.s8 %v419
      %v421 = vlaneseq
      %v422 = vshrl.u32 %v421, 7
      %v423 = vsub.s32 %v420, %v422
      %v424 = vrot.slane %v193, %v423
      %v426 = vunpack.c.l.s4 1983009808
      %v427 = vunpack.c.0.s8 %v426
      %v428 = vlaneseq
      %v429 = vshrl.u32 %v428, 7
      %v430 = vsub.s32 %v427, %v429
      %v431 = vrot.slane %v417, %v430
      %v432 = vcombine.high %v424, %v424
      %v433 = vcombine.high %v431, %v431
      %v434 = vcombine.high %v194, %v194
      %v436 = vunpack.c.l.s4 1983009808
      %v437 = vunpack.c.0.s8 %v436
      %v438 = vlaneseq
      %v439 = vshrl.u32 %v438, 7
      %v440 = vsub.s32 %v437, %v439
      %v441 = vrot.slane %v194, %v440
      %v443 = vunpack.c.l.s4 1983009808
      %v444 = vunpack.c.0.s8 %v443
      %v445 = vlaneseq
      %v446 = vshrl.u32 %v445, 7
      %v447 = vsub.s32 %v444, %v446
      %v448 = vrot.slane %v434, %v447
      %v449 = vcombine.high %v441, %v441
      %v450 = vcombine.high %v448, %v448
      %v451 = vcombine.high %v195, %v195
      %v453 = vunpack.c.l.s4 1983009808
      %v454 = vunpack.c.0.s8 %v453
      %v455 = vlaneseq
      %v456 = vshrl.u32 %v455, 7
      %v457 = vsub.s32 %v454, %v456
      %v458 = vrot.slane %v195, %v457
      %v460 = vunpack.c.l.s4 1983009808
      %v461 = vunpack.c.0.s8 %v460
      %v462 = vlaneseq
      %v463 = vshrl.u32 %v462, 7
      %v464 = vsub.s32 %v461, %v463
      %v465 = vrot.slane %v451, %v464
      %v466 = vcombine.high %v458, %v458
      %v467 = vcombine.high %v465, %v465
      %v468 = vcombine.high %v196, %v196
      %v470 = vunpack.c.l.s4 1983009808
      %v471 = vunpack.c.0.s8 %v470
      %v472 = vlaneseq
      %v473 = vshrl.u32 %v472, 7
      %v474 = vsub.s32 %v471, %v473
      %v475 = vrot.slane %v196, %v474
      %v477 = vunpack.c.l.s4 1983009808
      %v478 = vunpack.c.0.s8 %v477
      %v479 = vlaneseq
      %v480 = vshrl.u32 %v479, 7
      %v481 = vsub.s32 %v478, %v480
      %v482 = vrot.slane %v468, %v481
      %v483 = vcombine.high %v475, %v475
      %v484 = vcombine.high %v482, %v482
      %v485 = vcombine.high %v197, %v197
      %v487 = vunpack.c.l.s4 1983009808
      %v488 = vunpack.c.0.s8 %v487
      %v489 = vlaneseq
      %v490 = vshrl.u32 %v489, 7
      %v491 = vsub.s32 %v488, %v490
      %v492 = vrot.slane %v197, %v491
      %v494 = vunpack.c.l.s4 1983009808
      %v495 = vunpack.c.0.s8 %v494
      %v496 = vlaneseq
      %v497 = vshrl.u32 %v496, 7
      %v498 = vsub.s32 %v495, %v497
      %v499 = vrot.slane %v485, %v498
      %v500 = vcombine.high %v492, %v492
      %v501 = vcombine.high %v499, %v499
      %v502 = vcombine.high %v198, %v198
      %v504 = vunpack.c.l.s4 1983009808
      %v505 = vunpack.c.0.s8 %v504
      %v506 = vlaneseq
      %v507 = vshrl.u32 %v506, 7
      %v508 = vsub.s32 %v505, %v507
      %v509 = vrot.slane %v198, %v508
      %v511 = vunpack.c.l.s4 1983009808
      %v512 = vunpack.c.0.s8 %v511
      %v513 = vlaneseq
      %v514 = vshrl.u32 %v513, 7
      %v515 = vsub.s32 %v512, %v514
      %v516 = vrot.slane %v502, %v515
      %v517 = vcombine.high %v509, %v509
      %v518 = vcombine.high %v516, %v516
      %v519 = vcombine.high %v199, %v199
      %v521 = vunpack.c.l.s4 1983009808
      %v522 = vunpack.c.0.s8 %v521
      %v523 = vlaneseq
      %v524 = vshrl.u32 %v523, 7
      %v525 = vsub.s32 %v522, %v524
      %v526 = vrot.slane %v199, %v525
      %v528 = vunpack.c.l.s4 1983009808
      %v529 = vunpack.c.0.s8 %v528
      %v530 = vlaneseq
      %v531 = vshrl.u32 %v530, 7
      %v532 = vsub.s32 %v529, %v531
      %v533 = vrot.slane %v519, %v532
      %v534 = vcombine.high %v526, %v526
      %v535 = vcombine.high %v533, %v533
      %v536 = vcombine.high %v200, %v200
      %v538 = vunpack.c.l.s4 1983009808
      %v539 = vunpack.c.0.s8 %v538
      %v540 = vlaneseq
      %v541 = vshrl.u32 %v540, 7
      %v542 = vsub.s32 %v539, %v541
      %v543 = vrot.slane %v200, %v542
      %v545 = vunpack.c.l.s4 1983009808
      %v546 = vunpack.c.0.s8 %v545
      %v547 = vlaneseq
      %v548 = vshrl.u32 %v547, 7
      %v549 = vsub.s32 %v546, %v548
      %v550 = vrot.slane %v536, %v549
      %v551 = vcombine.high %v543, %v543
      %v552 = vcombine.high %v550, %v550
      %v553 = vcombine.high %v201, %v201
      %v555 = vunpack.c.l.s4 1983009808
      %v556 = vunpack.c.0.s8 %v555
      %v557 = vlaneseq
      %v558 = vshrl.u32 %v557, 7
      %v559 = vsub.s32 %v556, %v558
      %v560 = vrot.slane %v201, %v559
      %v562 = vunpack.c.l.s4 1983009808
      %v563 = vunpack.c.0.s8 %v562
      %v564 = vlaneseq
      %v565 = vshrl.u32 %v564, 7
      %v566 = vsub.s32 %v563, %v565
      %v567 = vrot.slane %v553, %v566
      %v568 = vcombine.high %v560, %v560
      %v569 = vcombine.high %v567, %v567
      %v570 = vcombine.high %v202, %v202
      %v572 = vunpack.c.l.s4 1983009808
      %v573 = vunpack.c.0.s8 %v572
      %v574 = vlaneseq
      %v575 = vshrl.u32 %v574, 7
      %v576 = vsub.s32 %v573, %v575
      %v577 = vrot.slane %v202, %v576
      %v579 = vunpack.c.l.s4 1983009808
      %v580 = vunpack.c.0.s8 %v579
      %v581 = vlaneseq
      %v582 = vshrl.u32 %v581, 7
      %v583 = vsub.s32 %v580, %v582
      %v584 = vrot.slane %v570, %v583
      %v585 = vcombine.high %v577, %v577
      %v586 = vcombine.high %v584, %v584
      %v587 = vcombine.high %v203, %v203
      %v589 = vunpack.c.l.s4 1983009808
      %v590 = vunpack.c.0.s8 %v589
      %v591 = vlaneseq
      %v592 = vshrl.u32 %v591, 7
      %v593 = vsub.s32 %v590, %v592
      %v594 = vrot.slane %v203, %v593
      %v596 = vunpack.c.l.s4 1983009808
      %v597 = vunpack.c.0.s8 %v596
      %v598 = vlaneseq
      %v599 = vshrl.u32 %v598, 7
      %v600 = vsub.s32 %v597, %v599
      %v601 = vrot.slane %v587, %v600
      %v602 = vcombine.high %v594, %v594
      %v603 = vcombine.high %v601, %v601
      %v604 = vcombine.high %v204, %v204
      %v606 = vunpack.c.l.s4 1983009808
      %v607 = vunpack.c.0.s8 %v606
      %v608 = vlaneseq
      %v609 = vshrl.u32 %v608, 7
      %v610 = vsub.s32 %v607, %v609
      %v611 = vrot.slane %v204, %v610
      %v613 = vunpack.c.l.s4 1983009808
      %v614 = vunpack.c.0.s8 %v613
      %v615 = vlaneseq
      %v616 = vshrl.u32 %v615, 7
      %v617 = vsub.s32 %v614, %v616
      %v618 = vrot.slane %v604, %v617
      %v619 = vcombine.high %v611, %v611
      %v620 = vcombine.high %v618, %v618
      %v621 = vcombine.high %v205, %v205
      %v623 = vunpack.c.l.s4 1983009808
      %v624 = vunpack.c.0.s8 %v623
      %v625 = vlaneseq
      %v626 = vshrl.u32 %v625, 7
      %v627 = vsub.s32 %v624, %v626
      %v628 = vrot.slane %v205, %v627
      %v630 = vunpack.c.l.s4 1983009808
      %v631 = vunpack.c.0.s8 %v630
      %v632 = vlaneseq
      %v633 = vshrl.u32 %v632, 7
      %v634 = vsub.s32 %v631, %v633
      %v635 = vrot.slane %v621, %v634
      %v636 = vcombine.high %v628, %v628
      %v637 = vcombine.high %v635, %v635
      %v638 = vcombine.high %v206, %v206
      %v640 = vunpack.c.l.s4 1983009808
      %v641 = vunpack.c.0.s8 %v640
      %v642 = vlaneseq
      %v643 = vshrl.u32 %v642, 7
      %v644 = vsub.s32 %v641, %v643
      %v645 = vrot.slane %v206, %v644
      %v647 = vunpack.c.l.s4 1983009808
      %v648 = vunpack.c.0.s8 %v647
      %v649 = vlaneseq
      %v650 = vshrl.u32 %v649, 7
      %v651 = vsub.s32 %v648, %v650
      %v652 = vrot.slane %v638, %v651
      %v653 = vcombine.high %v645, %v645
      %v654 = vcombine.high %v652, %v652
      %v655 = vcombine.high %v207, %v207
      %v657 = vunpack.c.l.s4 1983009808
      %v658 = vunpack.c.0.s8 %v657
      %v659 = vlaneseq
      %v660 = vshrl.u32 %v659, 7
      %v661 = vsub.s32 %v658, %v660
      %v662 = vrot.slane %v207, %v661
      %v664 = vunpack.c.l.s4 1983009808
      %v665 = vunpack.c.0.s8 %v664
      %v666 = vlaneseq
      %v667 = vshrl.u32 %v666, 7
      %v668 = vsub.s32 %v665, %v667
      %v669 = vrot.slane %v655, %v668
      %v670 = vcombine.high %v662, %v662
      %v671 = vcombine.high %v669, %v669
      %v672 = vcombine.high %v208, %v208
      %v674 = vunpack.c.l.s4 1983009808
      %v675 = vunpack.c.0.s8 %v674
      %v676 = vlaneseq
      %v677 = vshrl.u32 %v676, 7
      %v678 = vsub.s32 %v675, %v677
      %v679 = vrot.slane %v208, %v678
      %v681 = vunpack.c.l.s4 1983009808
      %v682 = vunpack.c.0.s8 %v681
      %v683 = vlaneseq
      %v684 = vshrl.u32 %v683, 7
      %v685 = vsub.s32 %v682, %v684
      %v686 = vrot.slane %v672, %v685
      %v687 = vcombine.high %v679, %v679
      %v688 = vcombine.high %v686, %v686
      %v689 = vcombine.high %v209, %v209
      %v691 = vunpack.c.l.s4 1983009808
      %v692 = vunpack.c.0.s8 %v691
      %v693 = vlaneseq
      %v694 = vshrl.u32 %v693, 7
      %v695 = vsub.s32 %v692, %v694
      %v696 = vrot.slane %v209, %v695
      %v698 = vunpack.c.l.s4 1983009808
      %v699 = vunpack.c.0.s8 %v698
      %v700 = vlaneseq
      %v701 = vshrl.u32 %v700, 7
      %v702 = vsub.s32 %v699, %v701
      %v703 = vrot.slane %v689, %v702
      %v704 = vcombine.high %v696, %v696
      %v705 = vcombine.high %v703, %v703
      %v706 = vcombine.high %v210, %v210
      %v708 = vunpack.c.l.s4 1983009808
      %v709 = vunpack.c.0.s8 %v708
      %v710 = vlaneseq
      %v711 = vshrl.u32 %v710, 7
      %v712 = vsub.s32 %v709, %v711
      %v713 = vrot.slane %v210, %v712
      %v715 = vunpack.c.l.s4 1983009808
      %v716 = vunpack.c.0.s8 %v715
      %v717 = vlaneseq
      %v718 = vshrl.u32 %v717, 7
      %v719 = vsub.s32 %v716, %v718
      %v720 = vrot.slane %v706, %v719
      %v721 = vcombine.high %v713, %v713
      %v722 = vcombine.high %v720, %v720
      %v723 = vcombine.high %v211, %v211
      %v725 = vunpack.c.l.s4 1983009808
      %v726 = vunpack.c.0.s8 %v725
      %v727 = vlaneseq
      %v728 = vshrl.u32 %v727, 7
      %v729 = vsub.s32 %v726, %v728
      %v730 = vrot.slane %v211, %v729
      %v732 = vunpack.c.l.s4 1983009808
      %v733 = vunpack.c.0.s8 %v732
      %v734 = vlaneseq
      %v735 = vshrl.u32 %v734, 7
      %v736 = vsub.s32 %v733, %v735
      %v737 = vrot.slane %v723, %v736
      %v738 = vcombine.high %v730, %v730
      %v739 = vcombine.high %v737, %v737
      %v740 = vcombine.high %v212, %v212
      %v742 = vunpack.c.l.s4 1983009808
      %v743 = vunpack.c.0.s8 %v742
      %v744 = vlaneseq
      %v745 = vshrl.u32 %v744, 7
      %v746 = vsub.s32 %v743, %v745
      %v747 = vrot.slane %v212, %v746
      %v749 = vunpack.c.l.s4 1983009808
      %v750 = vunpack.c.0.s8 %v749
      %v751 = vlaneseq
      %v752 = vshrl.u32 %v751, 7
      %v753 = vsub.s32 %v750, %v752
      %v754 = vrot.slane %v740, %v753
      %v755 = vcombine.high %v747, %v747
      %v756 = vcombine.high %v754, %v754
      %v757 = vcombine.high %v213, %v213
      %v759 = vunpack.c.l.s4 1983009808
      %v760 = vunpack.c.0.s8 %v759
      %v761 = vlaneseq
      %v762 = vshrl.u32 %v761, 7
      %v763 = vsub.s32 %v760, %v762
      %v764 = vrot.slane %v213, %v763
      %v766 = vunpack.c.l.s4 1983009808
      %v767 = vunpack.c.0.s8 %v766
      %v768 = vlaneseq
      %v769 = vshrl.u32 %v768, 7
      %v770 = vsub.s32 %v767, %v769
      %v771 = vrot.slane %v757, %v770
      %v772 = vcombine.high %v764, %v764
      %v773 = vcombine.high %v771, %v771
      %v774 = vcombine.high %v214, %v214
      %v776 = vunpack.c.l.s4 1983009808
      %v777 = vunpack.c.0.s8 %v776
      %v778 = vlaneseq
      %v779 = vshrl.u32 %v778, 7
      %v780 = vsub.s32 %v777, %v779
      %v781 = vrot.slane %v214, %v780
      %v783 = vunpack.c.l.s4 1983009808
      %v784 = vunpack.c.0.s8 %v783
      %v785 = vlaneseq
      %v786 = vshrl.u32 %v785, 7
      %v787 = vsub.s32 %v784, %v786
      %v788 = vrot.slane %v774, %v787
      %v789 = vcombine.high %v781, %v781
      %v790 = vcombine.high %v788, %v788
      %vm919 = vcmask 25600
      %v920 = vsel %vm919, %v254, -inf
      %v921 = vrot.slane %v920, 4
      %v922 = vmax.f32 %v920, %v921
      %v923 = vrot.slane %v922, 2
      %v924 = vmax.f32 %v922, %v923
      %v925 = vrot.slane %v924, 1
      %v926 = vmax.f32 %v924, %v925
      %v927 = vsel %vm919, %v262, -inf
      %v928 = vrot.slane %v927, 4
      %v929 = vmax.f32 %v927, %v928
      %v930 = vrot.slane %v929, 2
      %v931 = vmax.f32 %v929, %v930
      %v932 = vrot.slane %v931, 1
      %v933 = vmax.f32 %v931, %v932
      %v934 = vsel %vm919, %v261, -inf
      %v935 = vrot.slane %v934, 4
      %v936 = vmax.f32 %v934, %v935
      %v937 = vrot.slane %v936, 2
      %v938 = vmax.f32 %v936, %v937
      %v939 = vrot.slane %v938, 1
      %v940 = vmax.f32 %v938, %v939
      %v941 = vsel %vm919, %v263, -inf
      %v942 = vrot.slane %v941, 4
      %v943 = vmax.f32 %v941, %v942
      %v944 = vrot.slane %v943, 2
      %v945 = vmax.f32 %v943, %v944
      %v946 = vrot.slane %v945, 1
      %v947 = vmax.f32 %v945, %v946
      %v948 = vsel %vm919, %v271, -inf
      %v949 = vrot.slane %v948, 4
      %v950 = vmax.f32 %v948, %v949
      %v951 = vrot.slane %v950, 2
      %v952 = vmax.f32 %v950, %v951
      %v953 = vrot.slane %v952, 1
      %v954 = vmax.f32 %v952, %v953
      %v955 = vsel %vm919, %v279, -inf
      %v956 = vrot.slane %v955, 4
      %v957 = vmax.f32 %v955, %v956
      %v958 = vrot.slane %v957, 2
      %v959 = vmax.f32 %v957, %v958
      %v960 = vrot.slane %v959, 1
      %v961 = vmax.f32 %v959, %v960
      %v962 = vsel %vm919, %v278, -inf
      %v963 = vrot.slane %v962, 4
      %v964 = vmax.f32 %v962, %v963
      %v965 = vrot.slane %v964, 2
      %v966 = vmax.f32 %v964, %v965
      %v967 = vrot.slane %v966, 1
      %v968 = vmax.f32 %v966, %v967
      %v969 = vsel %vm919, %v280, -inf
      %v970 = vrot.slane %v969, 4
      %v971 = vmax.f32 %v969, %v970
      %v972 = vrot.slane %v971, 2
      %v973 = vmax.f32 %v971, %v972
      %v974 = vrot.slane %v973, 1
      %v975 = vmax.f32 %v973, %v974
      %v976 = vsel %vm919, %v288, -inf
      %v977 = vrot.slane %v976, 4
      %v978 = vmax.f32 %v976, %v977
      %v979 = vrot.slane %v978, 2
      %v980 = vmax.f32 %v978, %v979
      %v981 = vrot.slane %v980, 1
      %v982 = vmax.f32 %v980, %v981
      %v983 = vsel %vm919, %v296, -inf
      %v984 = vrot.slane %v983, 4
      %v985 = vmax.f32 %v983, %v984
      %v986 = vrot.slane %v985, 2
      %v987 = vmax.f32 %v985, %v986
      %v988 = vrot.slane %v987, 1
      %v989 = vmax.f32 %v987, %v988
      %v990 = vsel %vm919, %v295, -inf
      %v991 = vrot.slane %v990, 4
      %v992 = vmax.f32 %v990, %v991
      %v993 = vrot.slane %v992, 2
      %v994 = vmax.f32 %v992, %v993
      %v995 = vrot.slane %v994, 1
      %v996 = vmax.f32 %v994, %v995
      %v997 = vsel %vm919, %v297, -inf
      %v998 = vrot.slane %v997, 4
      %v999 = vmax.f32 %v997, %v998
      %v1000 = vrot.slane %v999, 2
      %v1001 = vmax.f32 %v999, %v1000
      %v1002 = vrot.slane %v1001, 1
      %v1003 = vmax.f32 %v1001, %v1002
      %v1004 = vsel %vm919, %v305, -inf
      %v1005 = vrot.slane %v1004, 4
      %v1006 = vmax.f32 %v1004, %v1005
      %v1007 = vrot.slane %v1006, 2
      %v1008 = vmax.f32 %v1006, %v1007
      %v1009 = vrot.slane %v1008, 1
      %v1010 = vmax.f32 %v1008, %v1009
      %v1011 = vsel %vm919, %v313, -inf
      %v1012 = vrot.slane %v1011, 4
      %v1013 = vmax.f32 %v1011, %v1012
      %v1014 = vrot.slane %v1013, 2
      %v1015 = vmax.f32 %v1013, %v1014
      %v1016 = vrot.slane %v1015, 1
      %v1017 = vmax.f32 %v1015, %v1016
      %v1018 = vsel %vm919, %v312, -inf
      %v1019 = vrot.slane %v1018, 4
      %v1020 = vmax.f32 %v1018, %v1019
      %v1021 = vrot.slane %v1020, 2
      %v1022 = vmax.f32 %v1020, %v1021
      %v1023 = vrot.slane %v1022, 1
      %v1024 = vmax.f32 %v1022, %v1023
      %v1025 = vsel %vm919, %v314, -inf
      %v1026 = vrot.slane %v1025, 4
      %v1027 = vmax.f32 %v1025, %v1026
      %v1028 = vrot.slane %v1027, 2
      %v1029 = vmax.f32 %v1027, %v1028
      %v1030 = vrot.slane %v1029, 1
      %v1031 = vmax.f32 %v1029, %v1030
      %v1032 = vsel %vm919, %v322, -inf
      %v1033 = vrot.slane %v1032, 4
      %v1034 = vmax.f32 %v1032, %v1033
      %v1035 = vrot.slane %v1034, 2
      %v1036 = vmax.f32 %v1034, %v1035
      %v1037 = vrot.slane %v1036, 1
      %v1038 = vmax.f32 %v1036, %v1037
      %v1039 = vsel %vm919, %v330, -inf
      %v1040 = vrot.slane %v1039, 4
      %v1041 = vmax.f32 %v1039, %v1040
      %v1042 = vrot.slane %v1041, 2
      %v1043 = vmax.f32 %v1041, %v1042
      %v1044 = vrot.slane %v1043, 1
      %v1045 = vmax.f32 %v1043, %v1044
      %v1046 = vsel %vm919, %v329, -inf
      %v1047 = vrot.slane %v1046, 4
      %v1048 = vmax.f32 %v1046, %v1047
      %v1049 = vrot.slane %v1048, 2
      %v1050 = vmax.f32 %v1048, %v1049
      %v1051 = vrot.slane %v1050, 1
      %v1052 = vmax.f32 %v1050, %v1051
      %v1053 = vsel %vm919, %v331, -inf
      %v1054 = vrot.slane %v1053, 4
      %v1055 = vmax.f32 %v1053, %v1054
      %v1056 = vrot.slane %v1055, 2
      %v1057 = vmax.f32 %v1055, %v1056
      %v1058 = vrot.slane %v1057, 1
      %v1059 = vmax.f32 %v1057, %v1058
      %v1060 = vsel %vm919, %v339, -inf
      %v1061 = vrot.slane %v1060, 4
      %v1062 = vmax.f32 %v1060, %v1061
      %v1063 = vrot.slane %v1062, 2
      %v1064 = vmax.f32 %v1062, %v1063
      %v1065 = vrot.slane %v1064, 1
      %v1066 = vmax.f32 %v1064, %v1065
      %v1067 = vsel %vm919, %v347, -inf
      %v1068 = vrot.slane %v1067, 4
      %v1069 = vmax.f32 %v1067, %v1068
      %v1070 = vrot.slane %v1069, 2
      %v1071 = vmax.f32 %v1069, %v1070
      %v1072 = vrot.slane %v1071, 1
      %v1073 = vmax.f32 %v1071, %v1072
      %v1074 = vsel %vm919, %v346, -inf
      %v1075 = vrot.slane %v1074, 4
      %v1076 = vmax.f32 %v1074, %v1075
      %v1077 = vrot.slane %v1076, 2
      %v1078 = vmax.f32 %v1076, %v1077
      %v1079 = vrot.slane %v1078, 1
      %v1080 = vmax.f32 %v1078, %v1079
      %v1081 = vsel %vm919, %v348, -inf
      %v1082 = vrot.slane %v1081, 4
      %v1083 = vmax.f32 %v1081, %v1082
      %v1084 = vrot.slane %v1083, 2
      %v1085 = vmax.f32 %v1083, %v1084
      %v1086 = vrot.slane %v1085, 1
      %v1087 = vmax.f32 %v1085, %v1086
      %v1088 = vsel %vm919, %v356, -inf
      %v1089 = vrot.slane %v1088, 4
      %v1090 = vmax.f32 %v1088, %v1089
      %v1091 = vrot.slane %v1090, 2
      %v1092 = vmax.f32 %v1090, %v1091
      %v1093 = vrot.slane %v1092, 1
      %v1094 = vmax.f32 %v1092, %v1093
      %v1095 = vsel %vm919, %v364, -inf
      %v1096 = vrot.slane %v1095, 4
      %v1097 = vmax.f32 %v1095, %v1096
      %v1098 = vrot.slane %v1097, 2
      %v1099 = vmax.f32 %v1097, %v1098
      %v1100 = vrot.slane %v1099, 1
      %v1101 = vmax.f32 %v1099, %v1100
      %v1102 = vsel %vm919, %v363, -inf
      %v1103 = vrot.slane %v1102, 4
      %v1104 = vmax.f32 %v1102, %v1103
      %v1105 = vrot.slane %v1104, 2
      %v1106 = vmax.f32 %v1104, %v1105
      %v1107 = vrot.slane %v1106, 1
      %v1108 = vmax.f32 %v1106, %v1107
      %v1109 = vsel %vm919, %v365, -inf
      %v1110 = vrot.slane %v1109, 4
      %v1111 = vmax.f32 %v1109, %v1110
      %v1112 = vrot.slane %v1111, 2
      %v1113 = vmax.f32 %v1111, %v1112
      %v1114 = vrot.slane %v1113, 1
      %v1115 = vmax.f32 %v1113, %v1114
      %v1116 = vsel %vm919, %v373, -inf
      %v1117 = vrot.slane %v1116, 4
      %v1118 = vmax.f32 %v1116, %v1117
      %v1119 = vrot.slane %v1118, 2
      %v1120 = vmax.f32 %v1118, %v1119
      %v1121 = vrot.slane %v1120, 1
      %v1122 = vmax.f32 %v1120, %v1121
      %v1123 = vsel %vm919, %v381, -inf
      %v1124 = vrot.slane %v1123, 4
      %v1125 = vmax.f32 %v1123, %v1124
      %v1126 = vrot.slane %v1125, 2
      %v1127 = vmax.f32 %v1125, %v1126
      %v1128 = vrot.slane %v1127, 1
      %v1129 = vmax.f32 %v1127, %v1128
      %v1130 = vsel %vm919, %v380, -inf
      %v1131 = vrot.slane %v1130, 4
      %v1132 = vmax.f32 %v1130, %v1131
      %v1133 = vrot.slane %v1132, 2
      %v1134 = vmax.f32 %v1132, %v1133
      %v1135 = vrot.slane %v1134, 1
      %v1136 = vmax.f32 %v1134, %v1135
      %v1137 = vsel %vm919, %v382, -inf
      %v1138 = vrot.slane %v1137, 4
      %v1139 = vmax.f32 %v1137, %v1138
      %v1140 = vrot.slane %v1139, 2
      %v1141 = vmax.f32 %v1139, %v1140
      %v1142 = vrot.slane %v1141, 1
      %v1143 = vmax.f32 %v1141, %v1142
      %v1144 = vsel %vm919, %v390, -inf
      %v1145 = vrot.slane %v1144, 4
      %v1146 = vmax.f32 %v1144, %v1145
      %v1147 = vrot.slane %v1146, 2
      %v1148 = vmax.f32 %v1146, %v1147
      %v1149 = vrot.slane %v1148, 1
      %v1150 = vmax.f32 %v1148, %v1149
      %v1151 = vsel %vm919, %v398, -inf
      %v1152 = vrot.slane %v1151, 4
      %v1153 = vmax.f32 %v1151, %v1152
      %v1154 = vrot.slane %v1153, 2
      %v1155 = vmax.f32 %v1153, %v1154
      %v1156 = vrot.slane %v1155, 1
      %v1157 = vmax.f32 %v1155, %v1156
      %v1158 = vsel %vm919, %v397, -inf
      %v1159 = vrot.slane %v1158, 4
      %v1160 = vmax.f32 %v1158, %v1159
      %v1161 = vrot.slane %v1160, 2
      %v1162 = vmax.f32 %v1160, %v1161
      %v1163 = vrot.slane %v1162, 1
      %v1164 = vmax.f32 %v1162, %v1163
      %v1165 = vsel %vm919, %v399, -inf
      %v1166 = vrot.slane %v1165, 4
      %v1167 = vmax.f32 %v1165, %v1166
      %v1168 = vrot.slane %v1167, 2
      %v1169 = vmax.f32 %v1167, %v1168
      %v1170 = vrot.slane %v1169, 1
      %v1171 = vmax.f32 %v1169, %v1170
      %v1172 = vsel %vm919, %v407, -inf
      %v1173 = vrot.slane %v1172, 4
      %v1174 = vmax.f32 %v1172, %v1173
      %v1175 = vrot.slane %v1174, 2
      %v1176 = vmax.f32 %v1174, %v1175
      %v1177 = vrot.slane %v1176, 1
      %v1178 = vmax.f32 %v1176, %v1177
      %v1179 = vsel %vm919, %v415, -inf
      %v1180 = vrot.slane %v1179, 4
      %v1181 = vmax.f32 %v1179, %v1180
      %v1182 = vrot.slane %v1181, 2
      %v1183 = vmax.f32 %v1181, %v1182
      %v1184 = vrot.slane %v1183, 1
      %v1185 = vmax.f32 %v1183, %v1184
      %v1186 = vsel %vm919, %v414, -inf
      %v1187 = vrot.slane %v1186, 4
      %v1188 = vmax.f32 %v1186, %v1187
      %v1189 = vrot.slane %v1188, 2
      %v1190 = vmax.f32 %v1188, %v1189
      %v1191 = vrot.slane %v1190, 1
      %v1192 = vmax.f32 %v1190, %v1191
      %v1193 = vsel %vm919, %v416, -inf
      %v1194 = vrot.slane %v1193, 4
      %v1195 = vmax.f32 %v1193, %v1194
      %v1196 = vrot.slane %v1195, 2
      %v1197 = vmax.f32 %v1195, %v1196
      %v1198 = vrot.slane %v1197, 1
      %v1199 = vmax.f32 %v1197, %v1198
      %v1200 = vsel %vm919, %v424, -inf
      %v1201 = vrot.slane %v1200, 4
      %v1202 = vmax.f32 %v1200, %v1201
      %v1203 = vrot.slane %v1202, 2
      %v1204 = vmax.f32 %v1202, %v1203
      %v1205 = vrot.slane %v1204, 1
      %v1206 = vmax.f32 %v1204, %v1205
      %v1207 = vsel %vm919, %v432, -inf
      %v1208 = vrot.slane %v1207, 4
      %v1209 = vmax.f32 %v1207, %v1208
      %v1210 = vrot.slane %v1209, 2
      %v1211 = vmax.f32 %v1209, %v1210
      %v1212 = vrot.slane %v1211, 1
      %v1213 = vmax.f32 %v1211, %v1212
      %v1214 = vsel %vm919, %v431, -inf
      %v1215 = vrot.slane %v1214, 4
      %v1216 = vmax.f32 %v1214, %v1215
      %v1217 = vrot.slane %v1216, 2
      %v1218 = vmax.f32 %v1216, %v1217
      %v1219 = vrot.slane %v1218, 1
      %v1220 = vmax.f32 %v1218, %v1219
      %v1221 = vsel %vm919, %v433, -inf
      %v1222 = vrot.slane %v1221, 4
      %v1223 = vmax.f32 %v1221, %v1222
      %v1224 = vrot.slane %v1223, 2
      %v1225 = vmax.f32 %v1223, %v1224
      %v1226 = vrot.slane %v1225, 1
      %v1227 = vmax.f32 %v1225, %v1226
      %v1228 = vsel %vm919, %v441, -inf
      %v1229 = vrot.slane %v1228, 4
      %v1230 = vmax.f32 %v1228, %v1229
      %v1231 = vrot.slane %v1230, 2
      %v1232 = vmax.f32 %v1230, %v1231
      %v1233 = vrot.slane %v1232, 1
      %v1234 = vmax.f32 %v1232, %v1233
      %v1235 = vsel %vm919, %v449, -inf
      %v1236 = vrot.slane %v1235, 4
      %v1237 = vmax.f32 %v1235, %v1236
      %v1238 = vrot.slane %v1237, 2
      %v1239 = vmax.f32 %v1237, %v1238
      %v1240 = vrot.slane %v1239, 1
      %v1241 = vmax.f32 %v1239, %v1240
      %v1242 = vsel %vm919, %v448, -inf
      %v1243 = vrot.slane %v1242, 4
      %v1244 = vmax.f32 %v1242, %v1243
      %v1245 = vrot.slane %v1244, 2
      %v1246 = vmax.f32 %v1244, %v1245
      %v1247 = vrot.slane %v1246, 1
      %v1248 = vmax.f32 %v1246, %v1247
      %v1249 = vsel %vm919, %v450, -inf
      %v1250 = vrot.slane %v1249, 4
      %v1251 = vmax.f32 %v1249, %v1250
      %v1252 = vrot.slane %v1251, 2
      %v1253 = vmax.f32 %v1251, %v1252
      %v1254 = vrot.slane %v1253, 1
      %v1255 = vmax.f32 %v1253, %v1254
      %v1256 = vsel %vm919, %v458, -inf
      %v1257 = vrot.slane %v1256, 4
      %v1258 = vmax.f32 %v1256, %v1257
      %v1259 = vrot.slane %v1258, 2
      %v1260 = vmax.f32 %v1258, %v1259
      %v1261 = vrot.slane %v1260, 1
      %v1262 = vmax.f32 %v1260, %v1261
      %v1263 = vsel %vm919, %v466, -inf
      %v1264 = vrot.slane %v1263, 4
      %v1265 = vmax.f32 %v1263, %v1264
      %v1266 = vrot.slane %v1265, 2
      %v1267 = vmax.f32 %v1265, %v1266
      %v1268 = vrot.slane %v1267, 1
      %v1269 = vmax.f32 %v1267, %v1268
      %v1270 = vsel %vm919, %v465, -inf
      %v1271 = vrot.slane %v1270, 4
      %v1272 = vmax.f32 %v1270, %v1271
      %v1273 = vrot.slane %v1272, 2
      %v1274 = vmax.f32 %v1272, %v1273
      %v1275 = vrot.slane %v1274, 1
      %v1276 = vmax.f32 %v1274, %v1275
      %v1277 = vsel %vm919, %v467, -inf
      %v1278 = vrot.slane %v1277, 4
      %v1279 = vmax.f32 %v1277, %v1278
      %v1280 = vrot.slane %v1279, 2
      %v1281 = vmax.f32 %v1279, %v1280
      %v1282 = vrot.slane %v1281, 1
      %v1283 = vmax.f32 %v1281, %v1282
      %v1284 = vsel %vm919, %v475, -inf
      %v1285 = vrot.slane %v1284, 4
      %v1286 = vmax.f32 %v1284, %v1285
      %v1287 = vrot.slane %v1286, 2
      %v1288 = vmax.f32 %v1286, %v1287
      %v1289 = vrot.slane %v1288, 1
      %v1290 = vmax.f32 %v1288, %v1289
      %v1291 = vsel %vm919, %v483, -inf
      %v1292 = vrot.slane %v1291, 4
      %v1293 = vmax.f32 %v1291, %v1292
      %v1294 = vrot.slane %v1293, 2
      %v1295 = vmax.f32 %v1293, %v1294
      %v1296 = vrot.slane %v1295, 1
      %v1297 = vmax.f32 %v1295, %v1296
      %v1298 = vsel %vm919, %v482, -inf
      %v1299 = vrot.slane %v1298, 4
      %v1300 = vmax.f32 %v1298, %v1299
      %v1301 = vrot.slane %v1300, 2
      %v1302 = vmax.f32 %v1300, %v1301
      %v1303 = vrot.slane %v1302, 1
      %v1304 = vmax.f32 %v1302, %v1303
      %v1305 = vsel %vm919, %v484, -inf
      %v1306 = vrot.slane %v1305, 4
      %v1307 = vmax.f32 %v1305, %v1306
      %v1308 = vrot.slane %v1307, 2
      %v1309 = vmax.f32 %v1307, %v1308
      %v1310 = vrot.slane %v1309, 1
      %v1311 = vmax.f32 %v1309, %v1310
      %v1312 = vsel %vm919, %v492, -inf
      %v1313 = vrot.slane %v1312, 4
      %v1314 = vmax.f32 %v1312, %v1313
      %v1315 = vrot.slane %v1314, 2
      %v1316 = vmax.f32 %v1314, %v1315
      %v1317 = vrot.slane %v1316, 1
      %v1318 = vmax.f32 %v1316, %v1317
      %v1319 = vsel %vm919, %v500, -inf
      %v1320 = vrot.slane %v1319, 4
      %v1321 = vmax.f32 %v1319, %v1320
      %v1322 = vrot.slane %v1321, 2
      %v1323 = vmax.f32 %v1321, %v1322
      %v1324 = vrot.slane %v1323, 1
      %v1325 = vmax.f32 %v1323, %v1324
      %v1326 = vsel %vm919, %v499, -inf
      %v1327 = vrot.slane %v1326, 4
      %v1328 = vmax.f32 %v1326, %v1327
      %v1329 = vrot.slane %v1328, 2
      %v1330 = vmax.f32 %v1328, %v1329
      %v1331 = vrot.slane %v1330, 1
      %v1332 = vmax.f32 %v1330, %v1331
      %v1333 = vsel %vm919, %v501, -inf
      %v1334 = vrot.slane %v1333, 4
      %v1335 = vmax.f32 %v1333, %v1334
      %v1336 = vrot.slane %v1335, 2
      %v1337 = vmax.f32 %v1335, %v1336
      %v1338 = vrot.slane %v1337, 1
      %v1339 = vmax.f32 %v1337, %v1338
      %v1340 = vsel %vm919, %v509, -inf
      %v1341 = vrot.slane %v1340, 4
      %v1342 = vmax.f32 %v1340, %v1341
      %v1343 = vrot.slane %v1342, 2
      %v1344 = vmax.f32 %v1342, %v1343
      %v1345 = vrot.slane %v1344, 1
      %v1346 = vmax.f32 %v1344, %v1345
      %v1347 = vsel %vm919, %v517, -inf
      %v1348 = vrot.slane %v1347, 4
      %v1349 = vmax.f32 %v1347, %v1348
      %v1350 = vrot.slane %v1349, 2
      %v1351 = vmax.f32 %v1349, %v1350
      %v1352 = vrot.slane %v1351, 1
      %v1353 = vmax.f32 %v1351, %v1352
      %v1354 = vsel %vm919, %v516, -inf
      %v1355 = vrot.slane %v1354, 4
      %v1356 = vmax.f32 %v1354, %v1355
      %v1357 = vrot.slane %v1356, 2
      %v1358 = vmax.f32 %v1356, %v1357
      %v1359 = vrot.slane %v1358, 1
      %v1360 = vmax.f32 %v1358, %v1359
      %v1361 = vsel %vm919, %v518, -inf
      %v1362 = vrot.slane %v1361, 4
      %v1363 = vmax.f32 %v1361, %v1362
      %v1364 = vrot.slane %v1363, 2
      %v1365 = vmax.f32 %v1363, %v1364
      %v1366 = vrot.slane %v1365, 1
      %v1367 = vmax.f32 %v1365, %v1366
      %v1368 = vsel %vm919, %v526, -inf
      %v1369 = vrot.slane %v1368, 4
      %v1370 = vmax.f32 %v1368, %v1369
      %v1371 = vrot.slane %v1370, 2
      %v1372 = vmax.f32 %v1370, %v1371
      %v1373 = vrot.slane %v1372, 1
      %v1374 = vmax.f32 %v1372, %v1373
      %v1375 = vsel %vm919, %v534, -inf
      %v1376 = vrot.slane %v1375, 4
      %v1377 = vmax.f32 %v1375, %v1376
      %v1378 = vrot.slane %v1377, 2
      %v1379 = vmax.f32 %v1377, %v1378
      %v1380 = vrot.slane %v1379, 1
      %v1381 = vmax.f32 %v1379, %v1380
      %v1382 = vsel %vm919, %v533, -inf
      %v1383 = vrot.slane %v1382, 4
      %v1384 = vmax.f32 %v1382, %v1383
      %v1385 = vrot.slane %v1384, 2
      %v1386 = vmax.f32 %v1384, %v1385
      %v1387 = vrot.slane %v1386, 1
      %v1388 = vmax.f32 %v1386, %v1387
      %v1389 = vsel %vm919, %v535, -inf
      %v1390 = vrot.slane %v1389, 4
      %v1391 = vmax.f32 %v1389, %v1390
      %v1392 = vrot.slane %v1391, 2
      %v1393 = vmax.f32 %v1391, %v1392
      %v1394 = vrot.slane %v1393, 1
      %v1395 = vmax.f32 %v1393, %v1394
      %v1396 = vsel %vm919, %v543, -inf
      %v1397 = vrot.slane %v1396, 4
      %v1398 = vmax.f32 %v1396, %v1397
      %v1399 = vrot.slane %v1398, 2
      %v1400 = vmax.f32 %v1398, %v1399
      %v1401 = vrot.slane %v1400, 1
      %v1402 = vmax.f32 %v1400, %v1401
      %v1403 = vsel %vm919, %v551, -inf
      %v1404 = vrot.slane %v1403, 4
      %v1405 = vmax.f32 %v1403, %v1404
      %v1406 = vrot.slane %v1405, 2
      %v1407 = vmax.f32 %v1405, %v1406
      %v1408 = vrot.slane %v1407, 1
      %v1409 = vmax.f32 %v1407, %v1408
      %v1410 = vsel %vm919, %v550, -inf
      %v1411 = vrot.slane %v1410, 4
      %v1412 = vmax.f32 %v1410, %v1411
      %v1413 = vrot.slane %v1412, 2
      %v1414 = vmax.f32 %v1412, %v1413
      %v1415 = vrot.slane %v1414, 1
      %v1416 = vmax.f32 %v1414, %v1415
      %v1417 = vsel %vm919, %v552, -inf
      %v1418 = vrot.slane %v1417, 4
      %v1419 = vmax.f32 %v1417, %v1418
      %v1420 = vrot.slane %v1419, 2
      %v1421 = vmax.f32 %v1419, %v1420
      %v1422 = vrot.slane %v1421, 1
      %v1423 = vmax.f32 %v1421, %v1422
      %v1424 = vsel %vm919, %v560, -inf
      %v1425 = vrot.slane %v1424, 4
      %v1426 = vmax.f32 %v1424, %v1425
      %v1427 = vrot.slane %v1426, 2
      %v1428 = vmax.f32 %v1426, %v1427
      %v1429 = vrot.slane %v1428, 1
      %v1430 = vmax.f32 %v1428, %v1429
      %v1431 = vsel %vm919, %v568, -inf
      %v1432 = vrot.slane %v1431, 4
      %v1433 = vmax.f32 %v1431, %v1432
      %v1434 = vrot.slane %v1433, 2
      %v1435 = vmax.f32 %v1433, %v1434
      %v1436 = vrot.slane %v1435, 1
      %v1437 = vmax.f32 %v1435, %v1436
      %v1438 = vsel %vm919, %v567, -inf
      %v1439 = vrot.slane %v1438, 4
      %v1440 = vmax.f32 %v1438, %v1439
      %v1441 = vrot.slane %v1440, 2
      %v1442 = vmax.f32 %v1440, %v1441
      %v1443 = vrot.slane %v1442, 1
      %v1444 = vmax.f32 %v1442, %v1443
      %v1445 = vsel %vm919, %v569, -inf
      %v1446 = vrot.slane %v1445, 4
      %v1447 = vmax.f32 %v1445, %v1446
      %v1448 = vrot.slane %v1447, 2
      %v1449 = vmax.f32 %v1447, %v1448
      %v1450 = vrot.slane %v1449, 1
      %v1451 = vmax.f32 %v1449, %v1450
      %v1452 = vsel %vm919, %v577, -inf
      %v1453 = vrot.slane %v1452, 4
      %v1454 = vmax.f32 %v1452, %v1453
      %v1455 = vrot.slane %v1454, 2
      %v1456 = vmax.f32 %v1454, %v1455
      %v1457 = vrot.slane %v1456, 1
      %v1458 = vmax.f32 %v1456, %v1457
      %v1459 = vsel %vm919, %v585, -inf
      %v1460 = vrot.slane %v1459, 4
      %v1461 = vmax.f32 %v1459, %v1460
      %v1462 = vrot.slane %v1461, 2
      %v1463 = vmax.f32 %v1461, %v1462
      %v1464 = vrot.slane %v1463, 1
      %v1465 = vmax.f32 %v1463, %v1464
      %v1466 = vsel %vm919, %v584, -inf
      %v1467 = vrot.slane %v1466, 4
      %v1468 = vmax.f32 %v1466, %v1467
      %v1469 = vrot.slane %v1468, 2
      %v1470 = vmax.f32 %v1468, %v1469
      %v1471 = vrot.slane %v1470, 1
      %v1472 = vmax.f32 %v1470, %v1471
      %v1473 = vsel %vm919, %v586, -inf
      %v1474 = vrot.slane %v1473, 4
      %v1475 = vmax.f32 %v1473, %v1474
      %v1476 = vrot.slane %v1475, 2
      %v1477 = vmax.f32 %v1475, %v1476
      %v1478 = vrot.slane %v1477, 1
      %v1479 = vmax.f32 %v1477, %v1478
      %v1480 = vsel %vm919, %v594, -inf
      %v1481 = vrot.slane %v1480, 4
      %v1482 = vmax.f32 %v1480, %v1481
      %v1483 = vrot.slane %v1482, 2
      %v1484 = vmax.f32 %v1482, %v1483
      %v1485 = vrot.slane %v1484, 1
      %v1486 = vmax.f32 %v1484, %v1485
      %v1487 = vsel %vm919, %v602, -inf
      %v1488 = vrot.slane %v1487, 4
      %v1489 = vmax.f32 %v1487, %v1488
      %v1490 = vrot.slane %v1489, 2
      %v1491 = vmax.f32 %v1489, %v1490
      %v1492 = vrot.slane %v1491, 1
      %v1493 = vmax.f32 %v1491, %v1492
      %v1494 = vsel %vm919, %v601, -inf
      %v1495 = vrot.slane %v1494, 4
      %v1496 = vmax.f32 %v1494, %v1495
      %v1497 = vrot.slane %v1496, 2
      %v1498 = vmax.f32 %v1496, %v1497
      %v1499 = vrot.slane %v1498, 1
      %v1500 = vmax.f32 %v1498, %v1499
      %v1501 = vsel %vm919, %v603, -inf
      %v1502 = vrot.slane %v1501, 4
      %v1503 = vmax.f32 %v1501, %v1502
      %v1504 = vrot.slane %v1503, 2
      %v1505 = vmax.f32 %v1503, %v1504
      %v1506 = vrot.slane %v1505, 1
      %v1507 = vmax.f32 %v1505, %v1506
      %v1508 = vsel %vm919, %v611, -inf
      %v1509 = vrot.slane %v1508, 4
      %v1510 = vmax.f32 %v1508, %v1509
      %v1511 = vrot.slane %v1510, 2
      %v1512 = vmax.f32 %v1510, %v1511
      %v1513 = vrot.slane %v1512, 1
      %v1514 = vmax.f32 %v1512, %v1513
      %v1515 = vsel %vm919, %v619, -inf
      %v1516 = vrot.slane %v1515, 4
      %v1517 = vmax.f32 %v1515, %v1516
      %v1518 = vrot.slane %v1517, 2
      %v1519 = vmax.f32 %v1517, %v1518
      %v1520 = vrot.slane %v1519, 1
      %v1521 = vmax.f32 %v1519, %v1520
      %v1522 = vsel %vm919, %v618, -inf
      %v1523 = vrot.slane %v1522, 4
      %v1524 = vmax.f32 %v1522, %v1523
      %v1525 = vrot.slane %v1524, 2
      %v1526 = vmax.f32 %v1524, %v1525
      %v1527 = vrot.slane %v1526, 1
      %v1528 = vmax.f32 %v1526, %v1527
      %v1529 = vsel %vm919, %v620, -inf
      %v1530 = vrot.slane %v1529, 4
      %v1531 = vmax.f32 %v1529, %v1530
      %v1532 = vrot.slane %v1531, 2
      %v1533 = vmax.f32 %v1531, %v1532
      %v1534 = vrot.slane %v1533, 1
      %v1535 = vmax.f32 %v1533, %v1534
      %v1536 = vsel %vm919, %v628, -inf
      %v1537 = vrot.slane %v1536, 4
      %v1538 = vmax.f32 %v1536, %v1537
      %v1539 = vrot.slane %v1538, 2
      %v1540 = vmax.f32 %v1538, %v1539
      %v1541 = vrot.slane %v1540, 1
      %v1542 = vmax.f32 %v1540, %v1541
      %v1543 = vsel %vm919, %v636, -inf
      %v1544 = vrot.slane %v1543, 4
      %v1545 = vmax.f32 %v1543, %v1544
      %v1546 = vrot.slane %v1545, 2
      %v1547 = vmax.f32 %v1545, %v1546
      %v1548 = vrot.slane %v1547, 1
      %v1549 = vmax.f32 %v1547, %v1548
      %v1550 = vsel %vm919, %v635, -inf
      %v1551 = vrot.slane %v1550, 4
      %v1552 = vmax.f32 %v1550, %v1551
      %v1553 = vrot.slane %v1552, 2
      %v1554 = vmax.f32 %v1552, %v1553
      %v1555 = vrot.slane %v1554, 1
      %v1556 = vmax.f32 %v1554, %v1555
      %v1557 = vsel %vm919, %v637, -inf
      %v1558 = vrot.slane %v1557, 4
      %v1559 = vmax.f32 %v1557, %v1558
      %v1560 = vrot.slane %v1559, 2
      %v1561 = vmax.f32 %v1559, %v1560
      %v1562 = vrot.slane %v1561, 1
      %v1563 = vmax.f32 %v1561, %v1562
      %v1564 = vsel %vm919, %v645, -inf
      %v1565 = vrot.slane %v1564, 4
      %v1566 = vmax.f32 %v1564, %v1565
      %v1567 = vrot.slane %v1566, 2
      %v1568 = vmax.f32 %v1566, %v1567
      %v1569 = vrot.slane %v1568, 1
      %v1570 = vmax.f32 %v1568, %v1569
      %v1571 = vsel %vm919, %v653, -inf
      %v1572 = vrot.slane %v1571, 4
      %v1573 = vmax.f32 %v1571, %v1572
      %v1574 = vrot.slane %v1573, 2
      %v1575 = vmax.f32 %v1573, %v1574
      %v1576 = vrot.slane %v1575, 1
      %v1577 = vmax.f32 %v1575, %v1576
      %v1578 = vsel %vm919, %v652, -inf
      %v1579 = vrot.slane %v1578, 4
      %v1580 = vmax.f32 %v1578, %v1579
      %v1581 = vrot.slane %v1580, 2
      %v1582 = vmax.f32 %v1580, %v1581
      %v1583 = vrot.slane %v1582, 1
      %v1584 = vmax.f32 %v1582, %v1583
      %v1585 = vsel %vm919, %v654, -inf
      %v1586 = vrot.slane %v1585, 4
      %v1587 = vmax.f32 %v1585, %v1586
      %v1588 = vrot.slane %v1587, 2
      %v1589 = vmax.f32 %v1587, %v1588
      %v1590 = vrot.slane %v1589, 1
      %v1591 = vmax.f32 %v1589, %v1590
      %v1592 = vsel %vm919, %v662, -inf
      %v1593 = vrot.slane %v1592, 4
      %v1594 = vmax.f32 %v1592, %v1593
      %v1595 = vrot.slane %v1594, 2
      %v1596 = vmax.f32 %v1594, %v1595
      %v1597 = vrot.slane %v1596, 1
      %v1598 = vmax.f32 %v1596, %v1597
      %v1599 = vsel %vm919, %v670, -inf
      %v1600 = vrot.slane %v1599, 4
      %v1601 = vmax.f32 %v1599, %v1600
      %v1602 = vrot.slane %v1601, 2
      %v1603 = vmax.f32 %v1601, %v1602
      %v1604 = vrot.slane %v1603, 1
      %v1605 = vmax.f32 %v1603, %v1604
      %v1606 = vsel %vm919, %v669, -inf
      %v1607 = vrot.slane %v1606, 4
      %v1608 = vmax.f32 %v1606, %v1607
      %v1609 = vrot.slane %v1608, 2
      %v1610 = vmax.f32 %v1608, %v1609
      %v1611 = vrot.slane %v1610, 1
      %v1612 = vmax.f32 %v1610, %v1611
      %v1613 = vsel %vm919, %v671, -inf
      %v1614 = vrot.slane %v1613, 4
      %v1615 = vmax.f32 %v1613, %v1614
      %v1616 = vrot.slane %v1615, 2
      %v1617 = vmax.f32 %v1615, %v1616
      %v1618 = vrot.slane %v1617, 1
      %v1619 = vmax.f32 %v1617, %v1618
      %v1620 = vsel %vm919, %v679, -inf
      %v1621 = vrot.slane %v1620, 4
      %v1622 = vmax.f32 %v1620, %v1621
      %v1623 = vrot.slane %v1622, 2
      %v1624 = vmax.f32 %v1622, %v1623
      %v1625 = vrot.slane %v1624, 1
      %v1626 = vmax.f32 %v1624, %v1625
      %v1627 = vsel %vm919, %v687, -inf
      %v1628 = vrot.slane %v1627, 4
      %v1629 = vmax.f32 %v1627, %v1628
      %v1630 = vrot.slane %v1629, 2
      %v1631 = vmax.f32 %v1629, %v1630
      %v1632 = vrot.slane %v1631, 1
      %v1633 = vmax.f32 %v1631, %v1632
      %v1634 = vsel %vm919, %v686, -inf
      %v1635 = vrot.slane %v1634, 4
      %v1636 = vmax.f32 %v1634, %v1635
      %v1637 = vrot.slane %v1636, 2
      %v1638 = vmax.f32 %v1636, %v1637
      %v1639 = vrot.slane %v1638, 1
      %v1640 = vmax.f32 %v1638, %v1639
      %v1641 = vsel %vm919, %v688, -inf
      %v1642 = vrot.slane %v1641, 4
      %v1643 = vmax.f32 %v1641, %v1642
      %v1644 = vrot.slane %v1643, 2
      %v1645 = vmax.f32 %v1643, %v1644
      %v1646 = vrot.slane %v1645, 1
      %v1647 = vmax.f32 %v1645, %v1646
      %v1648 = vsel %vm919, %v696, -inf
      %v1649 = vrot.slane %v1648, 4
      %v1650 = vmax.f32 %v1648, %v1649
      %v1651 = vrot.slane %v1650, 2
      %v1652 = vmax.f32 %v1650, %v1651
      %v1653 = vrot.slane %v1652, 1
      %v1654 = vmax.f32 %v1652, %v1653
      %v1655 = vsel %vm919, %v704, -inf
      %v1656 = vrot.slane %v1655, 4
      %v1657 = vmax.f32 %v1655, %v1656
      %v1658 = vrot.slane %v1657, 2
      %v1659 = vmax.f32 %v1657, %v1658
      %v1660 = vrot.slane %v1659, 1
      %v1661 = vmax.f32 %v1659, %v1660
      %v1662 = vsel %vm919, %v703, -inf
      %v1663 = vrot.slane %v1662, 4
      %v1664 = vmax.f32 %v1662, %v1663
      %v1665 = vrot.slane %v1664, 2
      %v1666 = vmax.f32 %v1664, %v1665
      %v1667 = vrot.slane %v1666, 1
      %v1668 = vmax.f32 %v1666, %v1667
      %v1669 = vsel %vm919, %v705, -inf
      %v1670 = vrot.slane %v1669, 4
      %v1671 = vmax.f32 %v1669, %v1670
      %v1672 = vrot.slane %v1671, 2
      %v1673 = vmax.f32 %v1671, %v1672
      %v1674 = vrot.slane %v1673, 1
      %v1675 = vmax.f32 %v1673, %v1674
      %v1676 = vsel %vm919, %v713, -inf
      %v1677 = vrot.slane %v1676, 4
      %v1678 = vmax.f32 %v1676, %v1677
      %v1679 = vrot.slane %v1678, 2
      %v1680 = vmax.f32 %v1678, %v1679
      %v1681 = vrot.slane %v1680, 1
      %v1682 = vmax.f32 %v1680, %v1681
      %v1683 = vsel %vm919, %v721, -inf
      %v1684 = vrot.slane %v1683, 4
      %v1685 = vmax.f32 %v1683, %v1684
      %v1686 = vrot.slane %v1685, 2
      %v1687 = vmax.f32 %v1685, %v1686
      %v1688 = vrot.slane %v1687, 1
      %v1689 = vmax.f32 %v1687, %v1688
      %v1690 = vsel %vm919, %v720, -inf
      %v1691 = vrot.slane %v1690, 4
      %v1692 = vmax.f32 %v1690, %v1691
      %v1693 = vrot.slane %v1692, 2
      %v1694 = vmax.f32 %v1692, %v1693
      %v1695 = vrot.slane %v1694, 1
      %v1696 = vmax.f32 %v1694, %v1695
      %v1697 = vsel %vm919, %v722, -inf
      %v1698 = vrot.slane %v1697, 4
      %v1699 = vmax.f32 %v1697, %v1698
      %v1700 = vrot.slane %v1699, 2
      %v1701 = vmax.f32 %v1699, %v1700
      %v1702 = vrot.slane %v1701, 1
      %v1703 = vmax.f32 %v1701, %v1702
      %v1704 = vsel %vm919, %v730, -inf
      %v1705 = vrot.slane %v1704, 4
      %v1706 = vmax.f32 %v1704, %v1705
      %v1707 = vrot.slane %v1706, 2
      %v1708 = vmax.f32 %v1706, %v1707
      %v1709 = vrot.slane %v1708, 1
      %v1710 = vmax.f32 %v1708, %v1709
      %v1711 = vsel %vm919, %v738, -inf
      %v1712 = vrot.slane %v1711, 4
      %v1713 = vmax.f32 %v1711, %v1712
      %v1714 = vrot.slane %v1713, 2
      %v1715 = vmax.f32 %v1713, %v1714
      %v1716 = vrot.slane %v1715, 1
      %v1717 = vmax.f32 %v1715, %v1716
      %v1718 = vsel %vm919, %v737, -inf
      %v1719 = vrot.slane %v1718, 4
      %v1720 = vmax.f32 %v1718, %v1719
      %v1721 = vrot.slane %v1720, 2
      %v1722 = vmax.f32 %v1720, %v1721
      %v1723 = vrot.slane %v1722, 1
      %v1724 = vmax.f32 %v1722, %v1723
      %v1725 = vsel %vm919, %v739, -inf
      %v1726 = vrot.slane %v1725, 4
      %v1727 = vmax.f32 %v1725, %v1726
      %v1728 = vrot.slane %v1727, 2
      %v1729 = vmax.f32 %v1727, %v1728
      %v1730 = vrot.slane %v1729, 1
      %v1731 = vmax.f32 %v1729, %v1730
      %v1732 = vsel %vm919, %v747, -inf
      %v1733 = vrot.slane %v1732, 4
      %v1734 = vmax.f32 %v1732, %v1733
      %v1735 = vrot.slane %v1734, 2
      %v1736 = vmax.f32 %v1734, %v1735
      %v1737 = vrot.slane %v1736, 1
      %v1738 = vmax.f32 %v1736, %v1737
      %v1739 = vsel %vm919, %v755, -inf
      %v1740 = vrot.slane %v1739, 4
      %v1741 = vmax.f32 %v1739, %v1740
      %v1742 = vrot.slane %v1741, 2
      %v1743 = vmax.f32 %v1741, %v1742
      %v1744 = vrot.slane %v1743, 1
      %v1745 = vmax.f32 %v1743, %v1744
      %v1746 = vsel %vm919, %v754, -inf
      %v1747 = vrot.slane %v1746, 4
      %v1748 = vmax.f32 %v1746, %v1747
      %v1749 = vrot.slane %v1748, 2
      %v1750 = vmax.f32 %v1748, %v1749
      %v1751 = vrot.slane %v1750, 1
      %v1752 = vmax.f32 %v1750, %v1751
      %v1753 = vsel %vm919, %v756, -inf
      %v1754 = vrot.slane %v1753, 4
      %v1755 = vmax.f32 %v1753, %v1754
      %v1756 = vrot.slane %v1755, 2
      %v1757 = vmax.f32 %v1755, %v1756
      %v1758 = vrot.slane %v1757, 1
      %v1759 = vmax.f32 %v1757, %v1758
      %v1760 = vsel %vm919, %v764, -inf
      %v1761 = vrot.slane %v1760, 4
      %v1762 = vmax.f32 %v1760, %v1761
      %v1763 = vrot.slane %v1762, 2
      %v1764 = vmax.f32 %v1762, %v1763
      %v1765 = vrot.slane %v1764, 1
      %v1766 = vmax.f32 %v1764, %v1765
      %v1767 = vsel %vm919, %v772, -inf
      %v1768 = vrot.slane %v1767, 4
      %v1769 = vmax.f32 %v1767, %v1768
      %v1770 = vrot.slane %v1769, 2
      %v1771 = vmax.f32 %v1769, %v1770
      %v1772 = vrot.slane %v1771, 1
      %v1773 = vmax.f32 %v1771, %v1772
      %v1774 = vsel %vm919, %v771, -inf
      %v1775 = vrot.slane %v1774, 4
      %v1776 = vmax.f32 %v1774, %v1775
      %v1777 = vrot.slane %v1776, 2
      %v1778 = vmax.f32 %v1776, %v1777
      %v1779 = vrot.slane %v1778, 1
      %v1780 = vmax.f32 %v1778, %v1779
      %v1781 = vsel %vm919, %v773, -inf
      %v1782 = vrot.slane %v1781, 4
      %v1783 = vmax.f32 %v1781, %v1782
      %v1784 = vrot.slane %v1783, 2
      %v1785 = vmax.f32 %v1783, %v1784
      %v1786 = vrot.slane %v1785, 1
      %v1787 = vmax.f32 %v1785, %v1786
      %v1788 = vsel %vm919, %v781, -inf
      %v1789 = vrot.slane %v1788, 4
      %v1790 = vmax.f32 %v1788, %v1789
      %v1791 = vrot.slane %v1790, 2
      %v1792 = vmax.f32 %v1790, %v1791
      %v1793 = vrot.slane %v1792, 1
      %v1794 = vmax.f32 %v1792, %v1793
      %v1795 = vsel %vm919, %v789, -inf
      %v1796 = vrot.slane %v1795, 4
      %v1797 = vmax.f32 %v1795, %v1796
      %v1798 = vrot.slane %v1797, 2
      %v1799 = vmax.f32 %v1797, %v1798
      %v1800 = vrot.slane %v1799, 1
      %v1801 = vmax.f32 %v1799, %v1800
      %v1802 = vsel %vm919, %v788, -inf
      %v1803 = vrot.slane %v1802, 4
      %v1804 = vmax.f32 %v1802, %v1803
      %v1805 = vrot.slane %v1804, 2
      %v1806 = vmax.f32 %v1804, %v1805
      %v1807 = vrot.slane %v1806, 1
      %v1808 = vmax.f32 %v1806, %v1807
      %v1809 = vsel %vm919, %v790, -inf
      %v1810 = vrot.slane %v1809, 4
      %v1811 = vmax.f32 %v1809, %v1810
      %v1812 = vrot.slane %v1811, 2
      %v1813 = vmax.f32 %v1811, %v1812
      %v1814 = vrot.slane %v1813, 1
      %v1815 = vmax.f32 %v1813, %v1814
      %vm1816 = vcmask 31744
      %v1817 = vsel %vm1816, %v926, -inf
      %v1818 = vsel %vm1816, %v982, -inf
      %v1819 = vmax.f32 %v1817, %v1818
      %v1820 = vsel %vm1816, %v933, -inf
      %v1821 = vsel %vm1816, %v989, -inf
      %v1822 = vmax.f32 %v1820, %v1821
      %v1823 = vsel %vm1816, %v940, -inf
      %v1824 = vsel %vm1816, %v996, -inf
      %v1825 = vmax.f32 %v1823, %v1824
      %v1826 = vsel %vm1816, %v947, -inf
      %v1827 = vsel %vm1816, %v1003, -inf
      %v1828 = vmax.f32 %v1826, %v1827
      %v1829 = vsel %vm1816, %v954, -inf
      %v1830 = vsel %vm1816, %v1010, -inf
      %v1831 = vmax.f32 %v1829, %v1830
      %v1832 = vsel %vm1816, %v961, -inf
      %v1833 = vsel %vm1816, %v1017, -inf
      %v1834 = vmax.f32 %v1832, %v1833
      %v1835 = vsel %vm1816, %v968, -inf
      %v1836 = vsel %vm1816, %v1024, -inf
      %v1837 = vmax.f32 %v1835, %v1836
      %v1838 = vsel %vm1816, %v975, -inf
      %v1839 = vsel %vm1816, %v1031, -inf
      %v1840 = vmax.f32 %v1838, %v1839
      %v1841 = vsel %vm1816, %v1038, -inf
      %v1842 = vsel %vm1816, %v1094, -inf
      %v1843 = vmax.f32 %v1841, %v1842
      %v1844 = vsel %vm1816, %v1045, -inf
      %v1845 = vsel %vm1816, %v1101, -inf
      %v1846 = vmax.f32 %v1844, %v1845
      %v1847 = vsel %vm1816, %v1052, -inf
      %v1848 = vsel %vm1816, %v1108, -inf
      %v1849 = vmax.f32 %v1847, %v1848
      %v1850 = vsel %vm1816, %v1059, -inf
      %v1851 = vsel %vm1816, %v1115, -inf
      %v1852 = vmax.f32 %v1850, %v1851
      %v1853 = vsel %vm1816, %v1066, -inf
      %v1854 = vsel %vm1816, %v1122, -inf
      %v1855 = vmax.f32 %v1853, %v1854
      %v1856 = vsel %vm1816, %v1073, -inf
      %v1857 = vsel %vm1816, %v1129, -inf
      %v1858 = vmax.f32 %v1856, %v1857
      %v1859 = vsel %vm1816, %v1080, -inf
      %v1860 = vsel %vm1816, %v1136, -inf
      %v1861 = vmax.f32 %v1859, %v1860
      %v1862 = vsel %vm1816, %v1087, -inf
      %v1863 = vsel %vm1816, %v1143, -inf
      %v1864 = vmax.f32 %v1862, %v1863
      %v1865 = vsel %vm1816, %v1150, -inf
      %v1866 = vsel %vm1816, %v1206, -inf
      %v1867 = vmax.f32 %v1865, %v1866
      %v1868 = vsel %vm1816, %v1157, -inf
      %v1869 = vsel %vm1816, %v1213, -inf
      %v1870 = vmax.f32 %v1868, %v1869
      %v1871 = vsel %vm1816, %v1164, -inf
      %v1872 = vsel %vm1816, %v1220, -inf
      %v1873 = vmax.f32 %v1871, %v1872
      %v1874 = vsel %vm1816, %v1171, -inf
      %v1875 = vsel %vm1816, %v1227, -inf
      %v1876 = vmax.f32 %v1874, %v1875
      %v1877 = vsel %vm1816, %v1178, -inf
      %v1878 = vsel %vm1816, %v1234, -inf
      %v1879 = vmax.f32 %v1877, %v1878
      %v1880 = vsel %vm1816, %v1185, -inf
      %v1881 = vsel %vm1816, %v1241, -inf
      %v1882 = vmax.f32 %v1880, %v1881
      %v1883 = vsel %vm1816, %v1192, -inf
      %v1884 = vsel %vm1816, %v1248, -inf
      %v1885 = vmax.f32 %v1883, %v1884
      %v1886 = vsel %vm1816, %v1199, -inf
      %v1887 = vsel %vm1816, %v1255, -inf
      %v1888 = vmax.f32 %v1886, %v1887
      %v1889 = vsel %vm1816, %v1262, -inf
      %v1890 = vsel %vm1816, %v1318, -inf
      %v1891 = vmax.f32 %v1889, %v1890
      %v1892 = vsel %vm1816, %v1269, -inf
      %v1893 = vsel %vm1816, %v1325, -inf
      %v1894 = vmax.f32 %v1892, %v1893
      %v1895 = vsel %vm1816, %v1276, -inf
      %v1896 = vsel %vm1816, %v1332, -inf
      %v1897 = vmax.f32 %v1895, %v1896
      %v1898 = vsel %vm1816, %v1283, -inf
      %v1899 = vsel %vm1816, %v1339, -inf
      %v1900 = vmax.f32 %v1898, %v1899
      %v1901 = vsel %vm1816, %v1290, -inf
      %v1902 = vsel %vm1816, %v1346, -inf
      %v1903 = vmax.f32 %v1901, %v1902
      %v1904 = vsel %vm1816, %v1297, -inf
      %v1905 = vsel %vm1816, %v1353, -inf
      %v1906 = vmax.f32 %v1904, %v1905
      %v1907 = vsel %vm1816, %v1304, -inf
      %v1908 = vsel %vm1816, %v1360, -inf
      %v1909 = vmax.f32 %v1907, %v1908
      %v1910 = vsel %vm1816, %v1311, -inf
      %v1911 = vsel %vm1816, %v1367, -inf
      %v1912 = vmax.f32 %v1910, %v1911
      %v1913 = vsel %vm1816, %v1374, -inf
      %v1914 = vsel %vm1816, %v1430, -inf
      %v1915 = vmax.f32 %v1913, %v1914
      %v1916 = vsel %vm1816, %v1381, -inf
      %v1917 = vsel %vm1816, %v1437, -inf
      %v1918 = vmax.f32 %v1916, %v1917
      %v1919 = vsel %vm1816, %v1388, -inf
      %v1920 = vsel %vm1816, %v1444, -inf
      %v1921 = vmax.f32 %v1919, %v1920
      %v1922 = vsel %vm1816, %v1395, -inf
      %v1923 = vsel %vm1816, %v1451, -inf
      %v1924 = vmax.f32 %v1922, %v1923
      %v1925 = vsel %vm1816, %v1402, -inf
      %v1926 = vsel %vm1816, %v1458, -inf
      %v1927 = vmax.f32 %v1925, %v1926
      %v1928 = vsel %vm1816, %v1409, -inf
      %v1929 = vsel %vm1816, %v1465, -inf
      %v1930 = vmax.f32 %v1928, %v1929
      %v1931 = vsel %vm1816, %v1416, -inf
      %v1932 = vsel %vm1816, %v1472, -inf
      %v1933 = vmax.f32 %v1931, %v1932
      %v1934 = vsel %vm1816, %v1423, -inf
      %v1935 = vsel %vm1816, %v1479, -inf
      %v1936 = vmax.f32 %v1934, %v1935
      %v1937 = vsel %vm1816, %v1486, -inf
      %v1938 = vsel %vm1816, %v1542, -inf
      %v1939 = vmax.f32 %v1937, %v1938
      %v1940 = vsel %vm1816, %v1493, -inf
      %v1941 = vsel %vm1816, %v1549, -inf
      %v1942 = vmax.f32 %v1940, %v1941
      %v1943 = vsel %vm1816, %v1500, -inf
      %v1944 = vsel %vm1816, %v1556, -inf
      %v1945 = vmax.f32 %v1943, %v1944
      %v1946 = vsel %vm1816, %v1507, -inf
      %v1947 = vsel %vm1816, %v1563, -inf
      %v1948 = vmax.f32 %v1946, %v1947
      %v1949 = vsel %vm1816, %v1514, -inf
      %v1950 = vsel %vm1816, %v1570, -inf
      %v1951 = vmax.f32 %v1949, %v1950
      %v1952 = vsel %vm1816, %v1521, -inf
      %v1953 = vsel %vm1816, %v1577, -inf
      %v1954 = vmax.f32 %v1952, %v1953
      %v1955 = vsel %vm1816, %v1528, -inf
      %v1956 = vsel %vm1816, %v1584, -inf
      %v1957 = vmax.f32 %v1955, %v1956
      %v1958 = vsel %vm1816, %v1535, -inf
      %v1959 = vsel %vm1816, %v1591, -inf
      %v1960 = vmax.f32 %v1958, %v1959
      %v1961 = vsel %vm1816, %v1598, -inf
      %v1962 = vsel %vm1816, %v1654, -inf
      %v1963 = vmax.f32 %v1961, %v1962
      %v1964 = vsel %vm1816, %v1605, -inf
      %v1965 = vsel %vm1816, %v1661, -inf
      %v1966 = vmax.f32 %v1964, %v1965
      %v1967 = vsel %vm1816, %v1612, -inf
      %v1968 = vsel %vm1816, %v1668, -inf
      %v1969 = vmax.f32 %v1967, %v1968
      %v1970 = vsel %vm1816, %v1619, -inf
      %v1971 = vsel %vm1816, %v1675, -inf
      %v1972 = vmax.f32 %v1970, %v1971
      %v1973 = vsel %vm1816, %v1626, -inf
      %v1974 = vsel %vm1816, %v1682, -inf
      %v1975 = vmax.f32 %v1973, %v1974
      %v1976 = vsel %vm1816, %v1633, -inf
      %v1977 = vsel %vm1816, %v1689, -inf
      %v1978 = vmax.f32 %v1976, %v1977
      %v1979 = vsel %vm1816, %v1640, -inf
      %v1980 = vsel %vm1816, %v1696, -inf
      %v1981 = vmax.f32 %v1979, %v1980
      %v1982 = vsel %vm1816, %v1647, -inf
      %v1983 = vsel %vm1816, %v1703, -inf
      %v1984 = vmax.f32 %v1982, %v1983
      %v1985 = vsel %vm1816, %v1710, -inf
      %v1986 = vsel %vm1816, %v1766, -inf
      %v1987 = vmax.f32 %v1985, %v1986
      %v1988 = vsel %vm1816, %v1717, -inf
      %v1989 = vsel %vm1816, %v1773, -inf
      %v1990 = vmax.f32 %v1988, %v1989
      %v1991 = vsel %vm1816, %v1724, -inf
      %v1992 = vsel %vm1816, %v1780, -inf
      %v1993 = vmax.f32 %v1991, %v1992
      %v1994 = vsel %vm1816, %v1731, -inf
      %v1995 = vsel %vm1816, %v1787, -inf
      %v1996 = vmax.f32 %v1994, %v1995
      %v1997 = vsel %vm1816, %v1738, -inf
      %v1998 = vsel %vm1816, %v1794, -inf
      %v1999 = vmax.f32 %v1997, %v1998
      %v2000 = vsel %vm1816, %v1745, -inf
      %v2001 = vsel %vm1816, %v1801, -inf
      %v2002 = vmax.f32 %v2000, %v2001
      %v2003 = vsel %vm1816, %v1752, -inf
      %v2004 = vsel %vm1816, %v1808, -inf
      %v2005 = vmax.f32 %v2003, %v2004
      %v2006 = vsel %vm1816, %v1759, -inf
      %v2007 = vsel %vm1816, %v1815, -inf
      %v2008 = vmax.f32 %v2006, %v2007
      %vm2073 = vcmask 1041409
      %v2074 = vsel %vm2073, %v1822, %v1819
      %vm2075 = vcmask 1042434
      %v2076 = vsel %vm2075, %v1825, %v2074
      %vm2077 = vcmask 1043459
      %v2078 = vsel %vm2077, %v1828, %v2076
      %vm2079 = vcmask 1044484
      %v2080 = vsel %vm2079, %v1831, %v2078
      %vm2081 = vcmask 1045509
      %v2082 = vsel %vm2081, %v1834, %v2080
      %vm2083 = vcmask 1046534
      %v2084 = vsel %vm2083, %v1837, %v2082
      %vm2085 = vcmask 1047559
      %v2086 = vsel %vm2085, %v1840, %v2084
      %v2087 = vsel %vm2073, %v1846, %v1843
      %v2088 = vsel %vm2075, %v1849, %v2087
      %v2089 = vsel %vm2077, %v1852, %v2088
      %v2090 = vsel %vm2079, %v1855, %v2089
      %v2091 = vsel %vm2081, %v1858, %v2090
      %v2092 = vsel %vm2083, %v1861, %v2091
      %v2093 = vsel %vm2085, %v1864, %v2092
      %v2094 = vsel %vm2073, %v1870, %v1867
      %v2095 = vsel %vm2075, %v1873, %v2094
      %v2096 = vsel %vm2077, %v1876, %v2095
      %v2097 = vsel %vm2079, %v1879, %v2096
      %v2098 = vsel %vm2081, %v1882, %v2097
      %v2099 = vsel %vm2083, %v1885, %v2098
      %v2100 = vsel %vm2085, %v1888, %v2099
      %v2101 = vsel %vm2073, %v1894, %v1891
      %v2102 = vsel %vm2075, %v1897, %v2101
      %v2103 = vsel %vm2077, %v1900, %v2102
      %v2104 = vsel %vm2079, %v1903, %v2103
      %v2105 = vsel %vm2081, %v1906, %v2104
      %v2106 = vsel %vm2083, %v1909, %v2105
      %v2107 = vsel %vm2085, %v1912, %v2106
      %v2108 = vsel %vm2073, %v1918, %v1915
      %v2109 = vsel %vm2075, %v1921, %v2108
      %v2110 = vsel %vm2077, %v1924, %v2109
      %v2111 = vsel %vm2079, %v1927, %v2110
      %v2112 = vsel %vm2081, %v1930, %v2111
      %v2113 = vsel %vm2083, %v1933, %v2112
      %v2114 = vsel %vm2085, %v1936, %v2113
      %v2115 = vsel %vm2073, %v1942, %v1939
      %v2116 = vsel %vm2075, %v1945, %v2115
      %v2117 = vsel %vm2077, %v1948, %v2116
      %v2118 = vsel %vm2079, %v1951, %v2117
      %v2119 = vsel %vm2081, %v1954, %v2118
      %v2120 = vsel %vm2083, %v1957, %v2119
      %v2121 = vsel %vm2085, %v1960, %v2120
      %v2122 = vsel %vm2073, %v1966, %v1963
      %v2123 = vsel %vm2075, %v1969, %v2122
      %v2124 = vsel %vm2077, %v1972, %v2123
      %v2125 = vsel %vm2079, %v1975, %v2124
      %v2126 = vsel %vm2081, %v1978, %v2125
      %v2127 = vsel %vm2083, %v1981, %v2126
      %v2128 = vsel %vm2085, %v1984, %v2127
      %v2129 = vsel %vm2073, %v1990, %v1987
      %v2130 = vsel %vm2075, %v1993, %v2129
      %v2131 = vsel %vm2077, %v1996, %v2130
      %v2132 = vsel %vm2079, %v1999, %v2131
      %v2133 = vsel %vm2081, %v2002, %v2132
      %v2134 = vsel %vm2083, %v2005, %v2133
      %v2135 = vsel %vm2085, %v2008, %v2134
      %v2137 = vrot.slane 0.0, 7
      %v2138 = vrot.slane %v2086, 7
      %v2139 = vrot.slane %v2093, 7
      %v2140 = vrot.slane %v2100, 7
      %v2141 = vrot.slane %v2107, 7
      %v2142 = vrot.slane %v2114, 7
      %v2143 = vrot.slane %v2121, 7
      %v2144 = vrot.slane %v2128, 7
      %v2145 = vrot.slane %v2135, 7
      %vm2155 = vcmask 1040384
      %v2156 = vsel %vm2155, 0.0, %v2137
      %v2157 = vsel %vm2155, 0.0, %v2138
      %v2158 = vsel %vm2155, 0.0, %v2139
      %v2159 = vsel %vm2155, 0.0, %v2140
      %v2160 = vsel %vm2155, 0.0, %v2141
      %v2161 = vsel %vm2155, 0.0, %v2142
      %v2162 = vsel %vm2155, 0.0, %v2143
      %v2163 = vsel %vm2155, 0.0, %v2144
      %v2164 = vsel %vm2155, 0.0, %v2145
      %v2165 = vsel %vm2155, %v2137, 0.0
      %v2166 = vsel %vm2155, %v2138, 0.0
      %v2167 = vsel %vm2155, %v2139, 0.0
      %v2168 = vsel %vm2155, %v2140, 0.0
      %v2169 = vsel %vm2155, %v2141, 0.0
      %v2170 = vsel %vm2155, %v2142, 0.0
      %v2171 = vsel %vm2155, %v2143, 0.0
      %v2172 = vsel %vm2155, %v2144, 0.0
      %v2173 = vsel %vm2155, %v2145, 0.0
      %vm2190 = vcmask 1046528
      %v2191 = vrot.slane %v2156, 1
      %v2192 = vrot.slane %v2165, 1
      %v2193 = vsel %vm2190, %v2191, %v2192
      %v2194 = vrot.slane %v2157, 1
      %v2195 = vrot.slane %v2166, 1
      %v2196 = vsel %vm2190, %v2194, %v2195
      %v2197 = vrot.slane %v2158, 1
      %v2198 = vrot.slane %v2167, 1
      %v2199 = vsel %vm2190, %v2197, %v2198
      %v2200 = vrot.slane %v2159, 1
      %v2201 = vrot.slane %v2168, 1
      %v2202 = vsel %vm2190, %v2200, %v2201
      %v2203 = vrot.slane %v2160, 1
      %v2204 = vrot.slane %v2169, 1
      %v2205 = vsel %vm2190, %v2203, %v2204
      %v2206 = vrot.slane %v2161, 1
      %v2207 = vrot.slane %v2170, 1
      %v2208 = vsel %vm2190, %v2206, %v2207
      %v2209 = vrot.slane %v2162, 1
      %v2210 = vrot.slane %v2171, 1
      %v2211 = vsel %vm2190, %v2209, %v2210
      %v2212 = vrot.slane %v2163, 1
      %v2213 = vrot.slane %v2172, 1
      %v2214 = vsel %vm2190, %v2212, %v2213
      %2215 = vrot.lane.b32.xlu0 %v2193, 4
      %v2216 = vpop.permute.xlu0 %2215
      %2217 = vrot.lane.b32.xlu0 %v2196, 4
      %v2218 = vpop.permute.xlu0 %2217
      %2219 = vrot.lane.b32.xlu0 %v2199, 4
      %v2220 = vpop.permute.xlu0 %2219
      %2221 = vrot.lane.b32.xlu0 %v2202, 4
      %v2222 = vpop.permute.xlu0 %2221
      %2223 = vrot.lane.b32.xlu0 %v2205, 4
      %v2224 = vpop.permute.xlu0 %2223
      %2225 = vrot.lane.b32.xlu0 %v2208, 4
      %v2226 = vpop.permute.xlu0 %2225
      %2227 = vrot.lane.b32.xlu0 %v2211, 4
      %v2228 = vpop.permute.xlu0 %2227
      %2229 = vrot.lane.b32.xlu0 %v2214, 4
      %v2230 = vpop.permute.xlu0 %2229
      %vm2239 = vcmask 1045504
      %v2240 = vrot.slane %v2156, 2
      %v2241 = vrot.slane %v2165, 2
      %v2242 = vsel %vm2239, %v2240, %v2241
      %v2243 = vrot.slane %v2157, 2
      %v2244 = vrot.slane %v2166, 2
      %v2245 = vsel %vm2239, %v2243, %v2244
      %v2246 = vrot.slane %v2158, 2
      %v2247 = vrot.slane %v2167, 2
      %v2248 = vsel %vm2239, %v2246, %v2247
      %v2249 = vrot.slane %v2159, 2
      %v2250 = vrot.slane %v2168, 2
      %v2251 = vsel %vm2239, %v2249, %v2250
      %v2252 = vrot.slane %v2160, 2
      %v2253 = vrot.slane %v2169, 2
      %v2254 = vsel %vm2239, %v2252, %v2253
      %v2255 = vrot.slane %v2161, 2
      %v2256 = vrot.slane %v2170, 2
      %v2257 = vsel %vm2239, %v2255, %v2256
      %v2258 = vrot.slane %v2162, 2
      %v2259 = vrot.slane %v2171, 2
      %v2260 = vsel %vm2239, %v2258, %v2259
      %v2261 = vrot.slane %v2163, 2
      %v2262 = vrot.slane %v2172, 2
      %v2263 = vsel %vm2239, %v2261, %v2262
      %2264 = vrot.lane.b32.xlu0 %v2242, 8
      %v2265 = vpop.permute.xlu0 %2264
      %2266 = vrot.lane.b32.xlu0 %v2245, 8
      %v2267 = vpop.permute.xlu0 %2266
      %2268 = vrot.lane.b32.xlu0 %v2248, 8
      %v2269 = vpop.permute.xlu0 %2268
      %2270 = vrot.lane.b32.xlu0 %v2251, 8
      %v2271 = vpop.permute.xlu0 %2270
      %2272 = vrot.lane.b32.xlu0 %v2254, 8
      %v2273 = vpop.permute.xlu0 %2272
      %2274 = vrot.lane.b32.xlu0 %v2257, 8
      %v2275 = vpop.permute.xlu0 %2274
      %2276 = vrot.lane.b32.xlu0 %v2260, 8
      %v2277 = vpop.permute.xlu0 %2276
      %2278 = vrot.lane.b32.xlu0 %v2263, 8
      %v2279 = vpop.permute.xlu0 %2278
      %2289 = vrot.lane.b32.xlu0 %v2157, 12
      %v2290 = vpop.permute.xlu0 %2289
      %2291 = vrot.lane.b32.xlu0 %v2158, 12
      %v2292 = vpop.permute.xlu0 %2291
      %2293 = vrot.lane.b32.xlu0 %v2159, 12
      %v2294 = vpop.permute.xlu0 %2293
      %2295 = vrot.lane.b32.xlu0 %v2160, 12
      %v2296 = vpop.permute.xlu0 %2295
      %2297 = vrot.lane.b32.xlu0 %v2161, 12
      %v2298 = vpop.permute.xlu0 %2297
      %2299 = vrot.lane.b32.xlu0 %v2162, 12
      %v2300 = vpop.permute.xlu0 %2299
      %2301 = vrot.lane.b32.xlu0 %v2163, 12
      %v2302 = vpop.permute.xlu0 %2301
      %2303 = vrot.lane.b32.xlu0 %v2164, 12
      %v2304 = vpop.permute.xlu0 %2303
      %v2314 = vrot.slane %v2164, 1
      %v2315 = vrot.slane %v2173, 1
      %v2316 = vsel %vm2190, %v2314, %v2315
      %2317 = vrot.lane.b32.xlu0 %v2196, 16
      %v2318 = vpop.permute.xlu0 %2317
      %2319 = vrot.lane.b32.xlu0 %v2199, 16
      %v2320 = vpop.permute.xlu0 %2319
      %2321 = vrot.lane.b32.xlu0 %v2202, 16
      %v2322 = vpop.permute.xlu0 %2321
      %2323 = vrot.lane.b32.xlu0 %v2205, 16
      %v2324 = vpop.permute.xlu0 %2323
      %2325 = vrot.lane.b32.xlu0 %v2208, 16
      %v2326 = vpop.permute.xlu0 %2325
      %2327 = vrot.lane.b32.xlu0 %v2211, 16
      %v2328 = vpop.permute.xlu0 %2327
      %2329 = vrot.lane.b32.xlu0 %v2214, 16
      %v2330 = vpop.permute.xlu0 %2329
      %2331 = vrot.lane.b32.xlu0 %v2316, 16
      %v2332 = vpop.permute.xlu0 %2331
      %v2341 = vrot.slane %v2164, 2
      %v2342 = vrot.slane %v2173, 2
      %v2343 = vsel %vm2239, %v2341, %v2342
      %2344 = vrot.lane.b32.xlu0 %v2245, 20
      %v2345 = vpop.permute.xlu0 %2344
      %2346 = vrot.lane.b32.xlu0 %v2248, 20
      %v2347 = vpop.permute.xlu0 %2346
      %2348 = vrot.lane.b32.xlu0 %v2251, 20
      %v2349 = vpop.permute.xlu0 %2348
      %2350 = vrot.lane.b32.xlu0 %v2254, 20
      %v2351 = vpop.permute.xlu0 %2350
      %2352 = vrot.lane.b32.xlu0 %v2257, 20
      %v2353 = vpop.permute.xlu0 %2352
      %2354 = vrot.lane.b32.xlu0 %v2260, 20
      %v2355 = vpop.permute.xlu0 %2354
      %2356 = vrot.lane.b32.xlu0 %v2263, 20
      %v2357 = vpop.permute.xlu0 %2356
      %2358 = vrot.lane.b32.xlu0 %v2343, 20
      %v2359 = vpop.permute.xlu0 %2358
      %2368 = vrot.lane.b32.xlu0 %v2158, 24
      %v2369 = vpop.permute.xlu0 %2368
      %2370 = vrot.lane.b32.xlu0 %v2159, 24
      %v2371 = vpop.permute.xlu0 %2370
      %2372 = vrot.lane.b32.xlu0 %v2160, 24
      %v2373 = vpop.permute.xlu0 %2372
      %2374 = vrot.lane.b32.xlu0 %v2161, 24
      %v2375 = vpop.permute.xlu0 %2374
      %2376 = vrot.lane.b32.xlu0 %v2162, 24
      %v2377 = vpop.permute.xlu0 %2376
      %2378 = vrot.lane.b32.xlu0 %v2163, 24
      %v2379 = vpop.permute.xlu0 %2378
      %2380 = vrot.lane.b32.xlu0 %v2164, 24
      %v2381 = vpop.permute.xlu0 %2380
      %2382 = vrot.lane.b32.xlu0 %v2156, 24
      %v2383 = vpop.permute.xlu0 %2382
      %2392 = vrot.lane.b32.xlu0 %v2199, 28
      %v2393 = vpop.permute.xlu0 %2392
      %2394 = vrot.lane.b32.xlu0 %v2202, 28
      %v2395 = vpop.permute.xlu0 %2394
      %2396 = vrot.lane.b32.xlu0 %v2205, 28
      %v2397 = vpop.permute.xlu0 %2396
      %2398 = vrot.lane.b32.xlu0 %v2208, 28
      %v2399 = vpop.permute.xlu0 %2398
      %2400 = vrot.lane.b32.xlu0 %v2211, 28
      %v2401 = vpop.permute.xlu0 %2400
      %2402 = vrot.lane.b32.xlu0 %v2214, 28
      %v2403 = vpop.permute.xlu0 %2402
      %2404 = vrot.lane.b32.xlu0 %v2316, 28
      %v2405 = vpop.permute.xlu0 %2404
      %2406 = vrot.lane.b32.xlu0 %v2193, 28
      %v2407 = vpop.permute.xlu0 %2406
      %2416 = vrot.lane.b32.xlu0 %v2248, 32
      %v2417 = vpop.permute.xlu0 %2416
      %2418 = vrot.lane.b32.xlu0 %v2251, 32
      %v2419 = vpop.permute.xlu0 %2418
      %2420 = vrot.lane.b32.xlu0 %v2254, 32
      %v2421 = vpop.permute.xlu0 %2420
      %2422 = vrot.lane.b32.xlu0 %v2257, 32
      %v2423 = vpop.permute.xlu0 %2422
      %2424 = vrot.lane.b32.xlu0 %v2260, 32
      %v2425 = vpop.permute.xlu0 %2424
      %2426 = vrot.lane.b32.xlu0 %v2263, 32
      %v2427 = vpop.permute.xlu0 %2426
      %2428 = vrot.lane.b32.xlu0 %v2343, 32
      %v2429 = vpop.permute.xlu0 %2428
      %2430 = vrot.lane.b32.xlu0 %v2242, 32
      %v2431 = vpop.permute.xlu0 %2430
      %v2440 = vsel %vm1816, %v2156, %v2216
      %v2441 = vsel %vm1816, %v2157, %v2218
      %v2442 = vsel %vm1816, %v2158, %v2220
      %v2443 = vsel %vm1816, %v2159, %v2222
      %v2444 = vsel %vm1816, %v2160, %v2224
      %v2445 = vsel %vm1816, %v2161, %v2226
      %v2446 = vsel %vm1816, %v2162, %v2228
      %v2447 = vsel %vm1816, %v2163, %v2230
      %vm2448 = vcmask 64512
      %v2449 = vsel %vm2448, %v2440, %v2265
      %v2450 = vsel %vm2448, %v2441, %v2267
      %v2451 = vsel %vm2448, %v2442, %v2269
      %v2452 = vsel %vm2448, %v2443, %v2271
      %v2453 = vsel %vm2448, %v2444, %v2273
      %v2454 = vsel %vm2448, %v2445, %v2275
      %v2455 = vsel %vm2448, %v2446, %v2277
      %v2456 = vsel %vm2448, %v2447, %v2279
      %vm2457 = vcmask 97280
      %v2458 = vsel %vm2457, %v2449, %v2290
      %v2459 = vsel %vm2457, %v2450, %v2292
      %v2460 = vsel %vm2457, %v2451, %v2294
      %v2461 = vsel %vm2457, %v2452, %v2296
      %v2462 = vsel %vm2457, %v2453, %v2298
      %v2463 = vsel %vm2457, %v2454, %v2300
      %v2464 = vsel %vm2457, %v2455, %v2302
      %v2465 = vsel %vm2457, %v2456, %v2304
      %vm2466 = vcmask 130048
      %v2467 = vsel %vm2466, %v2458, %v2318
      %v2468 = vsel %vm2466, %v2459, %v2320
      %v2469 = vsel %vm2466, %v2460, %v2322
      %v2470 = vsel %vm2466, %v2461, %v2324
      %v2471 = vsel %vm2466, %v2462, %v2326
      %v2472 = vsel %vm2466, %v2463, %v2328
      %v2473 = vsel %vm2466, %v2464, %v2330
      %v2474 = vsel %vm2466, %v2465, %v2332
      %vm2475 = vcmask 162816
      %v2476 = vsel %vm2475, %v2467, %v2345
      %v2477 = vsel %vm2475, %v2468, %v2347
      %v2478 = vsel %vm2475, %v2469, %v2349
      %v2479 = vsel %vm2475, %v2470, %v2351
      %v2480 = vsel %vm2475, %v2471, %v2353
      %v2481 = vsel %vm2475, %v2472, %v2355
      %v2482 = vsel %vm2475, %v2473, %v2357
      %v2483 = vsel %vm2475, %v2474, %v2359
      %vm2484 = vcmask 195584
      %v2485 = vsel %vm2484, %v2476, %v2369
      %v2486 = vsel %vm2484, %v2477, %v2371
      %v2487 = vsel %vm2484, %v2478, %v2373
      %v2488 = vsel %vm2484, %v2479, %v2375
      %v2489 = vsel %vm2484, %v2480, %v2377
      %v2490 = vsel %vm2484, %v2481, %v2379
      %v2491 = vsel %vm2484, %v2482, %v2381
      %v2492 = vsel %vm2484, %v2483, %v2383
      %vm2493 = vcmask 228352
      %v2494 = vsel %vm2493, %v2485, %v2393
      %v2495 = vsel %vm2493, %v2486, %v2395
      %v2496 = vsel %vm2493, %v2487, %v2397
      %v2497 = vsel %vm2493, %v2488, %v2399
      %v2498 = vsel %vm2493, %v2489, %v2401
      %v2499 = vsel %vm2493, %v2490, %v2403
      %v2500 = vsel %vm2493, %v2491, %v2405
      %v2501 = vsel %vm2493, %v2492, %v2407
      %vm2502 = vcmask 261120
      %v2503 = vsel %vm2502, %v2494, %v2417
      %v2504 = vsel %vm2502, %v2495, %v2419
      %v2505 = vsel %vm2502, %v2496, %v2421
      %v2506 = vsel %vm2502, %v2497, %v2423
      %v2507 = vsel %vm2502, %v2498, %v2425
      %v2508 = vsel %vm2502, %v2499, %v2427
      %v2509 = vsel %vm2502, %v2500, %v2429
      %v2510 = vsel %vm2502, %v2501, %v2431
      %v2511 = vpack.c.bf16 %v2504, %v2503
      %v2512 = vpack.c.bf16 %v2506, %v2505
      %v2513 = vpack.c.bf16 %v2508, %v2507
      %v2514 = vpack.c.bf16 %v2510, %v2509
      %v2515 = vld [vmem:[%s1] sm:$0xf]
      %v2516 = vld [vmem:[%s1 + $0x4] sm:$0xf]
      %v2517 = vld [vmem:[%s1 + $0x8] sm:$0xf]
      %v2518 = vld [vmem:[%s1 + $0xc] sm:$0xf]
      %v2519 = vld [vmem:[%s1 + $0x10] sm:$0x3]
      %v2525 = vunpack.c.l.b16 %v2515
      %v2526 = vunpack.c.l.b16 %v2516
      %v2527 = vunpack.c.l.b16 %v2517
      %v2528 = vunpack.c.l.b16 %v2518
      %v2529 = vunpack.c.l.b16 %v2519
      %v2530 = vpack.c.b16 %v2526, %v2525
      %v2531 = vpack.c.b16 %v2528, %v2527
      %v2532 = vpack.c.b16 %v2529, %v2529
      %vm2535 = vcmask 293888
      %v2537 = vsel %vm2535, %v2511, 0
      %v2540 = vsel %vm2535, %v2512, 0
      %v2543 = vsel %vm2535, %v2513, 0
      %v2546 = vsel %vm2535, %v2514, 0
      %vm2548 = vcmask 1041408
      %v2550 = vsel %vm2548, %v2532, 0
      %2552 = vmatprep.subr.bf16.mxu0 0
      %2553 = vmatpush1.bf16.msra.mxu0 0
      %2554 = vmatprep.subr.bf16.mxu0 0
      %2555 = vmatpush1.bf16.msra.mxu0 0
      %2556 = vmatprep.subr.bf16.mxu0 0
      %2557 = vmatpush1.bf16.msra.mxu0 0
      %2558 = vmatprep.subr.bf16.mxu0 0
      %2559 = vmatpush1.bf16.msra.mxu0 0
      %2560 = vmatprep.subr.bf16.mxu0 0
      %2561 = vmatpush1.bf16.msra.mxu0 0
      %2562 = vmatprep.subr.bf16.mxu0 0
      %2563 = vmatpush1.bf16.msra.mxu0 %v2550
      %2564 = vmatprep.subr.bf16.mxu0 0
      %2565 = vmatpush1.bf16.msra.mxu0 %v2531
      %2566 = vmatprep.subr.bf16.mxu0 0
      %2567 = vmatpush1.bf16.msra.mxu0 %v2530
      %2568 = vmatprep.subr.bf16.mxu0 0
      %2569 = vmatpush2.bf16.msra.mxu0 0
      %2570 = vmatprep.subr.bf16.mxu0 0
      %2571 = vmatpush2.bf16.msra.mxu0 0
      %2572 = vmatprep.subr.bf16.mxu0 0
      %2573 = vmatpush2.bf16.msra.mxu0 0
      %2574 = vmatprep.subr.bf16.mxu0 0
      %2575 = vmatpush2.bf16.msra.mxu0 0
      %2576 = vmatprep.subr.bf16.mxu0 0
      %2577 = vmatpush2.bf16.msra.mxu0 0
      %2578 = vmatprep.subr.bf16.mxu0 0
      %2579 = vmatpush2.bf16.msra.mxu0 0
      %2580 = vmatprep.subr.bf16.mxu0 0
      %2581 = vmatpush2.bf16.msra.mxu0 0
      %2582 = vmatprep.subr.bf16.mxu0 0
      %2583 = vmatpush2.bf16.msra.mxu0 0
      %2584 = vmatprep.mubr.bf16.mxu0 0
      %2585 = vmatmul.mubr.bf16.gmra.mxu0 %v2537
      %v2586 = vpop.f32.mrf.mxu0
      %v2587 = vadd.f32 0.0, %v2586
      %v2588 = vpop.f32.mrf.mxu0
      %v2589 = vpop.f32.mrf.mxu0
      %v2590 = vadd.f32 0.0, %v2589
      %v2591 = vpop.f32.mrf.mxu0
      %2592 = vmatprep.mubr.bf16.mxu0 0
      %2593 = vmatmul.mubr.bf16.gmra.mxu0 %v2540
      %v2594 = vpop.f32.mrf.mxu0
      %v2595 = vadd.f32 0.0, %v2594
      %v2596 = vpop.f32.mrf.mxu0
      %v2597 = vpop.f32.mrf.mxu0
      %v2598 = vadd.f32 0.0, %v2597
      %v2599 = vpop.f32.mrf.mxu0
      %2600 = vmatprep.mubr.bf16.mxu0 0
      %2601 = vmatmul.mubr.bf16.gmra.mxu0 %v2543
      %v2602 = vpop.f32.mrf.mxu0
      %v2603 = vadd.f32 0.0, %v2602
      %v2604 = vpop.f32.mrf.mxu0
      %v2605 = vpop.f32.mrf.mxu0
      %v2606 = vadd.f32 0.0, %v2605
      %v2607 = vpop.f32.mrf.mxu0
      %2608 = vmatprep.mubr.bf16.mxu0 0
      %2609 = vmatmul.mubr.bf16.gmra.mxu0 %v2546
      %v2610 = vpop.f32.mrf.mxu0
      %v2611 = vadd.f32 0.0, %v2610
      %v2612 = vpop.f32.mrf.mxu0
      %v2613 = vpop.f32.mrf.mxu0
      %v2614 = vadd.f32 0.0, %v2613
      %v2615 = vpop.f32.mrf.mxu0
      %2616 = vdwg.mxu0
      %v2617 = vadd.f32 %v2587, %v2590
      %v2618 = vadd.f32 %v2617, %v2595
      %v2619 = vadd.f32 %v2618, %v2598
      %v2620 = vadd.f32 %v2619, %v2603
      %v2621 = vadd.f32 %v2620, %v2606
      %v2622 = vadd.f32 %v2621, %v2611
      %v2623 = vadd.f32 %v2622, %v2614
      %v2624 = vrot.slane %v2623, 4
      %v2625 = vadd.f32 %v2623, %v2624
      %v2626 = vrot.slane %v2625, 2
      %v2627 = vadd.f32 %v2625, %v2626
      %v2628 = vrot.slane %v2627, 1
      %v2629 = vadd.f32 %v2627, %v2628
      %v2630 = vmul.f32 %v2587, %v2587
      %v2631 = vmul.f32 %v2590, %v2590
      %v2632 = vmul.f32 %v2595, %v2595
      %v2633 = vmul.f32 %v2598, %v2598
      %v2634 = vmul.f32 %v2603, %v2603
      %v2635 = vmul.f32 %v2606, %v2606
      %v2636 = vmul.f32 %v2611, %v2611
      %v2637 = vmul.f32 %v2614, %v2614
      %v2638 = vadd.f32 %v2630, %v2631
      %v2639 = vadd.f32 %v2638, %v2632
      %v2640 = vadd.f32 %v2639, %v2633
      %v2641 = vadd.f32 %v2640, %v2634
      %v2642 = vadd.f32 %v2641, %v2635
      %v2643 = vadd.f32 %v2642, %v2636
      %v2644 = vadd.f32 %v2643, %v2637
      %v2645 = vrot.slane %v2644, 4
      %v2646 = vadd.f32 %v2644, %v2645
      %v2647 = vrot.slane %v2646, 2
      %v2648 = vadd.f32 %v2646, %v2647
      %v2649 = vrot.slane %v2648, 1
      %v2650 = vadd.f32 %v2648, %v2649
      %v2651 = vsel %vm2155, %v2629, %v2650
      %2652 = vst [vmem:[%s181] sm:$0x3] %v2651
      %v2653 = vpack.c.bf16 %v2587, %v2587
      %v2654 = vpack.c.bf16 %v2590, %v2590
      %v2655 = vpack.c.bf16 %v2595, %v2595
      %v2656 = vpack.c.bf16 %v2598, %v2598
      %v2657 = vpack.c.bf16 %v2603, %v2603
      %v2658 = vpack.c.bf16 %v2606, %v2606
      %v2659 = vpack.c.bf16 %v2611, %v2611
      %v2660 = vpack.c.bf16 %v2614, %v2614
      %vm2661 = vcmask 60416
      %2662 = vst.msk [vmem:[%s177] sm:$0xf] %vm2661, %v2653
      %2663 = vst.msk [vmem:[%s177 + $0x4] sm:$0xf] %vm2661, %v2654
      %2664 = vst.msk [vmem:[%s177 + $0x8] sm:$0xf] %vm2661, %v2655
      %2665 = vst.msk [vmem:[%s177 + $0xc] sm:$0xf] %vm2661, %v2656
      %2666 = vst.msk [vmem:[%s177 + $0x10] sm:$0xf] %vm2661, %v2657
      %2667 = vst.msk [vmem:[%s177 + $0x14] sm:$0xf] %vm2661, %v2658
      %2668 = vst.msk [vmem:[%s177 + $0x18] sm:$0xf] %vm2661, %v2659
      %2669 = vst.msk [vmem:[%s177 + $0x1c] sm:$0xf] %vm2661, %v2660
      %p2670 = scmp.lt.s32.totalorder %s15, 1
      %s2671 = scalar_select %p2670, %s15, 1
      %s2672 = smul.addr %s2671, 8
      %s2673 = smul.addr %s2672, 4
      %s2674 = scalar_lea.vmem %s2, %s2673
      %p2675 = scmp.lt.s32.totalorder %s15, 1
      %s2676 = scalar_select %p2675, %s15, 1
      %s2677 = smul.addr %s2676, 2
      %s2678 = scalar_lea.vmem %s3, %s2677
      // Predicated region
      $region29: #{down_pallas.2} parent=27 // pred_check
        %p2679 = pneg %p80
      $region30: #{down_pallas.2} parent=27 // pred_check_branch
        %2681 = sbr.rel (%p2679) target = $region32
      $region31: #{down_pallas.2} parent=27 // pred_region
        _
      $region32: #{down_pallas.2} parent=27 // pred_fallthru
        _
      // Predicated region
      $region33: #{down_pallas.2} parent=27 // pred_check
        %p2682 = pneg %p106
      $region34: #{down_pallas.2} parent=27 // pred_check_branch
        %2684 = sbr.rel (%p2682) target = $region36
      $region35: #{down_pallas.2} parent=27 // pred_region
        _
      $region36: #{down_pallas.2} parent=27 // pred_fallthru
        _
    $region28: #{down_pallas.2} parent=5 // pred_fallthru
      _
    %p2685 = scmp.le.s32.totalorder 2, %s10
    // Predicated region
    $region37: #{down_pallas.2} parent=5 // pred_check
      %p2686 = pneg %p2685
    $region38: #{down_pallas.2} parent=5 // pred_check_branch
      %2688 = sbr.rel (%p2686) target = $region40
    $region39: #{down_pallas.2} parent=5 // pred_region
      %s2689 = ssub.s32 %s10, 2
      // Predicated region
      $region41: #{down_pallas.2} parent=39 // pred_check
        %p2690 = pneg %p86
      $region42: #{down_pallas.2} parent=39 // pred_check_branch
        %2692 = sbr.rel (%p2690) target = $region44
      $region43: #{down_pallas.2} parent=39 // pred_region
        %p2693 = scmp.lt.s32.totalorder %s16, 1
        %s2694 = scalar_select %p2693, %s16, 1
        %s2695 = smul.addr %s2694, 8
        %s2696 = smul.addr %s2695, 4
        %s2697 = scalar_lea.vmem %s2, %s2696
      $region44: #{down_pallas.2} parent=39 // pred_fallthru
        _
      // Predicated region
      $region45: #{down_pallas.2} parent=39 // pred_check
        %p2698 = pneg %p112
      $region46: #{down_pallas.2} parent=39 // pred_check_branch
        %2700 = sbr.rel (%p2698) target = $region48
      $region47: #{down_pallas.2} parent=39 // pred_region
        %p2701 = scmp.lt.s32.totalorder %s16, 1
        %s2702 = scalar_select %p2701, %s16, 1
        %s2703 = smul.addr %s2702, 2
        %s2704 = scalar_lea.vmem %s3, %s2703
      $region48: #{down_pallas.2} parent=39 // pred_fallthru
        _
    $region40: #{down_pallas.2} parent=5 // pred_fallthru
      _
  $region6: #{down_pallas.2} parent=0 // loop_footer
    %s14 = sadd.s32 1, %s10
  $region7: #{down_pallas.2} parent=0 // loop_footer_branch
    %9 = sbr.rel target = $region3
  $region8: #{down_pallas.2} parent=0 // loop_exit
    _

</llo_original>
